<compile_context>
chip_gen: v6e
topology: v6e:2x2x1
jax: 0.10.0
libtpu: 0.0.40
codegen_flags: <defaults>
</compile_context>

<pallas_src>
import jax
import jax.numpy as jnp
import numpy as np
from jax import lax
from jax.experimental import pallas as pl
from jax.experimental.pallas import tpu as pltpu

EPS = 1e-5


def rcu_kernel(x_ref, w1_ref, b1_ref, w2_ref, b2_ref, o_ref):
    # x_ref : (1, H, W, C)   one batch element, NHWC
    # w*_ref: (9*C, C)       conv weights, rows ordered (ky, kx, cin)
    # b*_ref: (1, C)         conv bias
    # o_ref : (1, H, W, C)   output block
    _, H, W, C = x_ref.shape
    x = x_ref[0].astype(jnp.float32)                      # (H, W, C)

    def inorm_relu(y):
        # InstanceNorm2d (no affine, biased variance, eps=1e-5) followed by ReLU.
        mean = jnp.mean(y, axis=(0, 1), keepdims=True)
        var = jnp.mean((y - mean) ** 2, axis=(0, 1), keepdims=True)
        yn = (y - mean) * lax.rsqrt(var + EPS)
        return jnp.maximum(yn, 0.0)

    def conv3x3(h, w_ref, b_ref):
        # zero-pad to (H+2, W+2, C)
        zrow = jnp.zeros((1, W, C), jnp.float32)
        xp = jnp.concatenate([zrow, h, zrow], axis=0)
        zcol = jnp.zeros((H + 2, 1, C), jnp.float32)
        xp = jnp.concatenate([zcol, xp, zcol], axis=1)
        # im2col: one (H*W, 9C) x (9C, C) MXU matmul instead of 9 K=C dots.
        cols = [xp[dy:dy + H, dx:dx + W, :]
                for dy in range(3) for dx in range(3)]
        patches = jnp.concatenate(cols, axis=-1).reshape(H * W, 9 * C)
        y = jnp.dot(patches, w_ref[...], preferred_element_type=jnp.float32)
        y = y + b_ref[...]
        return y.reshape(H, W, C)

    y = conv3x3(inorm_relu(x), w1_ref, b1_ref)
    y = conv3x3(inorm_relu(y), w2_ref, b2_ref)
    o_ref[0] = (y + x).astype(o_ref.dtype)                # residual add


def rcu_block(x_nchw, w1, b1, w2, b2):
    """Pallas RCUBlock forward.

    x_nchw: (N, C, H, W); w1, w2: (3, 3, C, C) in HWIO layout; b1, b2: (C,).
    Returns (N, C, H, W) float32.
    """
    N, C, H, W = x_nchw.shape
    x_nhwc = jnp.transpose(x_nchw, (0, 2, 3, 1)).astype(jnp.float32)
    w1m = w1.reshape(9 * C, C).astype(jnp.float32)   # rows ordered (ky, kx, cin)
    w2m = w2.reshape(9 * C, C).astype(jnp.float32)
    out = pl.pallas_call(
        rcu_kernel,
        out_shape=jax.ShapeDtypeStruct((N, H, W, C), jnp.float32),
        grid_spec=pltpu.PrefetchScalarGridSpec(
            num_scalar_prefetch=0,
            grid=(N,),
            in_specs=[
                pl.BlockSpec((1, H, W, C), lambda n: (n, 0, 0, 0)),
                pl.BlockSpec((9 * C, C), lambda n: (0, 0)),
                pl.BlockSpec((1, C), lambda n: (0, 0)),
                pl.BlockSpec((9 * C, C), lambda n: (0, 0)),
                pl.BlockSpec((1, C), lambda n: (0, 0)),
            ],
            out_specs=pl.BlockSpec((1, H, W, C), lambda n: (n, 0, 0, 0)),
        ),
        compiler_params=pltpu.CompilerParams(
            dimension_semantics=("parallel",)),
    )(x_nhwc, w1m, b1.reshape(1, -1).astype(jnp.float32),
      w2m, b2.reshape(1, -1).astype(jnp.float32))
    return jnp.transpose(out, (0, 3, 1, 2))  # back to NCHW


# ---------------- pure-JAX reference (validation only) ----------------
def ref_forward(x, w1, b1, w2, b2):
    def inorm(a):  # NCHW, biased variance, eps=1e-5, no affine
        m = a.mean(axis=(2, 3), keepdims=True)
        v = ((a - m) ** 2).mean(axis=(2, 3), keepdims=True)
        return (a - m) / jnp.sqrt(v + EPS)

    def conv(a, w, b):  # w: (3,3,Cin,Cout) HWIO
        w_oihw = jnp.transpose(w, (3, 2, 0, 1))
        y = lax.conv_general_dilated(
            a, w_oihw, window_strides=(1, 1), padding=((1, 1), (1, 1)),
            dimension_numbers=("NCHW", "OIHW", "NCHW"),
            precision=lax.Precision.HIGHEST)
        return y + b[None, :, None, None]

    h = conv(jnp.maximum(inorm(x), 0.0), w1, b1)
    h = conv(jnp.maximum(inorm(h), 0.0), w2, b2)
    return h + x


if __name__ == "__main__":
    N, C, H, W = 2, 32, 16, 16   # features = 32

    key = jax.random.PRNGKey(0)
    k0, k1, k2, k3, k4 = jax.random.split(key, 5)
    fan_in = C * 9
    x = jax.random.normal(k0, (N, C, H, W), jnp.float32)
    w1 = jax.random.normal(k1, (3, 3, C, C), jnp.float32) / np.sqrt(fan_in)
    b1 = jax.random.normal(k2, (C,), jnp.float32) * 0.01
    w2 = jax.random.normal(k3, (3, 3, C, C), jnp.float32) / np.sqrt(fan_in)
    b2 = jax.random.normal(k4, (C,), jnp.float32) * 0.01

    out = jax.block_until_ready(rcu_block(x, w1, b1, w2, b2))
    assert out.shape == (N, C, H, W)

    ref = jax.block_until_ready(ref_forward(x, w1, b1, w2, b2))
    np.testing.assert_allclose(np.asarray(out), np.asarray(ref),
                               rtol=2e-3, atol=2e-3)

    print("KERNEL_OK")
</pallas_src>

<mosaic_0001>
module attributes {stable_mosaic.version = 11 : i64} {
  func.func @rcu_kernel(%arg0: i32, %arg1: memref<1x16x16x32xf32, #tpu.memory_space<vmem>>, %arg2: memref<288x32xf32, #tpu.memory_space<vmem>>, %arg3: memref<1x32xf32, #tpu.memory_space<vmem>>, %arg4: memref<288x32xf32, #tpu.memory_space<vmem>>, %arg5: memref<1x32xf32, #tpu.memory_space<vmem>>, %arg6: memref<1x16x16x32xf32, #tpu.memory_space<vmem>>) attributes {dimension_semantics = [#tpu.dimension_semantics<parallel>], iteration_bounds = array<i64: 2>, scalar_prefetch = 0 : i64, scratch_operands = 0 : i64, tpu.core_type = #tpu.core_type<tc>, window_params = [{transform_indices = @transform_0, window_bounds = array<i64: 1, 16, 16, 32>}, {pipeline_mode = #tpu.pipeline_mode<synchronous>, transform_indices = @transform_1, window_bounds = array<i64: 288, 32>}, {pipeline_mode = #tpu.pipeline_mode<synchronous>, transform_indices = @transform_2, window_bounds = array<i64: 1, 32>}, {pipeline_mode = #tpu.pipeline_mode<synchronous>, transform_indices = @transform_3, window_bounds = array<i64: 288, 32>}, {pipeline_mode = #tpu.pipeline_mode<synchronous>, transform_indices = @transform_4, window_bounds = array<i64: 1, 32>}, {transform_indices = @transform_5, window_bounds = array<i64: 1, 16, 16, 32>}]} {
    %c0 = arith.constant 0 : index
    %c0_0 = arith.constant 0 : index
    %c0_1 = arith.constant 0 : index
    %c0_2 = arith.constant 0 : index
    %0 = vector.load %arg1[%c0, %c0_0, %c0_1, %c0_2] : memref<1x16x16x32xf32, #tpu.memory_space<vmem>>, vector<1x16x16x32xf32>
    %1 = vector.shape_cast %0 : vector<1x16x16x32xf32> to vector<16x16x32xf32>
    %cst = arith.constant dense<0.000000e+00> : vector<32xf32>
    %2 = vector.multi_reduction <add>, %1, %cst [0, 1] : vector<16x16x32xf32> to vector<32xf32>
    %3 = vector.shape_cast %2 : vector<32xf32> to vector<1x1x32xf32>
    %cst_3 = arith.constant 2.560000e+02 : f32
    %4 = vector.broadcast %cst_3 : f32 to vector<1x1x32xf32>
    %5 = arith.divf %3, %4 : vector<1x1x32xf32>
    %6 = vector.broadcast %5 : vector<1x1x32xf32> to vector<16x16x32xf32>
    %7 = arith.subf %1, %6 : vector<16x16x32xf32>
    %8 = arith.mulf %7, %7 : vector<16x16x32xf32>
    %cst_4 = arith.constant dense<0.000000e+00> : vector<32xf32>
    %9 = vector.multi_reduction <add>, %8, %cst_4 [0, 1] : vector<16x16x32xf32> to vector<32xf32>
    %10 = vector.shape_cast %9 : vector<32xf32> to vector<1x1x32xf32>
    %cst_5 = arith.constant 2.560000e+02 : f32
    %11 = vector.broadcast %cst_5 : f32 to vector<1x1x32xf32>
    %12 = arith.divf %10, %11 : vector<1x1x32xf32>
    %13 = vector.broadcast %5 : vector<1x1x32xf32> to vector<16x16x32xf32>
    %14 = arith.subf %1, %13 : vector<16x16x32xf32>
    %cst_6 = arith.constant 9.99999974E-6 : f32
    %15 = vector.broadcast %cst_6 : f32 to vector<1x1x32xf32>
    %16 = arith.addf %12, %15 : vector<1x1x32xf32>
    %17 = math.rsqrt %16 : vector<1x1x32xf32>
    %18 = vector.broadcast %17 : vector<1x1x32xf32> to vector<16x16x32xf32>
    %19 = arith.mulf %14, %18 : vector<16x16x32xf32>
    %cst_7 = arith.constant 0.000000e+00 : f32
    %20 = vector.broadcast %cst_7 : f32 to vector<16x16x32xf32>
    %21 = arith.maximumf %19, %20 : vector<16x16x32xf32>
    %cst_8 = arith.constant 0.000000e+00 : f32
    %22 = vector.broadcast %cst_8 : f32 to vector<1x16x32xf32>
    %23 = tpu.concatenate %22, %21, %22 in 0 : vector<1x16x32xf32>, vector<16x16x32xf32>, vector<1x16x32xf32> -> vector<18x16x32xf32>
    %cst_9 = arith.constant 0.000000e+00 : f32
    %24 = vector.broadcast %cst_9 : f32 to vector<18x1x32xf32>
    %25 = tpu.concatenate %24, %23, %24 in 1 : vector<18x1x32xf32>, vector<18x16x32xf32>, vector<18x1x32xf32> -> vector<18x18x32xf32>
    %26 = vector.extract_strided_slice %25 {offsets = [0, 0, 0], sizes = [16, 16, 32], strides = [1, 1, 1]} : vector<18x18x32xf32> to vector<16x16x32xf32>
    %27 = vector.extract_strided_slice %25 {offsets = [0, 1, 0], sizes = [16, 16, 32], strides = [1, 1, 1]} : vector<18x18x32xf32> to vector<16x16x32xf32>
    %28 = vector.extract_strided_slice %25 {offsets = [0, 2, 0], sizes = [16, 16, 32], strides = [1, 1, 1]} : vector<18x18x32xf32> to vector<16x16x32xf32>
    %29 = vector.extract_strided_slice %25 {offsets = [1, 0, 0], sizes = [16, 16, 32], strides = [1, 1, 1]} : vector<18x18x32xf32> to vector<16x16x32xf32>
    %30 = vector.extract_strided_slice %25 {offsets = [1, 1, 0], sizes = [16, 16, 32], strides = [1, 1, 1]} : vector<18x18x32xf32> to vector<16x16x32xf32>
    %31 = vector.extract_strided_slice %25 {offsets = [1, 2, 0], sizes = [16, 16, 32], strides = [1, 1, 1]} : vector<18x18x32xf32> to vector<16x16x32xf32>
    %32 = vector.extract_strided_slice %25 {offsets = [2, 0, 0], sizes = [16, 16, 32], strides = [1, 1, 1]} : vector<18x18x32xf32> to vector<16x16x32xf32>
    %33 = vector.extract_strided_slice %25 {offsets = [2, 1, 0], sizes = [16, 16, 32], strides = [1, 1, 1]} : vector<18x18x32xf32> to vector<16x16x32xf32>
    %34 = vector.extract_strided_slice %25 {offsets = [2, 2, 0], sizes = [16, 16, 32], strides = [1, 1, 1]} : vector<18x18x32xf32> to vector<16x16x32xf32>
    %35 = tpu.concatenate %26, %27, %28, %29, %30, %31, %32, %33, %34 in 2 : vector<16x16x32xf32>, vector<16x16x32xf32>, vector<16x16x32xf32>, vector<16x16x32xf32>, vector<16x16x32xf32>, vector<16x16x32xf32>, vector<16x16x32xf32>, vector<16x16x32xf32>, vector<16x16x32xf32> -> vector<16x16x288xf32>
    %36 = vector.shape_cast %35 : vector<16x16x288xf32> to vector<256x288xf32>
    %c0_10 = arith.constant 0 : index
    %c0_11 = arith.constant 0 : index
    %37 = vector.load %arg2[%c0_10, %c0_11] : memref<288x32xf32, #tpu.memory_space<vmem>>, vector<288x32xf32>
    %cst_12 = arith.constant dense<0.000000e+00> : vector<256x32xf32>
    %38 = tpu.matmul %36, %37, %cst_12 {dimension_numbers = #tpu.dot_dimension_numbers<[1], [0], [0], [1], [0, 0, 1, 1], [], []>} : vector<256x288xf32>, vector<288x32xf32>, vector<256x32xf32> -> vector<256x32xf32>
    %c0_13 = arith.constant 0 : index
    %c0_14 = arith.constant 0 : index
    %39 = vector.load %arg3[%c0_13, %c0_14] : memref<1x32xf32, #tpu.memory_space<vmem>>, vector<1x32xf32>
    %40 = vector.broadcast %39 : vector<1x32xf32> to vector<256x32xf32>
    %41 = arith.addf %38, %40 : vector<256x32xf32>
    %42 = vector.shape_cast %41 : vector<256x32xf32> to vector<16x16x32xf32>
    %cst_15 = arith.constant dense<0.000000e+00> : vector<32xf32>
    %43 = vector.multi_reduction <add>, %42, %cst_15 [0, 1] : vector<16x16x32xf32> to vector<32xf32>
    %44 = vector.shape_cast %43 : vector<32xf32> to vector<1x1x32xf32>
    %cst_16 = arith.constant 2.560000e+02 : f32
    %45 = vector.broadcast %cst_16 : f32 to vector<1x1x32xf32>
    %46 = arith.divf %44, %45 : vector<1x1x32xf32>
    %47 = vector.broadcast %46 : vector<1x1x32xf32> to vector<16x16x32xf32>
    %48 = arith.subf %42, %47 : vector<16x16x32xf32>
    %49 = arith.mulf %48, %48 : vector<16x16x32xf32>
    %cst_17 = arith.constant dense<0.000000e+00> : vector<32xf32>
    %50 = vector.multi_reduction <add>, %49, %cst_17 [0, 1] : vector<16x16x32xf32> to vector<32xf32>
    %51 = vector.shape_cast %50 : vector<32xf32> to vector<1x1x32xf32>
    %cst_18 = arith.constant 2.560000e+02 : f32
    %52 = vector.broadcast %cst_18 : f32 to vector<1x1x32xf32>
    %53 = arith.divf %51, %52 : vector<1x1x32xf32>
    %54 = vector.broadcast %46 : vector<1x1x32xf32> to vector<16x16x32xf32>
    %55 = arith.subf %42, %54 : vector<16x16x32xf32>
    %cst_19 = arith.constant 9.99999974E-6 : f32
    %56 = vector.broadcast %cst_19 : f32 to vector<1x1x32xf32>
    %57 = arith.addf %53, %56 : vector<1x1x32xf32>
    %58 = math.rsqrt %57 : vector<1x1x32xf32>
    %59 = vector.broadcast %58 : vector<1x1x32xf32> to vector<16x16x32xf32>
    %60 = arith.mulf %55, %59 : vector<16x16x32xf32>
    %cst_20 = arith.constant 0.000000e+00 : f32
    %61 = vector.broadcast %cst_20 : f32 to vector<16x16x32xf32>
    %62 = arith.maximumf %60, %61 : vector<16x16x32xf32>
    %cst_21 = arith.constant 0.000000e+00 : f32
    %63 = vector.broadcast %cst_21 : f32 to vector<1x16x32xf32>
    %64 = tpu.concatenate %63, %62, %63 in 0 : vector<1x16x32xf32>, vector<16x16x32xf32>, vector<1x16x32xf32> -> vector<18x16x32xf32>
    %cst_22 = arith.constant 0.000000e+00 : f32
    %65 = vector.broadcast %cst_22 : f32 to vector<18x1x32xf32>
    %66 = tpu.concatenate %65, %64, %65 in 1 : vector<18x1x32xf32>, vector<18x16x32xf32>, vector<18x1x32xf32> -> vector<18x18x32xf32>
    %67 = vector.extract_strided_slice %66 {offsets = [0, 0, 0], sizes = [16, 16, 32], strides = [1, 1, 1]} : vector<18x18x32xf32> to vector<16x16x32xf32>
    %68 = vector.extract_strided_slice %66 {offsets = [0, 1, 0], sizes = [16, 16, 32], strides = [1, 1, 1]} : vector<18x18x32xf32> to vector<16x16x32xf32>
    %69 = vector.extract_strided_slice %66 {offsets = [0, 2, 0], sizes = [16, 16, 32], strides = [1, 1, 1]} : vector<18x18x32xf32> to vector<16x16x32xf32>
    %70 = vector.extract_strided_slice %66 {offsets = [1, 0, 0], sizes = [16, 16, 32], strides = [1, 1, 1]} : vector<18x18x32xf32> to vector<16x16x32xf32>
    %71 = vector.extract_strided_slice %66 {offsets = [1, 1, 0], sizes = [16, 16, 32], strides = [1, 1, 1]} : vector<18x18x32xf32> to vector<16x16x32xf32>
    %72 = vector.extract_strided_slice %66 {offsets = [1, 2, 0], sizes = [16, 16, 32], strides = [1, 1, 1]} : vector<18x18x32xf32> to vector<16x16x32xf32>
    %73 = vector.extract_strided_slice %66 {offsets = [2, 0, 0], sizes = [16, 16, 32], strides = [1, 1, 1]} : vector<18x18x32xf32> to vector<16x16x32xf32>
    %74 = vector.extract_strided_slice %66 {offsets = [2, 1, 0], sizes = [16, 16, 32], strides = [1, 1, 1]} : vector<18x18x32xf32> to vector<16x16x32xf32>
    %75 = vector.extract_strided_slice %66 {offsets = [2, 2, 0], sizes = [16, 16, 32], strides = [1, 1, 1]} : vector<18x18x32xf32> to vector<16x16x32xf32>
    %76 = tpu.concatenate %67, %68, %69, %70, %71, %72, %73, %74, %75 in 2 : vector<16x16x32xf32>, vector<16x16x32xf32>, vector<16x16x32xf32>, vector<16x16x32xf32>, vector<16x16x32xf32>, vector<16x16x32xf32>, vector<16x16x32xf32>, vector<16x16x32xf32>, vector<16x16x32xf32> -> vector<16x16x288xf32>
    %77 = vector.shape_cast %76 : vector<16x16x288xf32> to vector<256x288xf32>
    %c0_23 = arith.constant 0 : index
    %c0_24 = arith.constant 0 : index
    %78 = vector.load %arg4[%c0_23, %c0_24] : memref<288x32xf32, #tpu.memory_space<vmem>>, vector<288x32xf32>
    %cst_25 = arith.constant dense<0.000000e+00> : vector<256x32xf32>
    %79 = tpu.matmul %77, %78, %cst_25 {dimension_numbers = #tpu.dot_dimension_numbers<[1], [0], [0], [1], [0, 0, 1, 1], [], []>} : vector<256x288xf32>, vector<288x32xf32>, vector<256x32xf32> -> vector<256x32xf32>
    %c0_26 = arith.constant 0 : index
    %c0_27 = arith.constant 0 : index
    %80 = vector.load %arg5[%c0_26, %c0_27] : memref<1x32xf32, #tpu.memory_space<vmem>>, vector<1x32xf32>
    %81 = vector.broadcast %80 : vector<1x32xf32> to vector<256x32xf32>
    %82 = arith.addf %79, %81 : vector<256x32xf32>
    %83 = vector.shape_cast %82 : vector<256x32xf32> to vector<16x16x32xf32>
    %84 = arith.addf %83, %1 : vector<16x16x32xf32>
    %c0_28 = arith.constant 0 : index
    %c0_29 = arith.constant 0 : index
    %c0_30 = arith.constant 0 : index
    %c0_31 = arith.constant 0 : index
    %85 = vector.load %arg6[%c0_28, %c0_29, %c0_30, %c0_31] : memref<1x16x16x32xf32, #tpu.memory_space<vmem>>, vector<1x16x16x32xf32>
    %86 = vector.shape_cast %85 : vector<1x16x16x32xf32> to vector<16x16x32xf32>
    %87 = vector.shape_cast %84 : vector<16x16x32xf32> to vector<1x16x16x32xf32>
    tpu.vector_store %arg6[%c0_28, %c0_29, %c0_30, %c0_31], %87 {strides = array<i32>} : memref<1x16x16x32xf32, #tpu.memory_space<vmem>>, vector<1x16x16x32xf32>,
    return
  }
  func.func @transform_0(%arg0: i32) -> (i32, i32, i32, i32) {
    %c0_i32 = arith.constant 0 : i32
    %c0_i32_0 = arith.constant 0 : i32
    %c0_i32_1 = arith.constant 0 : i32
    %c0_i32_2 = arith.constant 0 : i32
    return %arg0, %c0_i32, %c0_i32_0, %c0_i32_1 : i32, i32, i32, i32
  }
  func.func @transform_1(%arg0: i32) -> (i32, i32) {
    %c0_i32 = arith.constant 0 : i32
    %c0_i32_0 = arith.constant 0 : i32
    %c0_i32_1 = arith.constant 0 : i32
    return %c0_i32, %c0_i32_0 : i32, i32
  }
  func.func @transform_2(%arg0: i32) -> (i32, i32) {
    %c0_i32 = arith.constant 0 : i32
    %c0_i32_0 = arith.constant 0 : i32
    %c0_i32_1 = arith.constant 0 : i32
    return %c0_i32, %c0_i32_0 : i32, i32
  }
  func.func @transform_3(%arg0: i32) -> (i32, i32) {
    %c0_i32 = arith.constant 0 : i32
    %c0_i32_0 = arith.constant 0 : i32
    %c0_i32_1 = arith.constant 0 : i32
    return %c0_i32, %c0_i32_0 : i32, i32
  }
  func.func @transform_4(%arg0: i32) -> (i32, i32) {
    %c0_i32 = arith.constant 0 : i32
    %c0_i32_0 = arith.constant 0 : i32
    %c0_i32_1 = arith.constant 0 : i32
    return %c0_i32, %c0_i32_0 : i32, i32
  }
  func.func @transform_5(%arg0: i32) -> (i32, i32, i32, i32) {
    %c0_i32 = arith.constant 0 : i32
    %c0_i32_0 = arith.constant 0 : i32
    %c0_i32_1 = arith.constant 0 : i32
    %c0_i32_2 = arith.constant 0 : i32
    return %arg0, %c0_i32, %c0_i32_0, %c0_i32_1 : i32, i32, i32, i32
  }
}

</mosaic_0001>

<llo_original>
// kernel: tpu_custom_call.1
$region0: #{tpu_custom_call.1}
  #allocation0 [shape = 'u32[]', space=smem, size = 0x4, offset = 0x4, fixed_abs, tag = 'smem constant byte address 0x4 - core index']
  #allocation1 [shape = 'u32[144,128]{1,0:T(1,128)}', space=vmem, size = 0x12000, scoped, tag = 'internal scratch']
  %s0 = inlined_call_operand.vmem [shape: f32[2,16,16,32], index: 0, kind: input, shape index: {}]
  %s1 = inlined_call_operand.vmem [shape: f32[288,32], index: 1, kind: input, shape index: {}]
  %s2 = inlined_call_operand.vmem [shape: f32[1,32], index: 2, kind: input, shape index: {}]
  %s3 = inlined_call_operand.vmem [shape: f32[288,32], index: 3, kind: input, shape index: {}]
  %s4 = inlined_call_operand.vmem [shape: f32[1,32], index: 4, kind: input, shape index: {}]
  %s5 = inlined_call_operand.hbm [shape: f32[2,16,16,32], index: 5, kind: output, shape index: {}]
  %s6 = sld [smem:[#allocation0]]
  $region53: #{tpu_custom_call.1} parent=0
    _
  %s8 = ssub.s32 1, %s6
  %s9 = scalar_select 0, %s8, %s6
  $region1: #{tpu_custom_call.1} parent=0
    #allocation2 [shape = 'u8[262144]{0}', space=vmem, size = 0x40000, scoped, tag = 'output window, operand 0']
    #allocation3 [shape = 's32[2]{0}', space=sflag, size = 0x8, scoped, tag = 'scoped memory for tpu_custom_call.1']
    %10 = vsyncpa [#allocation3], 0
    %s11 = scalar_lea.sflag [#allocation3], 1
    %12 = vsyncpa %s11, 0
    loop: start=0, step=1, limit=4
    $region2: #{tpu_custom_call.1} parent=1 // loop_pre_header
      _
    $region3: #{tpu_custom_call.1} parent=1 // loop_header
      %s14 = sphi 0, %s18
      %p15 = scmp.ge.s32.totalorder %s14, 4
      %s24 = sphi 0, %s26
      %s27 = sphi 0, %s24
      %s28 = sphi 0, %s27
      %s44 = sphi 0, %s28
      %s48 = sphi 0, %s48
      %s50 = sphi 0, %s48
      %s51 = sphi 0, %s50
      %s65 = sphi 0, %s51
      %s69 = sphi 0, %s69
      %s71 = sphi 0, %s69
      %s72 = sphi 0, %s71
      %s86 = sphi 0, %s72
      %s90 = sphi 0, %s90
      %s92 = sphi 0, %s90
      %s93 = sphi 0, %s92
      %s107 = sphi 0, %s93
      %s111 = sphi 0, %s111
      %s113 = sphi 0, %s111
      %s114 = sphi 0, %s113
      %s128 = sphi 0, %s114
      %s134 = sphi 0, %s136
      %s137 = sphi 0, %s134
      %s138 = sphi 0, %s137
      %s154 = sphi 0, %s138
    $region4: #{tpu_custom_call.1} parent=1 // loop_header_branch
      %17 = sbr.rel (%p15) target = $region8
    $region5: #{tpu_custom_call.1} parent=1 // loop_body
      %s19 = ssub.s32 %s14, 1
      %s20 = ssub.s32 %s14, 2
      %s21 = sadd.s32 %s14, 1
      %s22 = ssub.s32 %s14, %s21
      %p23 = scmp.eq.s32.totalorder %s22, 0
      %s25 = sadd.s32 %s24, 1
      %s26 = scalar_select %p23, %s24, %s25
      %p29 = pneg %p23
      %p30 = scmp.eq.s32.totalorder %s14, 1
      %p31 = por %p29, %p30
      %p32 = scmp.ne.s32.totalorder %s24, %s27
      %p33 = scmp.eq.s32.totalorder %s14, 0
      %p34 = por %p32, %p33
      %p35 = scmp.ne.s32.totalorder %s24, %s27
      %p36 = scmp.eq.s32.totalorder %s19, 1
      %p37 = por %p35, %p36
      %p38 = scmp.ne.s32.totalorder %s27, %s28
      %p39 = scmp.eq.s32.totalorder %s19, 0
      %p40 = por %p38, %p39
      %p41 = scmp.ne.s32.totalorder %s27, %s28
      %p42 = scmp.eq.s32.totalorder %s20, 1
      %p43 = por %p41, %p42
      %p45 = scmp.ne.s32.totalorder %s28, %s44
      %p46 = scmp.eq.s32.totalorder %s20, 0
      %p47 = por %p45, %p46
      %s49 = sadd.s32 %s48, 1
      %p52 = scmp.eq.s32.totalorder %s14, 1
      %p53 = scmp.ne.s32.totalorder %s48, %s50
      %p54 = scmp.eq.s32.totalorder %s14, 0
      %p55 = por %p53, %p54
      %p56 = scmp.ne.s32.totalorder %s48, %s50
      %p57 = scmp.eq.s32.totalorder %s19, 1
      %p58 = por %p56, %p57
      %p59 = scmp.ne.s32.totalorder %s50, %s51
      %p60 = scmp.eq.s32.totalorder %s19, 0
      %p61 = por %p59, %p60
      %p62 = scmp.ne.s32.totalorder %s50, %s51
      %p63 = scmp.eq.s32.totalorder %s20, 1
      %p64 = por %p62, %p63
      %p66 = scmp.ne.s32.totalorder %s51, %s65
      %p67 = scmp.eq.s32.totalorder %s20, 0
      %p68 = por %p66, %p67
      %s70 = sadd.s32 %s69, 1
      %p73 = scmp.eq.s32.totalorder %s14, 1
      %p74 = scmp.ne.s32.totalorder %s69, %s71
      %p75 = scmp.eq.s32.totalorder %s14, 0
      %p76 = por %p74, %p75
      %p77 = scmp.ne.s32.totalorder %s69, %s71
      %p78 = scmp.eq.s32.totalorder %s19, 1
      %p79 = por %p77, %p78
      %p80 = scmp.ne.s32.totalorder %s71, %s72
      %p81 = scmp.eq.s32.totalorder %s19, 0
      %p82 = por %p80, %p81
      %p83 = scmp.ne.s32.totalorder %s71, %s72
      %p84 = scmp.eq.s32.totalorder %s20, 1
      %p85 = por %p83, %p84
      %p87 = scmp.ne.s32.totalorder %s72, %s86
      %p88 = scmp.eq.s32.totalorder %s20, 0
      %p89 = por %p87, %p88
      %s91 = sadd.s32 %s90, 1
      %p94 = scmp.eq.s32.totalorder %s14, 1
      %p95 = scmp.ne.s32.totalorder %s90, %s92
      %p96 = scmp.eq.s32.totalorder %s14, 0
      %p97 = por %p95, %p96
      %p98 = scmp.ne.s32.totalorder %s90, %s92
      %p99 = scmp.eq.s32.totalorder %s19, 1
      %p100 = por %p98, %p99
      %p101 = scmp.ne.s32.totalorder %s92, %s93
      %p102 = scmp.eq.s32.totalorder %s19, 0
      %p103 = por %p101, %p102
      %p104 = scmp.ne.s32.totalorder %s92, %s93
      %p105 = scmp.eq.s32.totalorder %s20, 1
      %p106 = por %p104, %p105
      %p108 = scmp.ne.s32.totalorder %s93, %s107
      %p109 = scmp.eq.s32.totalorder %s20, 0
      %p110 = por %p108, %p109
      %s112 = sadd.s32 %s111, 1
      %p115 = scmp.eq.s32.totalorder %s14, 1
      %p116 = scmp.ne.s32.totalorder %s111, %s113
      %p117 = scmp.eq.s32.totalorder %s14, 0
      %p118 = por %p116, %p117
      %p119 = scmp.ne.s32.totalorder %s111, %s113
      %p120 = scmp.eq.s32.totalorder %s19, 1
      %p121 = por %p119, %p120
      %p122 = scmp.ne.s32.totalorder %s113, %s114
      %p123 = scmp.eq.s32.totalorder %s19, 0
      %p124 = por %p122, %p123
      %p125 = scmp.ne.s32.totalorder %s113, %s114
      %p126 = scmp.eq.s32.totalorder %s20, 1
      %p127 = por %p125, %p126
      %p129 = scmp.ne.s32.totalorder %s114, %s128
      %p130 = scmp.eq.s32.totalorder %s20, 0
      %p131 = por %p129, %p130
      %s132 = ssub.s32 %s14, %s21
      %p133 = scmp.eq.s32.totalorder %s132, 0
      %s135 = sadd.s32 %s134, 1
      %s136 = scalar_select %p133, %s134, %s135
      %p139 = pneg %p133
      %p140 = scmp.eq.s32.totalorder %s14, 1
      %p141 = por %p139, %p140
      %p142 = scmp.ne.s32.totalorder %s134, %s137
      %p143 = scmp.eq.s32.totalorder %s14, 0
      %p144 = por %p142, %p143
      %p145 = scmp.ne.s32.totalorder %s134, %s137
      %p146 = scmp.eq.s32.totalorder %s19, 1
      %p147 = por %p145, %p146
      %p148 = scmp.ne.s32.totalorder %s137, %s138
      %p149 = scmp.eq.s32.totalorder %s19, 0
      %p150 = por %p148, %p149
      %p151 = scmp.ne.s32.totalorder %s137, %s138
      %p152 = scmp.eq.s32.totalorder %s20, 1
      %p153 = por %p151, %p152
      %p155 = scmp.ne.s32.totalorder %s138, %s154
      %p156 = scmp.eq.s32.totalorder %s20, 0
      %p157 = por %p155, %p156
      %p158 = scmp.le.s32.totalorder 1, %s14
      %p159 = scmp.lt.s32.totalorder %s14, 3
      %p160 = pnand %p158, %p159
      %p161 = pneg %p160
      // Predicated region
      $region9: #{tpu_custom_call.1} parent=5 // pred_check
        _
      $region10: #{tpu_custom_call.1} parent=5 // pred_check_branch
        %163 = sbr.rel (%p160) target = $region12
      $region11: #{tpu_custom_call.1} parent=5 // pred_region
        %s164 = ssub.s32 %s14, 1
        // Predicated region
        $region13: #{tpu_custom_call.1} parent=11 // pred_check
          %p165 = pneg %p61
        $region14: #{tpu_custom_call.1} parent=11 // pred_check_branch
          %167 = sbr.rel (%p165) target = $region16
        $region15: #{tpu_custom_call.1} parent=11 // pred_region
          _
        $region16: #{tpu_custom_call.1} parent=11 // pred_fallthru
          _
        // Predicated region
        $region17: #{tpu_custom_call.1} parent=11 // pred_check
          %p168 = pneg %p82
        $region18: #{tpu_custom_call.1} parent=11 // pred_check_branch
          %170 = sbr.rel (%p168) target = $region20
        $region19: #{tpu_custom_call.1} parent=11 // pred_region
          _
        $region20: #{tpu_custom_call.1} parent=11 // pred_fallthru
          _
        // Predicated region
        $region21: #{tpu_custom_call.1} parent=11 // pred_check
          %p171 = pneg %p103
        $region22: #{tpu_custom_call.1} parent=11 // pred_check_branch
          %173 = sbr.rel (%p171) target = $region24
        $region23: #{tpu_custom_call.1} parent=11 // pred_region
          _
        $region24: #{tpu_custom_call.1} parent=11 // pred_fallthru
          _
        // Predicated region
        $region25: #{tpu_custom_call.1} parent=11 // pred_check
          %p174 = pneg %p124
        $region26: #{tpu_custom_call.1} parent=11 // pred_check_branch
          %176 = sbr.rel (%p174) target = $region28
        $region27: #{tpu_custom_call.1} parent=11 // pred_region
          _
        $region28: #{tpu_custom_call.1} parent=11 // pred_fallthru
          _
      $region12: #{tpu_custom_call.1} parent=5 // pred_fallthru
        _
      %p177 = scmp.lt.s32.totalorder %s14, 2
      // Predicated region
      $region29: #{tpu_custom_call.1} parent=5 // pred_check
        %p178 = pneg %p177
      $region30: #{tpu_custom_call.1} parent=5 // pred_check_branch
        %180 = sbr.rel (%p178) target = $region32
      $region31: #{tpu_custom_call.1} parent=5 // pred_region
        // Predicated region
        $region33: #{tpu_custom_call.1} parent=31 // pred_check
          %p181 = pneg %p34
        $region34: #{tpu_custom_call.1} parent=31 // pred_check_branch
          %183 = sbr.rel (%p181) target = $region36
        $region35: #{tpu_custom_call.1} parent=31 // pred_region
          %p184 = scmp.lt.s32.totalorder %s14, 1
          %s185 = scalar_select %p184, %s14, 1
          %s186 = smul.addr %s185, 32
          %s187 = smul.addr %s186, 8
          %s188 = scalar_lea.vmem %s0, %s187
        $region36: #{tpu_custom_call.1} parent=31 // pred_fallthru
          _
      $region32: #{tpu_custom_call.1} parent=5 // pred_fallthru
        _
      %p189 = scmp.le.s32.totalorder 1, %s14
      %p190 = scmp.lt.s32.totalorder %s14, 3
      %p191 = pnand %p189, %p190
      %p192 = pneg %p191
      // Predicated region
      $region37: #{tpu_custom_call.1} parent=5 // pred_check
        _
      $region38: #{tpu_custom_call.1} parent=5 // pred_check_branch
        %194 = sbr.rel (%p191) target = $region40
      $region39: #{tpu_custom_call.1} parent=5 // pred_region
        %s195 = ssub.s32 %s14, 1
        %p196 = scmp.lt.s32.totalorder %s19, 1
        %s197 = scalar_select %p196, %s19, 1
        %s198 = smul.addr %s197, 32
        %s199 = smul.addr %s198, 8
        %s200 = scalar_lea.vmem %s0, %s199
        %p201 = pneg %p40
        %p202 = pneg %p37
        %p203 = pneg %p61
        %p204 = pneg %p58
        %p205 = pneg %p82
        %p206 = pneg %p79
        %p207 = pneg %p103
        %p208 = pneg %p100
        %p209 = pneg %p124
        %p210 = pneg %p121
        %p211 = pneg %p150
        %p212 = pneg %p147
        %s213 = sand.u32 %s137, 1
        %s214 = scalar_lea.sflag [#allocation3], %s213
        %s215 = sand.u32 %s137, 1
        %s216 = smul.addr %s215, 256
        %s217 = scalar_lea.vmem [#allocation2], %s216
        %p218 = scmp.lt.s32.totalorder %s19, 1
        %s219 = scalar_select %p218, %s19, 1
        %s220 = smul.addr %s219, 32
        %s221 = smul.addr %s220, 8
        %s222 = scalar_lea.vmem %s0, %s221
        %v223 = vld [vmem:[%s222] sm:$0xff]
        %v224 = vld [vmem:[%s222 + $0x8] sm:$0xff]
        %v225 = vld [vmem:[%s222 + $0x10] sm:$0xff]
        %v226 = vld [vmem:[%s222 + $0x18] sm:$0xff]
        %v227 = vld [vmem:[%s222 + $0x20] sm:$0xff]
        %v228 = vld [vmem:[%s222 + $0x28] sm:$0xff]
        %v229 = vld [vmem:[%s222 + $0x30] sm:$0xff]
        %v230 = vld [vmem:[%s222 + $0x38] sm:$0xff]
        %v231 = vld [vmem:[%s222 + $0x40] sm:$0xff]
        %v232 = vld [vmem:[%s222 + $0x48] sm:$0xff]
        %v233 = vld [vmem:[%s222 + $0x50] sm:$0xff]
        %v234 = vld [vmem:[%s222 + $0x58] sm:$0xff]
        %v235 = vld [vmem:[%s222 + $0x60] sm:$0xff]
        %v236 = vld [vmem:[%s222 + $0x68] sm:$0xff]
        %v237 = vld [vmem:[%s222 + $0x70] sm:$0xff]
        %v238 = vld [vmem:[%s222 + $0x78] sm:$0xff]
        %v239 = vld [vmem:[%s222 + $0x80] sm:$0xff]
        %v240 = vld [vmem:[%s222 + $0x88] sm:$0xff]
        %v241 = vld [vmem:[%s222 + $0x90] sm:$0xff]
        %v242 = vld [vmem:[%s222 + $0x98] sm:$0xff]
        %v243 = vld [vmem:[%s222 + $0xa0] sm:$0xff]
        %v244 = vld [vmem:[%s222 + $0xa8] sm:$0xff]
        %v245 = vld [vmem:[%s222 + $0xb0] sm:$0xff]
        %v246 = vld [vmem:[%s222 + $0xb8] sm:$0xff]
        %v247 = vld [vmem:[%s222 + $0xc0] sm:$0xff]
        %v248 = vld [vmem:[%s222 + $0xc8] sm:$0xff]
        %v249 = vld [vmem:[%s222 + $0xd0] sm:$0xff]
        %v250 = vld [vmem:[%s222 + $0xd8] sm:$0xff]
        %v251 = vld [vmem:[%s222 + $0xe0] sm:$0xff]
        %v252 = vld [vmem:[%s222 + $0xe8] sm:$0xff]
        %v253 = vld [vmem:[%s222 + $0xf0] sm:$0xff]
        %v254 = vld [vmem:[%s222 + $0xf8] sm:$0xff]
        %vm255 = vcmask 261120
        %v256 = vsel %vm255, %v223, 0.0
        %v257 = vsel %vm255, %v224, 0.0
        %v258 = vadd.f32 %v256, %v257
        %v259 = vsel %vm255, %v225, 0.0
        %v260 = vadd.f32 %v258, %v259
        %v261 = vsel %vm255, %v226, 0.0
        %v262 = vadd.f32 %v260, %v261
        %v263 = vsel %vm255, %v227, 0.0
        %v264 = vadd.f32 %v262, %v263
        %v265 = vsel %vm255, %v228, 0.0
        %v266 = vadd.f32 %v264, %v265
        %v267 = vsel %vm255, %v229, 0.0
        %v268 = vadd.f32 %v266, %v267
        %v269 = vsel %vm255, %v230, 0.0
        %v270 = vadd.f32 %v268, %v269
        %v271 = vsel %vm255, %v231, 0.0
        %v272 = vadd.f32 %v270, %v271
        %v273 = vsel %vm255, %v232, 0.0
        %v274 = vadd.f32 %v272, %v273
        %v275 = vsel %vm255, %v233, 0.0
        %v276 = vadd.f32 %v274, %v275
        %v277 = vsel %vm255, %v234, 0.0
        %v278 = vadd.f32 %v276, %v277
        %v279 = vsel %vm255, %v235, 0.0
        %v280 = vadd.f32 %v278, %v279
        %v281 = vsel %vm255, %v236, 0.0
        %v282 = vadd.f32 %v280, %v281
        %v283 = vsel %vm255, %v237, 0.0
        %v284 = vadd.f32 %v282, %v283
        %v285 = vsel %vm255, %v238, 0.0
        %v286 = vadd.f32 %v284, %v285
        %v287 = vsel %vm255, %v239, 0.0
        %v288 = vadd.f32 %v286, %v287
        %v289 = vsel %vm255, %v240, 0.0
        %v290 = vadd.f32 %v288, %v289
        %v291 = vsel %vm255, %v241, 0.0
        %v292 = vadd.f32 %v290, %v291
        %v293 = vsel %vm255, %v242, 0.0
        %v294 = vadd.f32 %v292, %v293
        %v295 = vsel %vm255, %v243, 0.0
        %v296 = vadd.f32 %v294, %v295
        %v297 = vsel %vm255, %v244, 0.0
        %v298 = vadd.f32 %v296, %v297
        %v299 = vsel %vm255, %v245, 0.0
        %v300 = vadd.f32 %v298, %v299
        %v301 = vsel %vm255, %v246, 0.0
        %v302 = vadd.f32 %v300, %v301
        %v303 = vsel %vm255, %v247, 0.0
        %v304 = vadd.f32 %v302, %v303
        %v305 = vsel %vm255, %v248, 0.0
        %v306 = vadd.f32 %v304, %v305
        %v307 = vsel %vm255, %v249, 0.0
        %v308 = vadd.f32 %v306, %v307
        %v309 = vsel %vm255, %v250, 0.0
        %v310 = vadd.f32 %v308, %v309
        %v311 = vsel %vm255, %v251, 0.0
        %v312 = vadd.f32 %v310, %v311
        %v313 = vsel %vm255, %v252, 0.0
        %v314 = vadd.f32 %v312, %v313
        %v315 = vsel %vm255, %v253, 0.0
        %v316 = vadd.f32 %v314, %v315
        %v317 = vsel %vm255, %v254, 0.0
        %v318 = vadd.f32 %v316, %v317
        %v319 = vrot.slane %v318, 4
        %v320 = vadd.f32 %v318, %v319
        %v321 = vrot.slane %v320, 2
        %v322 = vadd.f32 %v320, %v321
        %v323 = vrot.slane %v322, 1
        %v324 = vadd.f32 %v322, %v323
        %v325 = vrcp.pop 256.0
        %v326 = vmul.f32 %v324, %v325
        %v327 = vsub.f32 %v223, %v326
        %v328 = vsub.f32 %v224, %v326
        %v329 = vsub.f32 %v225, %v326
        %v330 = vsub.f32 %v226, %v326
        %v331 = vsub.f32 %v227, %v326
        %v332 = vsub.f32 %v228, %v326
        %v333 = vsub.f32 %v229, %v326
        %v334 = vsub.f32 %v230, %v326
        %v335 = vsub.f32 %v231, %v326
        %v336 = vsub.f32 %v232, %v326
        %v337 = vsub.f32 %v233, %v326
        %v338 = vsub.f32 %v234, %v326
        %v339 = vsub.f32 %v235, %v326
        %v340 = vsub.f32 %v236, %v326
        %v341 = vsub.f32 %v237, %v326
        %v342 = vsub.f32 %v238, %v326
        %v343 = vsub.f32 %v239, %v326
        %v344 = vsub.f32 %v240, %v326
        %v345 = vsub.f32 %v241, %v326
        %v346 = vsub.f32 %v242, %v326
        %v347 = vsub.f32 %v243, %v326
        %v348 = vsub.f32 %v244, %v326
        %v349 = vsub.f32 %v245, %v326
        %v350 = vsub.f32 %v246, %v326
        %v351 = vsub.f32 %v247, %v326
        %v352 = vsub.f32 %v248, %v326
        %v353 = vsub.f32 %v249, %v326
        %v354 = vsub.f32 %v250, %v326
        %v355 = vsub.f32 %v251, %v326
        %v356 = vsub.f32 %v252, %v326
        %v357 = vsub.f32 %v253, %v326
        %v358 = vsub.f32 %v254, %v326
        %v359 = vmul.f32 %v327, %v327
        %v360 = vmul.f32 %v328, %v328
        %v361 = vmul.f32 %v329, %v329
        %v362 = vmul.f32 %v330, %v330
        %v363 = vmul.f32 %v331, %v331
        %v364 = vmul.f32 %v332, %v332
        %v365 = vmul.f32 %v333, %v333
        %v366 = vmul.f32 %v334, %v334
        %v367 = vmul.f32 %v335, %v335
        %v368 = vmul.f32 %v336, %v336
        %v369 = vmul.f32 %v337, %v337
        %v370 = vmul.f32 %v338, %v338
        %v371 = vmul.f32 %v339, %v339
        %v372 = vmul.f32 %v340, %v340
        %v373 = vmul.f32 %v341, %v341
        %v374 = vmul.f32 %v342, %v342
        %v375 = vmul.f32 %v343, %v343
        %v376 = vmul.f32 %v344, %v344
        %v377 = vmul.f32 %v345, %v345
        %v378 = vmul.f32 %v346, %v346
        %v379 = vmul.f32 %v347, %v347
        %v380 = vmul.f32 %v348, %v348
        %v381 = vmul.f32 %v349, %v349
        %v382 = vmul.f32 %v350, %v350
        %v383 = vmul.f32 %v351, %v351
        %v384 = vmul.f32 %v352, %v352
        %v385 = vmul.f32 %v353, %v353
        %v386 = vmul.f32 %v354, %v354
        %v387 = vmul.f32 %v355, %v355
        %v388 = vmul.f32 %v356, %v356
        %v389 = vmul.f32 %v357, %v357
        %v390 = vmul.f32 %v358, %v358
        %v391 = vsel %vm255, %v359, 0.0
        %v392 = vsel %vm255, %v360, 0.0
        %v393 = vadd.f32 %v391, %v392
        %v394 = vsel %vm255, %v361, 0.0
        %v395 = vadd.f32 %v393, %v394
        %v396 = vsel %vm255, %v362, 0.0
        %v397 = vadd.f32 %v395, %v396
        %v398 = vsel %vm255, %v363, 0.0
        %v399 = vadd.f32 %v397, %v398
        %v400 = vsel %vm255, %v364, 0.0
        %v401 = vadd.f32 %v399, %v400
        %v402 = vsel %vm255, %v365, 0.0
        %v403 = vadd.f32 %v401, %v402
        %v404 = vsel %vm255, %v366, 0.0
        %v405 = vadd.f32 %v403, %v404
        %v406 = vsel %vm255, %v367, 0.0
        %v407 = vadd.f32 %v405, %v406
        %v408 = vsel %vm255, %v368, 0.0
        %v409 = vadd.f32 %v407, %v408
        %v410 = vsel %vm255, %v369, 0.0
        %v411 = vadd.f32 %v409, %v410
        %v412 = vsel %vm255, %v370, 0.0
        %v413 = vadd.f32 %v411, %v412
        %v414 = vsel %vm255, %v371, 0.0
        %v415 = vadd.f32 %v413, %v414
        %v416 = vsel %vm255, %v372, 0.0
        %v417 = vadd.f32 %v415, %v416
        %v418 = vsel %vm255, %v373, 0.0
        %v419 = vadd.f32 %v417, %v418
        %v420 = vsel %vm255, %v374, 0.0
        %v421 = vadd.f32 %v419, %v420
        %v422 = vsel %vm255, %v375, 0.0
        %v423 = vadd.f32 %v421, %v422
        %v424 = vsel %vm255, %v376, 0.0
        %v425 = vadd.f32 %v423, %v424
        %v426 = vsel %vm255, %v377, 0.0
        %v427 = vadd.f32 %v425, %v426
        %v428 = vsel %vm255, %v378, 0.0
        %v429 = vadd.f32 %v427, %v428
        %v430 = vsel %vm255, %v379, 0.0
        %v431 = vadd.f32 %v429, %v430
        %v432 = vsel %vm255, %v380, 0.0
        %v433 = vadd.f32 %v431, %v432
        %v434 = vsel %vm255, %v381, 0.0
        %v435 = vadd.f32 %v433, %v434
        %v436 = vsel %vm255, %v382, 0.0
        %v437 = vadd.f32 %v435, %v436
        %v438 = vsel %vm255, %v383, 0.0
        %v439 = vadd.f32 %v437, %v438
        %v440 = vsel %vm255, %v384, 0.0
        %v441 = vadd.f32 %v439, %v440
        %v442 = vsel %vm255, %v385, 0.0
        %v443 = vadd.f32 %v441, %v442
        %v444 = vsel %vm255, %v386, 0.0
        %v445 = vadd.f32 %v443, %v444
        %v446 = vsel %vm255, %v387, 0.0
        %v447 = vadd.f32 %v445, %v446
        %v448 = vsel %vm255, %v388, 0.0
        %v449 = vadd.f32 %v447, %v448
        %v450 = vsel %vm255, %v389, 0.0
        %v451 = vadd.f32 %v449, %v450
        %v452 = vsel %vm255, %v390, 0.0
        %v453 = vadd.f32 %v451, %v452
        %v454 = vrot.slane %v453, 4
        %v455 = vadd.f32 %v453, %v454
        %v456 = vrot.slane %v455, 2
        %v457 = vadd.f32 %v455, %v456
        %v458 = vrot.slane %v457, 1
        %v459 = vadd.f32 %v457, %v458
        %v460 = vmul.f32 %v459, %v325
        %v461 = vadd.f32 %v460, 1e-05
        %v462 = vrsqrt.pop %v461
        %v463 = vmul.f32 %v327, %v462
        %v464 = vmul.f32 %v328, %v462
        %v465 = vmul.f32 %v329, %v462
        %v466 = vmul.f32 %v330, %v462
        %v467 = vmul.f32 %v331, %v462
        %v468 = vmul.f32 %v332, %v462
        %v469 = vmul.f32 %v333, %v462
        %v470 = vmul.f32 %v334, %v462
        %v471 = vmul.f32 %v335, %v462
        %v472 = vmul.f32 %v336, %v462
        %v473 = vmul.f32 %v337, %v462
        %v474 = vmul.f32 %v338, %v462
        %v475 = vmul.f32 %v339, %v462
        %v476 = vmul.f32 %v340, %v462
        %v477 = vmul.f32 %v341, %v462
        %v478 = vmul.f32 %v342, %v462
        %v479 = vmul.f32 %v343, %v462
        %v480 = vmul.f32 %v344, %v462
        %v481 = vmul.f32 %v345, %v462
        %v482 = vmul.f32 %v346, %v462
        %v483 = vmul.f32 %v347, %v462
        %v484 = vmul.f32 %v348, %v462
        %v485 = vmul.f32 %v349, %v462
        %v486 = vmul.f32 %v350, %v462
        %v487 = vmul.f32 %v351, %v462
        %v488 = vmul.f32 %v352, %v462
        %v489 = vmul.f32 %v353, %v462
        %v490 = vmul.f32 %v354, %v462
        %v491 = vmul.f32 %v355, %v462
        %v492 = vmul.f32 %v356, %v462
        %v493 = vmul.f32 %v357, %v462
        %v494 = vmul.f32 %v358, %v462
        %v495 = vmax.f32 %v463, 0.0
        %v496 = vmax.f32 %v464, 0.0
        %v497 = vmax.f32 %v465, 0.0
        %v498 = vmax.f32 %v466, 0.0
        %v499 = vmax.f32 %v467, 0.0
        %v500 = vmax.f32 %v468, 0.0
        %v501 = vmax.f32 %v469, 0.0
        %v502 = vmax.f32 %v470, 0.0
        %v503 = vmax.f32 %v471, 0.0
        %v504 = vmax.f32 %v472, 0.0
        %v505 = vmax.f32 %v473, 0.0
        %v506 = vmax.f32 %v474, 0.0
        %v507 = vmax.f32 %v475, 0.0
        %v508 = vmax.f32 %v476, 0.0
        %v509 = vmax.f32 %v477, 0.0
        %v510 = vmax.f32 %v478, 0.0
        %v511 = vmax.f32 %v479, 0.0
        %v512 = vmax.f32 %v480, 0.0
        %v513 = vmax.f32 %v481, 0.0
        %v514 = vmax.f32 %v482, 0.0
        %v515 = vmax.f32 %v483, 0.0
        %v516 = vmax.f32 %v484, 0.0
        %v517 = vmax.f32 %v485, 0.0
        %v518 = vmax.f32 %v486, 0.0
        %v519 = vmax.f32 %v487, 0.0
        %v520 = vmax.f32 %v488, 0.0
        %v521 = vmax.f32 %v489, 0.0
        %v522 = vmax.f32 %v490, 0.0
        %v523 = vmax.f32 %v491, 0.0
        %v524 = vmax.f32 %v492, 0.0
        %v525 = vmax.f32 %v493, 0.0
        %v526 = vmax.f32 %v494, 0.0
        %vm560 = vcmask 1040384
        %v561 = vrot.slane 0.0, 7
        %v562 = vsel %vm560, %v561, %v561
        %v563 = vrot.slane %v495, 7
        %v564 = vrot.slane %v496, 7
        %v565 = vsel %vm560, %v563, %v564
        %v566 = vrot.slane %v497, 7
        %v567 = vrot.slane %v498, 7
        %v568 = vsel %vm560, %v566, %v567
        %v569 = vrot.slane %v499, 7
        %v570 = vrot.slane %v500, 7
        %v571 = vsel %vm560, %v569, %v570
        %v572 = vrot.slane %v501, 7
        %v573 = vrot.slane %v502, 7
        %v574 = vsel %vm560, %v572, %v573
        %v575 = vrot.slane %v503, 7
        %v576 = vrot.slane %v504, 7
        %v577 = vsel %vm560, %v575, %v576
        %v578 = vrot.slane %v505, 7
        %v579 = vrot.slane %v506, 7
        %v580 = vsel %vm560, %v578, %v579
        %v581 = vrot.slane %v507, 7
        %v582 = vrot.slane %v508, 7
        %v583 = vsel %vm560, %v581, %v582
        %v584 = vrot.slane %v509, 7
        %v585 = vrot.slane %v510, 7
        %v586 = vsel %vm560, %v584, %v585
        %v587 = vrot.slane %v511, 7
        %v588 = vrot.slane %v512, 7
        %v589 = vsel %vm560, %v587, %v588
        %v590 = vrot.slane %v513, 7
        %v591 = vrot.slane %v514, 7
        %v592 = vsel %vm560, %v590, %v591
        %v593 = vrot.slane %v515, 7
        %v594 = vrot.slane %v516, 7
        %v595 = vsel %vm560, %v593, %v594
        %v596 = vrot.slane %v517, 7
        %v597 = vrot.slane %v518, 7
        %v598 = vsel %vm560, %v596, %v597
        %v599 = vrot.slane %v519, 7
        %v600 = vrot.slane %v520, 7
        %v601 = vsel %vm560, %v599, %v600
        %v602 = vrot.slane %v521, 7
        %v603 = vrot.slane %v522, 7
        %v604 = vsel %vm560, %v602, %v603
        %v605 = vrot.slane %v523, 7
        %v606 = vrot.slane %v524, 7
        %v607 = vsel %vm560, %v605, %v606
        %v608 = vrot.slane %v525, 7
        %v609 = vrot.slane %v526, 7
        %v610 = vsel %vm560, %v608, %v609
        %v660 = vsel %vm560, 0.0, %v561
        %v661 = vsel %vm560, 0.0, %v563
        %v662 = vsel %vm560, 0.0, %v566
        %v663 = vsel %vm560, 0.0, %v569
        %v664 = vsel %vm560, 0.0, %v572
        %v665 = vsel %vm560, 0.0, %v575
        %v666 = vsel %vm560, 0.0, %v578
        %v667 = vsel %vm560, 0.0, %v581
        %v668 = vsel %vm560, 0.0, %v584
        %v669 = vsel %vm560, 0.0, %v587
        %v670 = vsel %vm560, 0.0, %v590
        %v671 = vsel %vm560, 0.0, %v593
        %v672 = vsel %vm560, 0.0, %v596
        %v673 = vsel %vm560, 0.0, %v599
        %v674 = vsel %vm560, 0.0, %v602
        %v675 = vsel %vm560, 0.0, %v605
        %v676 = vsel %vm560, 0.0, %v608
        %v677 = vsel %vm560, %v561, 0.0
        %v678 = vsel %vm560, %v564, 0.0
        %v679 = vsel %vm560, %v567, 0.0
        %v680 = vsel %vm560, %v570, 0.0
        %v681 = vsel %vm560, %v573, 0.0
        %v682 = vsel %vm560, %v576, 0.0
        %v683 = vsel %vm560, %v579, 0.0
        %v684 = vsel %vm560, %v582, 0.0
        %v685 = vsel %vm560, %v585, 0.0
        %v686 = vsel %vm560, %v588, 0.0
        %v687 = vsel %vm560, %v591, 0.0
        %v688 = vsel %vm560, %v594, 0.0
        %v689 = vsel %vm560, %v597, 0.0
        %v690 = vsel %vm560, %v600, 0.0
        %v691 = vsel %vm560, %v603, 0.0
        %v692 = vsel %vm560, %v606, 0.0
        %v693 = vsel %vm560, %v609, 0.0
        %vm726 = vcmask 1046528
        %v727 = vrot.slane %v660, 1
        %v728 = vrot.slane %v562, 1
        %v729 = vsel %vm726, %v727, %v728
        %v730 = vrot.slane %v677, 1
        %v731 = vsel %vm726, %v728, %v730
        %v732 = vrot.slane %v661, 1
        %v733 = vrot.slane %v565, 1
        %v734 = vsel %vm726, %v732, %v733
        %v735 = vrot.slane %v678, 1
        %v736 = vsel %vm726, %v733, %v735
        %v737 = vrot.slane %v662, 1
        %v738 = vrot.slane %v568, 1
        %v739 = vsel %vm726, %v737, %v738
        %v740 = vrot.slane %v679, 1
        %v741 = vsel %vm726, %v738, %v740
        %v742 = vrot.slane %v663, 1
        %v743 = vrot.slane %v571, 1
        %v744 = vsel %vm726, %v742, %v743
        %v745 = vrot.slane %v680, 1
        %v746 = vsel %vm726, %v743, %v745
        %v747 = vrot.slane %v664, 1
        %v748 = vrot.slane %v574, 1
        %v749 = vsel %vm726, %v747, %v748
        %v750 = vrot.slane %v681, 1
        %v751 = vsel %vm726, %v748, %v750
        %v752 = vrot.slane %v665, 1
        %v753 = vrot.slane %v577, 1
        %v754 = vsel %vm726, %v752, %v753
        %v755 = vrot.slane %v682, 1
        %v756 = vsel %vm726, %v753, %v755
        %v757 = vrot.slane %v666, 1
        %v758 = vrot.slane %v580, 1
        %v759 = vsel %vm726, %v757, %v758
        %v760 = vrot.slane %v683, 1
        %v761 = vsel %vm726, %v758, %v760
        %v762 = vrot.slane %v667, 1
        %v763 = vrot.slane %v583, 1
        %v764 = vsel %vm726, %v762, %v763
        %v765 = vrot.slane %v684, 1
        %v766 = vsel %vm726, %v763, %v765
        %v767 = vrot.slane %v668, 1
        %v768 = vrot.slane %v586, 1
        %v769 = vsel %vm726, %v767, %v768
        %v770 = vrot.slane %v685, 1
        %v771 = vsel %vm726, %v768, %v770
        %v772 = vrot.slane %v669, 1
        %v773 = vrot.slane %v589, 1
        %v774 = vsel %vm726, %v772, %v773
        %v775 = vrot.slane %v686, 1
        %v776 = vsel %vm726, %v773, %v775
        %v777 = vrot.slane %v670, 1
        %v778 = vrot.slane %v592, 1
        %v779 = vsel %vm726, %v777, %v778
        %v780 = vrot.slane %v687, 1
        %v781 = vsel %vm726, %v778, %v780
        %v782 = vrot.slane %v671, 1
        %v783 = vrot.slane %v595, 1
        %v784 = vsel %vm726, %v782, %v783
        %v785 = vrot.slane %v688, 1
        %v786 = vsel %vm726, %v783, %v785
        %v787 = vrot.slane %v672, 1
        %v788 = vrot.slane %v598, 1
        %v789 = vsel %vm726, %v787, %v788
        %v790 = vrot.slane %v689, 1
        %v791 = vsel %vm726, %v788, %v790
        %v792 = vrot.slane %v673, 1
        %v793 = vrot.slane %v601, 1
        %v794 = vsel %vm726, %v792, %v793
        %v795 = vrot.slane %v690, 1
        %v796 = vsel %vm726, %v793, %v795
        %v797 = vrot.slane %v674, 1
        %v798 = vrot.slane %v604, 1
        %v799 = vsel %vm726, %v797, %v798
        %v800 = vrot.slane %v691, 1
        %v801 = vsel %vm726, %v798, %v800
        %v802 = vrot.slane %v675, 1
        %v803 = vrot.slane %v607, 1
        %v804 = vsel %vm726, %v802, %v803
        %v805 = vrot.slane %v692, 1
        %v806 = vsel %vm726, %v803, %v805
        %807 = vrot.lane.b32.xlu0 %v729, 32
        %v808 = vpop.permute.xlu0 %807
        %809 = vrot.lane.b32.xlu0 %v731, 32
        %v810 = vpop.permute.xlu0 %809
        %811 = vrot.lane.b32.xlu0 %v734, 32
        %v812 = vpop.permute.xlu0 %811
        %813 = vrot.lane.b32.xlu0 %v736, 32
        %v814 = vpop.permute.xlu0 %813
        %815 = vrot.lane.b32.xlu0 %v739, 32
        %v816 = vpop.permute.xlu0 %815
        %817 = vrot.lane.b32.xlu0 %v741, 32
        %v818 = vpop.permute.xlu0 %817
        %819 = vrot.lane.b32.xlu0 %v744, 32
        %v820 = vpop.permute.xlu0 %819
        %821 = vrot.lane.b32.xlu0 %v746, 32
        %v822 = vpop.permute.xlu0 %821
        %823 = vrot.lane.b32.xlu0 %v749, 32
        %v824 = vpop.permute.xlu0 %823
        %825 = vrot.lane.b32.xlu0 %v751, 32
        %v826 = vpop.permute.xlu0 %825
        %827 = vrot.lane.b32.xlu0 %v754, 32
        %v828 = vpop.permute.xlu0 %827
        %829 = vrot.lane.b32.xlu0 %v756, 32
        %v830 = vpop.permute.xlu0 %829
        %831 = vrot.lane.b32.xlu0 %v759, 32
        %v832 = vpop.permute.xlu0 %831
        %833 = vrot.lane.b32.xlu0 %v761, 32
        %v834 = vpop.permute.xlu0 %833
        %835 = vrot.lane.b32.xlu0 %v764, 32
        %v836 = vpop.permute.xlu0 %835
        %837 = vrot.lane.b32.xlu0 %v766, 32
        %v838 = vpop.permute.xlu0 %837
        %839 = vrot.lane.b32.xlu0 %v769, 32
        %v840 = vpop.permute.xlu0 %839
        %841 = vrot.lane.b32.xlu0 %v771, 32
        %v842 = vpop.permute.xlu0 %841
        %843 = vrot.lane.b32.xlu0 %v774, 32
        %v844 = vpop.permute.xlu0 %843
        %845 = vrot.lane.b32.xlu0 %v776, 32
        %v846 = vpop.permute.xlu0 %845
        %847 = vrot.lane.b32.xlu0 %v779, 32
        %v848 = vpop.permute.xlu0 %847
        %849 = vrot.lane.b32.xlu0 %v781, 32
        %v850 = vpop.permute.xlu0 %849
        %851 = vrot.lane.b32.xlu0 %v784, 32
        %v852 = vpop.permute.xlu0 %851
        %853 = vrot.lane.b32.xlu0 %v786, 32
        %v854 = vpop.permute.xlu0 %853
        %855 = vrot.lane.b32.xlu0 %v789, 32
        %v856 = vpop.permute.xlu0 %855
        %857 = vrot.lane.b32.xlu0 %v791, 32
        %v858 = vpop.permute.xlu0 %857
        %859 = vrot.lane.b32.xlu0 %v794, 32
        %v860 = vpop.permute.xlu0 %859
        %861 = vrot.lane.b32.xlu0 %v796, 32
        %v862 = vpop.permute.xlu0 %861
        %863 = vrot.lane.b32.xlu0 %v799, 32
        %v864 = vpop.permute.xlu0 %863
        %865 = vrot.lane.b32.xlu0 %v801, 32
        %v866 = vpop.permute.xlu0 %865
        %867 = vrot.lane.b32.xlu0 %v804, 32
        %v868 = vpop.permute.xlu0 %867
        %869 = vrot.lane.b32.xlu0 %v806, 32
        %v870 = vpop.permute.xlu0 %869
        %vm903 = vcmask 1045504
        %v904 = vrot.slane %v660, 2
        %v905 = vrot.slane %v562, 2
        %v906 = vsel %vm903, %v904, %v905
        %v907 = vrot.slane %v677, 2
        %v908 = vsel %vm903, %v905, %v907
        %v909 = vrot.slane %v661, 2
        %v910 = vrot.slane %v565, 2
        %v911 = vsel %vm903, %v909, %v910
        %v912 = vrot.slane %v678, 2
        %v913 = vsel %vm903, %v910, %v912
        %v914 = vrot.slane %v662, 2
        %v915 = vrot.slane %v568, 2
        %v916 = vsel %vm903, %v914, %v915
        %v917 = vrot.slane %v679, 2
        %v918 = vsel %vm903, %v915, %v917
        %v919 = vrot.slane %v663, 2
        %v920 = vrot.slane %v571, 2
        %v921 = vsel %vm903, %v919, %v920
        %v922 = vrot.slane %v680, 2
        %v923 = vsel %vm903, %v920, %v922
        %v924 = vrot.slane %v664, 2
        %v925 = vrot.slane %v574, 2
        %v926 = vsel %vm903, %v924, %v925
        %v927 = vrot.slane %v681, 2
        %v928 = vsel %vm903, %v925, %v927
        %v929 = vrot.slane %v665, 2
        %v930 = vrot.slane %v577, 2
        %v931 = vsel %vm903, %v929, %v930
        %v932 = vrot.slane %v682, 2
        %v933 = vsel %vm903, %v930, %v932
        %v934 = vrot.slane %v666, 2
        %v935 = vrot.slane %v580, 2
        %v936 = vsel %vm903, %v934, %v935
        %v937 = vrot.slane %v683, 2
        %v938 = vsel %vm903, %v935, %v937
        %v939 = vrot.slane %v667, 2
        %v940 = vrot.slane %v583, 2
        %v941 = vsel %vm903, %v939, %v940
        %v942 = vrot.slane %v684, 2
        %v943 = vsel %vm903, %v940, %v942
        %v944 = vrot.slane %v668, 2
        %v945 = vrot.slane %v586, 2
        %v946 = vsel %vm903, %v944, %v945
        %v947 = vrot.slane %v685, 2
        %v948 = vsel %vm903, %v945, %v947
        %v949 = vrot.slane %v669, 2
        %v950 = vrot.slane %v589, 2
        %v951 = vsel %vm903, %v949, %v950
        %v952 = vrot.slane %v686, 2
        %v953 = vsel %vm903, %v950, %v952
        %v954 = vrot.slane %v670, 2
        %v955 = vrot.slane %v592, 2
        %v956 = vsel %vm903, %v954, %v955
        %v957 = vrot.slane %v687, 2
        %v958 = vsel %vm903, %v955, %v957
        %v959 = vrot.slane %v671, 2
        %v960 = vrot.slane %v595, 2
        %v961 = vsel %vm903, %v959, %v960
        %v962 = vrot.slane %v688, 2
        %v963 = vsel %vm903, %v960, %v962
        %v964 = vrot.slane %v672, 2
        %v965 = vrot.slane %v598, 2
        %v966 = vsel %vm903, %v964, %v965
        %v967 = vrot.slane %v689, 2
        %v968 = vsel %vm903, %v965, %v967
        %v969 = vrot.slane %v673, 2
        %v970 = vrot.slane %v601, 2
        %v971 = vsel %vm903, %v969, %v970
        %v972 = vrot.slane %v690, 2
        %v973 = vsel %vm903, %v970, %v972
        %v974 = vrot.slane %v674, 2
        %v975 = vrot.slane %v604, 2
        %v976 = vsel %vm903, %v974, %v975
        %v977 = vrot.slane %v691, 2
        %v978 = vsel %vm903, %v975, %v977
        %v979 = vrot.slane %v675, 2
        %v980 = vrot.slane %v607, 2
        %v981 = vsel %vm903, %v979, %v980
        %v982 = vrot.slane %v692, 2
        %v983 = vsel %vm903, %v980, %v982
        %984 = vrot.lane.b32.xlu0 %v906, 64
        %v985 = vpop.permute.xlu0 %984
        %986 = vrot.lane.b32.xlu0 %v908, 64
        %v987 = vpop.permute.xlu0 %986
        %988 = vrot.lane.b32.xlu0 %v911, 64
        %v989 = vpop.permute.xlu0 %988
        %990 = vrot.lane.b32.xlu0 %v913, 64
        %v991 = vpop.permute.xlu0 %990
        %992 = vrot.lane.b32.xlu0 %v916, 64
        %v993 = vpop.permute.xlu0 %992
        %994 = vrot.lane.b32.xlu0 %v918, 64
        %v995 = vpop.permute.xlu0 %994
        %996 = vrot.lane.b32.xlu0 %v921, 64
        %v997 = vpop.permute.xlu0 %996
        %998 = vrot.lane.b32.xlu0 %v923, 64
        %v999 = vpop.permute.xlu0 %998
        %1000 = vrot.lane.b32.xlu0 %v926, 64
        %v1001 = vpop.permute.xlu0 %1000
        %1002 = vrot.lane.b32.xlu0 %v928, 64
        %v1003 = vpop.permute.xlu0 %1002
        %1004 = vrot.lane.b32.xlu0 %v931, 64
        %v1005 = vpop.permute.xlu0 %1004
        %1006 = vrot.lane.b32.xlu0 %v933, 64
        %v1007 = vpop.permute.xlu0 %1006
        %1008 = vrot.lane.b32.xlu0 %v936, 64
        %v1009 = vpop.permute.xlu0 %1008
        %1010 = vrot.lane.b32.xlu0 %v938, 64
        %v1011 = vpop.permute.xlu0 %1010
        %1012 = vrot.lane.b32.xlu0 %v941, 64
        %v1013 = vpop.permute.xlu0 %1012
        %1014 = vrot.lane.b32.xlu0 %v943, 64
        %v1015 = vpop.permute.xlu0 %1014
        %1016 = vrot.lane.b32.xlu0 %v946, 64
        %v1017 = vpop.permute.xlu0 %1016
        %1018 = vrot.lane.b32.xlu0 %v948, 64
        %v1019 = vpop.permute.xlu0 %1018
        %1020 = vrot.lane.b32.xlu0 %v951, 64
        %v1021 = vpop.permute.xlu0 %1020
        %1022 = vrot.lane.b32.xlu0 %v953, 64
        %v1023 = vpop.permute.xlu0 %1022
        %1024 = vrot.lane.b32.xlu0 %v956, 64
        %v1025 = vpop.permute.xlu0 %1024
        %1026 = vrot.lane.b32.xlu0 %v958, 64
        %v1027 = vpop.permute.xlu0 %1026
        %1028 = vrot.lane.b32.xlu0 %v961, 64
        %v1029 = vpop.permute.xlu0 %1028
        %1030 = vrot.lane.b32.xlu0 %v963, 64
        %v1031 = vpop.permute.xlu0 %1030
        %1032 = vrot.lane.b32.xlu0 %v966, 64
        %v1033 = vpop.permute.xlu0 %1032
        %1034 = vrot.lane.b32.xlu0 %v968, 64
        %v1035 = vpop.permute.xlu0 %1034
        %1036 = vrot.lane.b32.xlu0 %v971, 64
        %v1037 = vpop.permute.xlu0 %1036
        %1038 = vrot.lane.b32.xlu0 %v973, 64
        %v1039 = vpop.permute.xlu0 %1038
        %1040 = vrot.lane.b32.xlu0 %v976, 64
        %v1041 = vpop.permute.xlu0 %1040
        %1042 = vrot.lane.b32.xlu0 %v978, 64
        %v1043 = vpop.permute.xlu0 %1042
        %1044 = vrot.lane.b32.xlu0 %v981, 64
        %v1045 = vpop.permute.xlu0 %1044
        %1046 = vrot.lane.b32.xlu0 %v983, 64
        %v1047 = vpop.permute.xlu0 %1046
        %1081 = vrot.lane.b32.xlu0 %v661, 96
        %v1082 = vpop.permute.xlu0 %1081
        %1083 = vrot.lane.b32.xlu0 %v565, 96
        %v1084 = vpop.permute.xlu0 %1083
        %1085 = vrot.lane.b32.xlu0 %v662, 96
        %v1086 = vpop.permute.xlu0 %1085
        %1087 = vrot.lane.b32.xlu0 %v568, 96
        %v1088 = vpop.permute.xlu0 %1087
        %1089 = vrot.lane.b32.xlu0 %v663, 96
        %v1090 = vpop.permute.xlu0 %1089
        %1091 = vrot.lane.b32.xlu0 %v571, 96
        %v1092 = vpop.permute.xlu0 %1091
        %1093 = vrot.lane.b32.xlu0 %v664, 96
        %v1094 = vpop.permute.xlu0 %1093
        %1095 = vrot.lane.b32.xlu0 %v574, 96
        %v1096 = vpop.permute.xlu0 %1095
        %1097 = vrot.lane.b32.xlu0 %v665, 96
        %v1098 = vpop.permute.xlu0 %1097
        %1099 = vrot.lane.b32.xlu0 %v577, 96
        %v1100 = vpop.permute.xlu0 %1099
        %1101 = vrot.lane.b32.xlu0 %v666, 96
        %v1102 = vpop.permute.xlu0 %1101
        %1103 = vrot.lane.b32.xlu0 %v580, 96
        %v1104 = vpop.permute.xlu0 %1103
        %1105 = vrot.lane.b32.xlu0 %v667, 96
        %v1106 = vpop.permute.xlu0 %1105
        %1107 = vrot.lane.b32.xlu0 %v583, 96
        %v1108 = vpop.permute.xlu0 %1107
        %1109 = vrot.lane.b32.xlu0 %v668, 96
        %v1110 = vpop.permute.xlu0 %1109
        %1111 = vrot.lane.b32.xlu0 %v586, 96
        %v1112 = vpop.permute.xlu0 %1111
        %1113 = vrot.lane.b32.xlu0 %v669, 96
        %v1114 = vpop.permute.xlu0 %1113
        %1115 = vrot.lane.b32.xlu0 %v589, 96
        %v1116 = vpop.permute.xlu0 %1115
        %1117 = vrot.lane.b32.xlu0 %v670, 96
        %v1118 = vpop.permute.xlu0 %1117
        %1119 = vrot.lane.b32.xlu0 %v592, 96
        %v1120 = vpop.permute.xlu0 %1119
        %1121 = vrot.lane.b32.xlu0 %v671, 96
        %v1122 = vpop.permute.xlu0 %1121
        %1123 = vrot.lane.b32.xlu0 %v595, 96
        %v1124 = vpop.permute.xlu0 %1123
        %1125 = vrot.lane.b32.xlu0 %v672, 96
        %v1126 = vpop.permute.xlu0 %1125
        %1127 = vrot.lane.b32.xlu0 %v598, 96
        %v1128 = vpop.permute.xlu0 %1127
        %1129 = vrot.lane.b32.xlu0 %v673, 96
        %v1130 = vpop.permute.xlu0 %1129
        %1131 = vrot.lane.b32.xlu0 %v601, 96
        %v1132 = vpop.permute.xlu0 %1131
        %1133 = vrot.lane.b32.xlu0 %v674, 96
        %v1134 = vpop.permute.xlu0 %1133
        %1135 = vrot.lane.b32.xlu0 %v604, 96
        %v1136 = vpop.permute.xlu0 %1135
        %1137 = vrot.lane.b32.xlu0 %v675, 96
        %v1138 = vpop.permute.xlu0 %1137
        %1139 = vrot.lane.b32.xlu0 %v607, 96
        %v1140 = vpop.permute.xlu0 %1139
        %1141 = vrot.lane.b32.xlu0 %v676, 96
        %v1142 = vpop.permute.xlu0 %1141
        %1143 = vrot.lane.b32.xlu0 %v610, 96
        %v1144 = vpop.permute.xlu0 %1143
        %v1178 = vrot.slane %v676, 1
        %v1179 = vrot.slane %v610, 1
        %v1180 = vsel %vm726, %v1178, %v1179
        %v1181 = vrot.slane %v693, 1
        %v1182 = vsel %vm726, %v1179, %v1181
        %v1215 = vrot.slane %v676, 2
        %v1216 = vrot.slane %v610, 2
        %v1217 = vsel %vm903, %v1215, %v1216
        %v1218 = vrot.slane %v693, 2
        %v1219 = vsel %vm903, %v1216, %v1218
        %1220 = vrot.lane.b32.xlu0 %v911, 32
        %v1221 = vpop.permute.xlu0 %1220
        %1222 = vrot.lane.b32.xlu0 %v913, 32
        %v1223 = vpop.permute.xlu0 %1222
        %1224 = vrot.lane.b32.xlu0 %v916, 32
        %v1225 = vpop.permute.xlu0 %1224
        %1226 = vrot.lane.b32.xlu0 %v918, 32
        %v1227 = vpop.permute.xlu0 %1226
        %1228 = vrot.lane.b32.xlu0 %v921, 32
        %v1229 = vpop.permute.xlu0 %1228
        %1230 = vrot.lane.b32.xlu0 %v923, 32
        %v1231 = vpop.permute.xlu0 %1230
        %1232 = vrot.lane.b32.xlu0 %v926, 32
        %v1233 = vpop.permute.xlu0 %1232
        %1234 = vrot.lane.b32.xlu0 %v928, 32
        %v1235 = vpop.permute.xlu0 %1234
        %1236 = vrot.lane.b32.xlu0 %v931, 32
        %v1237 = vpop.permute.xlu0 %1236
        %1238 = vrot.lane.b32.xlu0 %v933, 32
        %v1239 = vpop.permute.xlu0 %1238
        %1240 = vrot.lane.b32.xlu0 %v936, 32
        %v1241 = vpop.permute.xlu0 %1240
        %1242 = vrot.lane.b32.xlu0 %v938, 32
        %v1243 = vpop.permute.xlu0 %1242
        %1244 = vrot.lane.b32.xlu0 %v941, 32
        %v1245 = vpop.permute.xlu0 %1244
        %1246 = vrot.lane.b32.xlu0 %v943, 32
        %v1247 = vpop.permute.xlu0 %1246
        %1248 = vrot.lane.b32.xlu0 %v946, 32
        %v1249 = vpop.permute.xlu0 %1248
        %1250 = vrot.lane.b32.xlu0 %v948, 32
        %v1251 = vpop.permute.xlu0 %1250
        %1252 = vrot.lane.b32.xlu0 %v951, 32
        %v1253 = vpop.permute.xlu0 %1252
        %1254 = vrot.lane.b32.xlu0 %v953, 32
        %v1255 = vpop.permute.xlu0 %1254
        %1256 = vrot.lane.b32.xlu0 %v956, 32
        %v1257 = vpop.permute.xlu0 %1256
        %1258 = vrot.lane.b32.xlu0 %v958, 32
        %v1259 = vpop.permute.xlu0 %1258
        %1260 = vrot.lane.b32.xlu0 %v961, 32
        %v1261 = vpop.permute.xlu0 %1260
        %1262 = vrot.lane.b32.xlu0 %v963, 32
        %v1263 = vpop.permute.xlu0 %1262
        %1264 = vrot.lane.b32.xlu0 %v966, 32
        %v1265 = vpop.permute.xlu0 %1264
        %1266 = vrot.lane.b32.xlu0 %v968, 32
        %v1267 = vpop.permute.xlu0 %1266
        %1268 = vrot.lane.b32.xlu0 %v971, 32
        %v1269 = vpop.permute.xlu0 %1268
        %1270 = vrot.lane.b32.xlu0 %v973, 32
        %v1271 = vpop.permute.xlu0 %1270
        %1272 = vrot.lane.b32.xlu0 %v976, 32
        %v1273 = vpop.permute.xlu0 %1272
        %1274 = vrot.lane.b32.xlu0 %v978, 32
        %v1275 = vpop.permute.xlu0 %1274
        %1276 = vrot.lane.b32.xlu0 %v981, 32
        %v1277 = vpop.permute.xlu0 %1276
        %1278 = vrot.lane.b32.xlu0 %v983, 32
        %v1279 = vpop.permute.xlu0 %1278
        %1280 = vrot.lane.b32.xlu0 %v1217, 32
        %v1281 = vpop.permute.xlu0 %1280
        %1282 = vrot.lane.b32.xlu0 %v1219, 32
        %v1283 = vpop.permute.xlu0 %1282
        %1316 = vrot.lane.b32.xlu0 %v662, 64
        %v1317 = vpop.permute.xlu0 %1316
        %1318 = vrot.lane.b32.xlu0 %v568, 64
        %v1319 = vpop.permute.xlu0 %1318
        %1320 = vrot.lane.b32.xlu0 %v663, 64
        %v1321 = vpop.permute.xlu0 %1320
        %1322 = vrot.lane.b32.xlu0 %v571, 64
        %v1323 = vpop.permute.xlu0 %1322
        %1324 = vrot.lane.b32.xlu0 %v664, 64
        %v1325 = vpop.permute.xlu0 %1324
        %1326 = vrot.lane.b32.xlu0 %v574, 64
        %v1327 = vpop.permute.xlu0 %1326
        %1328 = vrot.lane.b32.xlu0 %v665, 64
        %v1329 = vpop.permute.xlu0 %1328
        %1330 = vrot.lane.b32.xlu0 %v577, 64
        %v1331 = vpop.permute.xlu0 %1330
        %1332 = vrot.lane.b32.xlu0 %v666, 64
        %v1333 = vpop.permute.xlu0 %1332
        %1334 = vrot.lane.b32.xlu0 %v580, 64
        %v1335 = vpop.permute.xlu0 %1334
        %1336 = vrot.lane.b32.xlu0 %v667, 64
        %v1337 = vpop.permute.xlu0 %1336
        %1338 = vrot.lane.b32.xlu0 %v583, 64
        %v1339 = vpop.permute.xlu0 %1338
        %1340 = vrot.lane.b32.xlu0 %v668, 64
        %v1341 = vpop.permute.xlu0 %1340
        %1342 = vrot.lane.b32.xlu0 %v586, 64
        %v1343 = vpop.permute.xlu0 %1342
        %1344 = vrot.lane.b32.xlu0 %v669, 64
        %v1345 = vpop.permute.xlu0 %1344
        %1346 = vrot.lane.b32.xlu0 %v589, 64
        %v1347 = vpop.permute.xlu0 %1346
        %1348 = vrot.lane.b32.xlu0 %v670, 64
        %v1349 = vpop.permute.xlu0 %1348
        %1350 = vrot.lane.b32.xlu0 %v592, 64
        %v1351 = vpop.permute.xlu0 %1350
        %1352 = vrot.lane.b32.xlu0 %v671, 64
        %v1353 = vpop.permute.xlu0 %1352
        %1354 = vrot.lane.b32.xlu0 %v595, 64
        %v1355 = vpop.permute.xlu0 %1354
        %1356 = vrot.lane.b32.xlu0 %v672, 64
        %v1357 = vpop.permute.xlu0 %1356
        %1358 = vrot.lane.b32.xlu0 %v598, 64
        %v1359 = vpop.permute.xlu0 %1358
        %1360 = vrot.lane.b32.xlu0 %v673, 64
        %v1361 = vpop.permute.xlu0 %1360
        %1362 = vrot.lane.b32.xlu0 %v601, 64
        %v1363 = vpop.permute.xlu0 %1362
        %1364 = vrot.lane.b32.xlu0 %v674, 64
        %v1365 = vpop.permute.xlu0 %1364
        %1366 = vrot.lane.b32.xlu0 %v604, 64
        %v1367 = vpop.permute.xlu0 %1366
        %1368 = vrot.lane.b32.xlu0 %v675, 64
        %v1369 = vpop.permute.xlu0 %1368
        %1370 = vrot.lane.b32.xlu0 %v607, 64
        %v1371 = vpop.permute.xlu0 %1370
        %1372 = vrot.lane.b32.xlu0 %v676, 64
        %v1373 = vpop.permute.xlu0 %1372
        %1374 = vrot.lane.b32.xlu0 %v610, 64
        %v1375 = vpop.permute.xlu0 %1374
        %1376 = vrot.lane.b32.xlu0 %v660, 64
        %v1377 = vpop.permute.xlu0 %1376
        %1378 = vrot.lane.b32.xlu0 %v562, 64
        %v1379 = vpop.permute.xlu0 %1378
        %1412 = vrot.lane.b32.xlu0 %v739, 96
        %v1413 = vpop.permute.xlu0 %1412
        %1414 = vrot.lane.b32.xlu0 %v741, 96
        %v1415 = vpop.permute.xlu0 %1414
        %1416 = vrot.lane.b32.xlu0 %v744, 96
        %v1417 = vpop.permute.xlu0 %1416
        %1418 = vrot.lane.b32.xlu0 %v746, 96
        %v1419 = vpop.permute.xlu0 %1418
        %1420 = vrot.lane.b32.xlu0 %v749, 96
        %v1421 = vpop.permute.xlu0 %1420
        %1422 = vrot.lane.b32.xlu0 %v751, 96
        %v1423 = vpop.permute.xlu0 %1422
        %1424 = vrot.lane.b32.xlu0 %v754, 96
        %v1425 = vpop.permute.xlu0 %1424
        %1426 = vrot.lane.b32.xlu0 %v756, 96
        %v1427 = vpop.permute.xlu0 %1426
        %1428 = vrot.lane.b32.xlu0 %v759, 96
        %v1429 = vpop.permute.xlu0 %1428
        %1430 = vrot.lane.b32.xlu0 %v761, 96
        %v1431 = vpop.permute.xlu0 %1430
        %1432 = vrot.lane.b32.xlu0 %v764, 96
        %v1433 = vpop.permute.xlu0 %1432
        %1434 = vrot.lane.b32.xlu0 %v766, 96
        %v1435 = vpop.permute.xlu0 %1434
        %1436 = vrot.lane.b32.xlu0 %v769, 96
        %v1437 = vpop.permute.xlu0 %1436
        %1438 = vrot.lane.b32.xlu0 %v771, 96
        %v1439 = vpop.permute.xlu0 %1438
        %1440 = vrot.lane.b32.xlu0 %v774, 96
        %v1441 = vpop.permute.xlu0 %1440
        %1442 = vrot.lane.b32.xlu0 %v776, 96
        %v1443 = vpop.permute.xlu0 %1442
        %1444 = vrot.lane.b32.xlu0 %v779, 96
        %v1445 = vpop.permute.xlu0 %1444
        %1446 = vrot.lane.b32.xlu0 %v781, 96
        %v1447 = vpop.permute.xlu0 %1446
        %1448 = vrot.lane.b32.xlu0 %v784, 96
        %v1449 = vpop.permute.xlu0 %1448
        %1450 = vrot.lane.b32.xlu0 %v786, 96
        %v1451 = vpop.permute.xlu0 %1450
        %1452 = vrot.lane.b32.xlu0 %v789, 96
        %v1453 = vpop.permute.xlu0 %1452
        %1454 = vrot.lane.b32.xlu0 %v791, 96
        %v1455 = vpop.permute.xlu0 %1454
        %1456 = vrot.lane.b32.xlu0 %v794, 96
        %v1457 = vpop.permute.xlu0 %1456
        %1458 = vrot.lane.b32.xlu0 %v796, 96
        %v1459 = vpop.permute.xlu0 %1458
        %1460 = vrot.lane.b32.xlu0 %v799, 96
        %v1461 = vpop.permute.xlu0 %1460
        %1462 = vrot.lane.b32.xlu0 %v801, 96
        %v1463 = vpop.permute.xlu0 %1462
        %1464 = vrot.lane.b32.xlu0 %v804, 96
        %v1465 = vpop.permute.xlu0 %1464
        %1466 = vrot.lane.b32.xlu0 %v806, 96
        %v1467 = vpop.permute.xlu0 %1466
        %1468 = vrot.lane.b32.xlu0 %v1180, 96
        %v1469 = vpop.permute.xlu0 %1468
        %1470 = vrot.lane.b32.xlu0 %v1182, 96
        %v1471 = vpop.permute.xlu0 %1470
        %1472 = vrot.lane.b32.xlu0 %v729, 96
        %v1473 = vpop.permute.xlu0 %1472
        %1474 = vrot.lane.b32.xlu0 %v731, 96
        %v1475 = vpop.permute.xlu0 %1474
        %v1508 = vsel %vm255, %v660, %v808
        %v1509 = vsel %vm255, %v562, %v810
        %v1510 = vsel %vm255, %v661, %v812
        %v1511 = vsel %vm255, %v565, %v814
        %v1512 = vsel %vm255, %v662, %v816
        %v1513 = vsel %vm255, %v568, %v818
        %v1514 = vsel %vm255, %v663, %v820
        %v1515 = vsel %vm255, %v571, %v822
        %v1516 = vsel %vm255, %v664, %v824
        %v1517 = vsel %vm255, %v574, %v826
        %v1518 = vsel %vm255, %v665, %v828
        %v1519 = vsel %vm255, %v577, %v830
        %v1520 = vsel %vm255, %v666, %v832
        %v1521 = vsel %vm255, %v580, %v834
        %v1522 = vsel %vm255, %v667, %v836
        %v1523 = vsel %vm255, %v583, %v838
        %v1524 = vsel %vm255, %v668, %v840
        %v1525 = vsel %vm255, %v586, %v842
        %v1526 = vsel %vm255, %v669, %v844
        %v1527 = vsel %vm255, %v589, %v846
        %v1528 = vsel %vm255, %v670, %v848
        %v1529 = vsel %vm255, %v592, %v850
        %v1530 = vsel %vm255, %v671, %v852
        %v1531 = vsel %vm255, %v595, %v854
        %v1532 = vsel %vm255, %v672, %v856
        %v1533 = vsel %vm255, %v598, %v858
        %v1534 = vsel %vm255, %v673, %v860
        %v1535 = vsel %vm255, %v601, %v862
        %v1536 = vsel %vm255, %v674, %v864
        %v1537 = vsel %vm255, %v604, %v866
        %v1538 = vsel %vm255, %v675, %v868
        %v1539 = vsel %vm255, %v607, %v870
        %vm1540 = vcmask 523264
        %v1541 = vsel %vm1540, %v1508, %v985
        %v1542 = vsel %vm1540, %v1509, %v987
        %v1543 = vsel %vm1540, %v1510, %v989
        %v1544 = vsel %vm1540, %v1511, %v991
        %v1545 = vsel %vm1540, %v1512, %v993
        %v1546 = vsel %vm1540, %v1513, %v995
        %v1547 = vsel %vm1540, %v1514, %v997
        %v1548 = vsel %vm1540, %v1515, %v999
        %v1549 = vsel %vm1540, %v1516, %v1001
        %v1550 = vsel %vm1540, %v1517, %v1003
        %v1551 = vsel %vm1540, %v1518, %v1005
        %v1552 = vsel %vm1540, %v1519, %v1007
        %v1553 = vsel %vm1540, %v1520, %v1009
        %v1554 = vsel %vm1540, %v1521, %v1011
        %v1555 = vsel %vm1540, %v1522, %v1013
        %v1556 = vsel %vm1540, %v1523, %v1015
        %v1557 = vsel %vm1540, %v1524, %v1017
        %v1558 = vsel %vm1540, %v1525, %v1019
        %v1559 = vsel %vm1540, %v1526, %v1021
        %v1560 = vsel %vm1540, %v1527, %v1023
        %v1561 = vsel %vm1540, %v1528, %v1025
        %v1562 = vsel %vm1540, %v1529, %v1027
        %v1563 = vsel %vm1540, %v1530, %v1029
        %v1564 = vsel %vm1540, %v1531, %v1031
        %v1565 = vsel %vm1540, %v1532, %v1033
        %v1566 = vsel %vm1540, %v1533, %v1035
        %v1567 = vsel %vm1540, %v1534, %v1037
        %v1568 = vsel %vm1540, %v1535, %v1039
        %v1569 = vsel %vm1540, %v1536, %v1041
        %v1570 = vsel %vm1540, %v1537, %v1043
        %v1571 = vsel %vm1540, %v1538, %v1045
        %v1572 = vsel %vm1540, %v1539, %v1047
        %vm1573 = vcmask 785408
        %v1574 = vsel %vm1573, %v1541, %v1082
        %v1575 = vsel %vm1573, %v1542, %v1084
        %v1576 = vsel %vm1573, %v1543, %v1086
        %v1577 = vsel %vm1573, %v1544, %v1088
        %v1578 = vsel %vm1573, %v1545, %v1090
        %v1579 = vsel %vm1573, %v1546, %v1092
        %v1580 = vsel %vm1573, %v1547, %v1094
        %v1581 = vsel %vm1573, %v1548, %v1096
        %v1582 = vsel %vm1573, %v1549, %v1098
        %v1583 = vsel %vm1573, %v1550, %v1100
        %v1584 = vsel %vm1573, %v1551, %v1102
        %v1585 = vsel %vm1573, %v1552, %v1104
        %v1586 = vsel %vm1573, %v1553, %v1106
        %v1587 = vsel %vm1573, %v1554, %v1108
        %v1588 = vsel %vm1573, %v1555, %v1110
        %v1589 = vsel %vm1573, %v1556, %v1112
        %v1590 = vsel %vm1573, %v1557, %v1114
        %v1591 = vsel %vm1573, %v1558, %v1116
        %v1592 = vsel %vm1573, %v1559, %v1118
        %v1593 = vsel %vm1573, %v1560, %v1120
        %v1594 = vsel %vm1573, %v1561, %v1122
        %v1595 = vsel %vm1573, %v1562, %v1124
        %v1596 = vsel %vm1573, %v1563, %v1126
        %v1597 = vsel %vm1573, %v1564, %v1128
        %v1598 = vsel %vm1573, %v1565, %v1130
        %v1599 = vsel %vm1573, %v1566, %v1132
        %v1600 = vsel %vm1573, %v1567, %v1134
        %v1601 = vsel %vm1573, %v1568, %v1136
        %v1602 = vsel %vm1573, %v1569, %v1138
        %v1603 = vsel %vm1573, %v1570, %v1140
        %v1604 = vsel %vm1573, %v1571, %v1142
        %v1605 = vsel %vm1573, %v1572, %v1144
        %v1606 = vsel %vm255, %v734, %v1221
        %v1607 = vsel %vm255, %v736, %v1223
        %v1608 = vsel %vm255, %v739, %v1225
        %v1609 = vsel %vm255, %v741, %v1227
        %v1610 = vsel %vm255, %v744, %v1229
        %v1611 = vsel %vm255, %v746, %v1231
        %v1612 = vsel %vm255, %v749, %v1233
        %v1613 = vsel %vm255, %v751, %v1235
        %v1614 = vsel %vm255, %v754, %v1237
        %v1615 = vsel %vm255, %v756, %v1239
        %v1616 = vsel %vm255, %v759, %v1241
        %v1617 = vsel %vm255, %v761, %v1243
        %v1618 = vsel %vm255, %v764, %v1245
        %v1619 = vsel %vm255, %v766, %v1247
        %v1620 = vsel %vm255, %v769, %v1249
        %v1621 = vsel %vm255, %v771, %v1251
        %v1622 = vsel %vm255, %v774, %v1253
        %v1623 = vsel %vm255, %v776, %v1255
        %v1624 = vsel %vm255, %v779, %v1257
        %v1625 = vsel %vm255, %v781, %v1259
        %v1626 = vsel %vm255, %v784, %v1261
        %v1627 = vsel %vm255, %v786, %v1263
        %v1628 = vsel %vm255, %v789, %v1265
        %v1629 = vsel %vm255, %v791, %v1267
        %v1630 = vsel %vm255, %v794, %v1269
        %v1631 = vsel %vm255, %v796, %v1271
        %v1632 = vsel %vm255, %v799, %v1273
        %v1633 = vsel %vm255, %v801, %v1275
        %v1634 = vsel %vm255, %v804, %v1277
        %v1635 = vsel %vm255, %v806, %v1279
        %v1636 = vsel %vm255, %v1180, %v1281
        %v1637 = vsel %vm255, %v1182, %v1283
        %v1638 = vsel %vm1540, %v1606, %v1317
        %v1639 = vsel %vm1540, %v1607, %v1319
        %v1640 = vsel %vm1540, %v1608, %v1321
        %v1641 = vsel %vm1540, %v1609, %v1323
        %v1642 = vsel %vm1540, %v1610, %v1325
        %v1643 = vsel %vm1540, %v1611, %v1327
        %v1644 = vsel %vm1540, %v1612, %v1329
        %v1645 = vsel %vm1540, %v1613, %v1331
        %v1646 = vsel %vm1540, %v1614, %v1333
        %v1647 = vsel %vm1540, %v1615, %v1335
        %v1648 = vsel %vm1540, %v1616, %v1337
        %v1649 = vsel %vm1540, %v1617, %v1339
        %v1650 = vsel %vm1540, %v1618, %v1341
        %v1651 = vsel %vm1540, %v1619, %v1343
        %v1652 = vsel %vm1540, %v1620, %v1345
        %v1653 = vsel %vm1540, %v1621, %v1347
        %v1654 = vsel %vm1540, %v1622, %v1349
        %v1655 = vsel %vm1540, %v1623, %v1351
        %v1656 = vsel %vm1540, %v1624, %v1353
        %v1657 = vsel %vm1540, %v1625, %v1355
        %v1658 = vsel %vm1540, %v1626, %v1357
        %v1659 = vsel %vm1540, %v1627, %v1359
        %v1660 = vsel %vm1540, %v1628, %v1361
        %v1661 = vsel %vm1540, %v1629, %v1363
        %v1662 = vsel %vm1540, %v1630, %v1365
        %v1663 = vsel %vm1540, %v1631, %v1367
        %v1664 = vsel %vm1540, %v1632, %v1369
        %v1665 = vsel %vm1540, %v1633, %v1371
        %v1666 = vsel %vm1540, %v1634, %v1373
        %v1667 = vsel %vm1540, %v1635, %v1375
        %v1668 = vsel %vm1540, %v1636, %v1377
        %v1669 = vsel %vm1540, %v1637, %v1379
        %v1670 = vsel %vm1573, %v1638, %v1413
        %v1671 = vsel %vm1573, %v1639, %v1415
        %v1672 = vsel %vm1573, %v1640, %v1417
        %v1673 = vsel %vm1573, %v1641, %v1419
        %v1674 = vsel %vm1573, %v1642, %v1421
        %v1675 = vsel %vm1573, %v1643, %v1423
        %v1676 = vsel %vm1573, %v1644, %v1425
        %v1677 = vsel %vm1573, %v1645, %v1427
        %v1678 = vsel %vm1573, %v1646, %v1429
        %v1679 = vsel %vm1573, %v1647, %v1431
        %v1680 = vsel %vm1573, %v1648, %v1433
        %v1681 = vsel %vm1573, %v1649, %v1435
        %v1682 = vsel %vm1573, %v1650, %v1437
        %v1683 = vsel %vm1573, %v1651, %v1439
        %v1684 = vsel %vm1573, %v1652, %v1441
        %v1685 = vsel %vm1573, %v1653, %v1443
        %v1686 = vsel %vm1573, %v1654, %v1445
        %v1687 = vsel %vm1573, %v1655, %v1447
        %v1688 = vsel %vm1573, %v1656, %v1449
        %v1689 = vsel %vm1573, %v1657, %v1451
        %v1690 = vsel %vm1573, %v1658, %v1453
        %v1691 = vsel %vm1573, %v1659, %v1455
        %v1692 = vsel %vm1573, %v1660, %v1457
        %v1693 = vsel %vm1573, %v1661, %v1459
        %v1694 = vsel %vm1573, %v1662, %v1461
        %v1695 = vsel %vm1573, %v1663, %v1463
        %v1696 = vsel %vm1573, %v1664, %v1465
        %v1697 = vsel %vm1573, %v1665, %v1467
        %v1698 = vsel %vm1573, %v1666, %v1469
        %v1699 = vsel %vm1573, %v1667, %v1471
        %v1700 = vsel %vm1573, %v1668, %v1473
        %v1701 = vsel %vm1573, %v1669, %v1475
        %v1702 = vld [vmem:[%s1] sm:$0xff]
        %v1703 = vld [vmem:[%s1 + $0x8] sm:$0xff]
        %v1704 = vld [vmem:[%s1 + $0x10] sm:$0xff]
        %v1705 = vld [vmem:[%s1 + $0x18] sm:$0xff]
        %v1706 = vld [vmem:[%s1 + $0x20] sm:$0xff]
        %v1707 = vld [vmem:[%s1 + $0x28] sm:$0xff]
        %v1708 = vld [vmem:[%s1 + $0x30] sm:$0xff]
        %v1709 = vld [vmem:[%s1 + $0x38] sm:$0xff]
        %v1710 = vld [vmem:[%s1 + $0x40] sm:$0xff]
        %v1711 = vld [vmem:[%s1 + $0x48] sm:$0xff]
        %v1712 = vld [vmem:[%s1 + $0x50] sm:$0xff]
        %v1713 = vld [vmem:[%s1 + $0x58] sm:$0xff]
        %v1714 = vld [vmem:[%s1 + $0x60] sm:$0xff]
        %v1715 = vld [vmem:[%s1 + $0x68] sm:$0xff]
        %v1716 = vld [vmem:[%s1 + $0x70] sm:$0xff]
        %v1717 = vld [vmem:[%s1 + $0x78] sm:$0xff]
        %v1718 = vld [vmem:[%s1 + $0x80] sm:$0xff]
        %v1719 = vld [vmem:[%s1 + $0x88] sm:$0xff]
        %v1720 = vld [vmem:[%s1 + $0x90] sm:$0xff]
        %v1721 = vld [vmem:[%s1 + $0x98] sm:$0xff]
        %v1722 = vld [vmem:[%s1 + $0xa0] sm:$0xff]
        %v1723 = vld [vmem:[%s1 + $0xa8] sm:$0xff]
        %v1724 = vld [vmem:[%s1 + $0xb0] sm:$0xff]
        %v1725 = vld [vmem:[%s1 + $0xb8] sm:$0xff]
        %v1726 = vld [vmem:[%s1 + $0xc0] sm:$0xff]
        %v1727 = vld [vmem:[%s1 + $0xc8] sm:$0xff]
        %v1728 = vld [vmem:[%s1 + $0xd0] sm:$0xff]
        %v1729 = vld [vmem:[%s1 + $0xd8] sm:$0xff]
        %v1730 = vld [vmem:[%s1 + $0xe0] sm:$0xff]
        %v1731 = vld [vmem:[%s1 + $0xe8] sm:$0xff]
        %v1732 = vld [vmem:[%s1 + $0xf0] sm:$0xff]
        %v1733 = vld [vmem:[%s1 + $0xf8] sm:$0xff]
        %v1734 = vld [vmem:[%s1 + $0x100] sm:$0xff]
        %v1735 = vld [vmem:[%s1 + $0x108] sm:$0xff]
        %v1736 = vld [vmem:[%s1 + $0x110] sm:$0xff]
        %v1737 = vld [vmem:[%s1 + $0x118] sm:$0xff]
        %v1738 = vld [vmem:[%s2] sm:$0x1]
        %v1740 = vlaneseq
        %v1741 = vshrl.u32 %v1740, 7
        %v1742 = vsub.s32 0, %v1741
        %v1743 = vrot.slane %v1738, %v1742
        %v1745 = vsel %vm255, %v916, 0
        %v1747 = vsel %vm255, %v918, 0
        %v1749 = vsel %vm255, %v921, 0
        %v1751 = vsel %vm255, %v923, 0
        %v1753 = vsel %vm255, %v926, 0
        %v1755 = vsel %vm255, %v928, 0
        %v1757 = vsel %vm255, %v931, 0
        %v1759 = vsel %vm255, %v933, 0
        %v1761 = vsel %vm255, %v936, 0
        %v1763 = vsel %vm255, %v938, 0
        %v1765 = vsel %vm255, %v941, 0
        %v1767 = vsel %vm255, %v943, 0
        %v1769 = vsel %vm255, %v946, 0
        %v1771 = vsel %vm255, %v948, 0
        %v1773 = vsel %vm255, %v951, 0
        %v1775 = vsel %vm255, %v953, 0
        %v1777 = vsel %vm255, %v956, 0
        %v1779 = vsel %vm255, %v958, 0
        %v1781 = vsel %vm255, %v961, 0
        %v1783 = vsel %vm255, %v963, 0
        %v1785 = vsel %vm255, %v966, 0
        %v1787 = vsel %vm255, %v968, 0
        %v1789 = vsel %vm255, %v971, 0
        %v1791 = vsel %vm255, %v973, 0
        %v1793 = vsel %vm255, %v976, 0
        %v1795 = vsel %vm255, %v978, 0
        %v1797 = vsel %vm255, %v981, 0
        %v1799 = vsel %vm255, %v983, 0
        %v1801 = vsel %vm255, %v1217, 0
        %v1803 = vsel %vm255, %v1219, 0
        %v1805 = vsel %vm255, %v906, 0
        %v1807 = vsel %vm255, %v908, 0
        %1809 = vmatprep.subr.mxu0 0.0
        %1810 = vmatpush1.msra.mxu0 %v1717
        %1811 = vmatprep.subr.mxu0 0.0
        %1812 = vmatpush1.msra.mxu0 %v1716
        %1813 = vmatprep.subr.mxu0 0.0
        %1814 = vmatpush1.msra.mxu0 %v1715
        %1815 = vmatprep.subr.mxu0 0.0
        %1816 = vmatpush1.msra.mxu0 %v1714
        %1817 = vmatprep.subr.mxu0 0.0
        %1818 = vmatpush1.msra.mxu0 %v1713
        %1819 = vmatprep.subr.mxu0 0.0
        %1820 = vmatpush1.msra.mxu0 %v1712
        %1821 = vmatprep.subr.mxu0 0.0
        %1822 = vmatpush1.msra.mxu0 %v1711
        %1823 = vmatprep.subr.mxu0 0.0
        %1824 = vmatpush1.msra.mxu0 %v1710
        %1825 = vmatprep.subr.mxu0 0.0
        %1826 = vmatpush1.msra.mxu0 %v1709
        %1827 = vmatprep.subr.mxu0 0.0
        %1828 = vmatpush1.msra.mxu0 %v1708
        %1829 = vmatprep.subr.mxu0 0.0
        %1830 = vmatpush1.msra.mxu0 %v1707
        %1831 = vmatprep.subr.mxu0 0.0
        %1832 = vmatpush1.msra.mxu0 %v1706
        %1833 = vmatprep.subr.mxu0 0.0
        %1834 = vmatpush1.msra.mxu0 %v1705
        %1835 = vmatprep.subr.mxu0 0.0
        %1836 = vmatpush1.msra.mxu0 %v1704
        %1837 = vmatprep.subr.mxu0 0.0
        %1838 = vmatpush1.msra.mxu0 %v1703
        %1839 = vmatprep.subr.mxu0 0.0
        %1840 = vmatpush1.msra.mxu0 %v1702
        %1841 = vmatprep.subr.mxu0 0.0
        %1842 = vmatpush2.msra.mxu0 %v1733
        %1843 = vmatprep.subr.mxu0 0.0
        %1844 = vmatpush2.msra.mxu0 %v1732
        %1845 = vmatprep.subr.mxu0 0.0
        %1846 = vmatpush2.msra.mxu0 %v1731
        %1847 = vmatprep.subr.mxu0 0.0
        %1848 = vmatpush2.msra.mxu0 %v1730
        %1849 = vmatprep.subr.mxu0 0.0
        %1850 = vmatpush2.msra.mxu0 %v1729
        %1851 = vmatprep.subr.mxu0 0.0
        %1852 = vmatpush2.msra.mxu0 %v1728
        %1853 = vmatprep.subr.mxu0 0.0
        %1854 = vmatpush2.msra.mxu0 %v1727
        %1855 = vmatprep.subr.mxu0 0.0
        %1856 = vmatpush2.msra.mxu0 %v1726
        %1857 = vmatprep.subr.mxu0 0.0
        %1858 = vmatpush2.msra.mxu0 %v1725
        %1859 = vmatprep.subr.mxu0 0.0
        %1860 = vmatpush2.msra.mxu0 %v1724
        %1861 = vmatprep.subr.mxu0 0.0
        %1862 = vmatpush2.msra.mxu0 %v1723
        %1863 = vmatprep.subr.mxu0 0.0
        %1864 = vmatpush2.msra.mxu0 %v1722
        %1865 = vmatprep.subr.mxu0 0.0
        %1866 = vmatpush2.msra.mxu0 %v1721
        %1867 = vmatprep.subr.mxu0 0.0
        %1868 = vmatpush2.msra.mxu0 %v1720
        %1869 = vmatprep.subr.mxu0 0.0
        %1870 = vmatpush2.msra.mxu0 %v1719
        %1871 = vmatprep.subr.mxu0 0.0
        %1872 = vmatpush2.msra.mxu0 %v1718
        %1873 = vmatprep.mubr.f32.mxu0 %v1670
        %1874 = vmatmul.mubr.f32.gmra.mxu0 %v1574
        %v1875 = vpop.f32.mrf.mxu0
        %v1876 = vadd.f32 %v1743, %v1875
        %v1877 = vpop.f32.mrf.mxu0
        %1878 = vmatprep.mubr.f32.mxu0 %v1671
        %1879 = vmatmul.mubr.f32.gmra.mxu0 %v1575
        %v1880 = vpop.f32.mrf.mxu0
        %v1881 = vadd.f32 %v1743, %v1880
        %v1882 = vpop.f32.mrf.mxu0
        %1883 = vmatprep.mubr.f32.mxu0 %v1672
        %1884 = vmatmul.mubr.f32.gmra.mxu0 %v1576
        %v1885 = vpop.f32.mrf.mxu0
        %v1886 = vadd.f32 %v1743, %v1885
        %v1887 = vpop.f32.mrf.mxu0
        %1888 = vmatprep.mubr.f32.mxu0 %v1673
        %1889 = vmatmul.mubr.f32.gmra.mxu0 %v1577
        %v1890 = vpop.f32.mrf.mxu0
        %v1891 = vadd.f32 %v1743, %v1890
        %v1892 = vpop.f32.mrf.mxu0
        %1893 = vmatprep.mubr.f32.mxu0 %v1674
        %1894 = vmatmul.mubr.f32.gmra.mxu0 %v1578
        %v1895 = vpop.f32.mrf.mxu0
        %v1896 = vadd.f32 %v1743, %v1895
        %v1897 = vpop.f32.mrf.mxu0
        %1898 = vmatprep.mubr.f32.mxu0 %v1675
        %1899 = vmatmul.mubr.f32.gmra.mxu0 %v1579
        %v1900 = vpop.f32.mrf.mxu0
        %v1901 = vadd.f32 %v1743, %v1900
        %v1902 = vpop.f32.mrf.mxu0
        %1903 = vmatprep.mubr.f32.mxu0 %v1676
        %1904 = vmatmul.mubr.f32.gmra.mxu0 %v1580
        %v1905 = vpop.f32.mrf.mxu0
        %v1906 = vadd.f32 %v1743, %v1905
        %v1907 = vpop.f32.mrf.mxu0
        %1908 = vmatprep.mubr.f32.mxu0 %v1677
        %1909 = vmatmul.mubr.f32.gmra.mxu0 %v1581
        %v1910 = vpop.f32.mrf.mxu0
        %v1911 = vadd.f32 %v1743, %v1910
        %v1912 = vpop.f32.mrf.mxu0
        %1913 = vmatprep.mubr.f32.mxu0 %v1678
        %1914 = vmatmul.mubr.f32.gmra.mxu0 %v1582
        %v1915 = vpop.f32.mrf.mxu0
        %v1916 = vadd.f32 %v1743, %v1915
        %v1917 = vpop.f32.mrf.mxu0
        %1918 = vmatprep.mubr.f32.mxu0 %v1679
        %1919 = vmatmul.mubr.f32.gmra.mxu0 %v1583
        %v1920 = vpop.f32.mrf.mxu0
        %v1921 = vadd.f32 %v1743, %v1920
        %v1922 = vpop.f32.mrf.mxu0
        %1923 = vmatprep.mubr.f32.mxu0 %v1680
        %1924 = vmatmul.mubr.f32.gmra.mxu0 %v1584
        %v1925 = vpop.f32.mrf.mxu0
        %v1926 = vadd.f32 %v1743, %v1925
        %v1927 = vpop.f32.mrf.mxu0
        %1928 = vmatprep.mubr.f32.mxu0 %v1681
        %1929 = vmatmul.mubr.f32.gmra.mxu0 %v1585
        %v1930 = vpop.f32.mrf.mxu0
        %v1931 = vadd.f32 %v1743, %v1930
        %v1932 = vpop.f32.mrf.mxu0
        %1933 = vmatprep.mubr.f32.mxu0 %v1682
        %1934 = vmatmul.mubr.f32.gmra.mxu0 %v1586
        %v1935 = vpop.f32.mrf.mxu0
        %v1936 = vadd.f32 %v1743, %v1935
        %v1937 = vpop.f32.mrf.mxu0
        %1938 = vmatprep.mubr.f32.mxu0 %v1683
        %1939 = vmatmul.mubr.f32.gmra.mxu0 %v1587
        %v1940 = vpop.f32.mrf.mxu0
        %v1941 = vadd.f32 %v1743, %v1940
        %v1942 = vpop.f32.mrf.mxu0
        %1943 = vmatprep.mubr.f32.mxu0 %v1684
        %1944 = vmatmul.mubr.f32.gmra.mxu0 %v1588
        %v1945 = vpop.f32.mrf.mxu0
        %v1946 = vadd.f32 %v1743, %v1945
        %v1947 = vpop.f32.mrf.mxu0
        %1948 = vmatprep.mubr.f32.mxu0 %v1685
        %1949 = vmatmul.mubr.f32.gmra.mxu0 %v1589
        %v1950 = vpop.f32.mrf.mxu0
        %v1951 = vadd.f32 %v1743, %v1950
        %v1952 = vpop.f32.mrf.mxu0
        %1953 = vmatprep.mubr.f32.mxu0 %v1686
        %1954 = vmatmul.mubr.f32.gmra.mxu0 %v1590
        %v1955 = vpop.f32.mrf.mxu0
        %v1956 = vadd.f32 %v1743, %v1955
        %v1957 = vpop.f32.mrf.mxu0
        %1958 = vmatprep.mubr.f32.mxu0 %v1687
        %1959 = vmatmul.mubr.f32.gmra.mxu0 %v1591
        %v1960 = vpop.f32.mrf.mxu0
        %v1961 = vadd.f32 %v1743, %v1960
        %v1962 = vpop.f32.mrf.mxu0
        %1963 = vmatprep.mubr.f32.mxu0 %v1688
        %1964 = vmatmul.mubr.f32.gmra.mxu0 %v1592
        %v1965 = vpop.f32.mrf.mxu0
        %v1966 = vadd.f32 %v1743, %v1965
        %v1967 = vpop.f32.mrf.mxu0
        %1968 = vmatprep.mubr.f32.mxu0 %v1689
        %1969 = vmatmul.mubr.f32.gmra.mxu0 %v1593
        %v1970 = vpop.f32.mrf.mxu0
        %v1971 = vadd.f32 %v1743, %v1970
        %v1972 = vpop.f32.mrf.mxu0
        %1973 = vmatprep.mubr.f32.mxu0 %v1690
        %1974 = vmatmul.mubr.f32.gmra.mxu0 %v1594
        %v1975 = vpop.f32.mrf.mxu0
        %v1976 = vadd.f32 %v1743, %v1975
        %v1977 = vpop.f32.mrf.mxu0
        %1978 = vmatprep.mubr.f32.mxu0 %v1691
        %1979 = vmatmul.mubr.f32.gmra.mxu0 %v1595
        %v1980 = vpop.f32.mrf.mxu0
        %v1981 = vadd.f32 %v1743, %v1980
        %v1982 = vpop.f32.mrf.mxu0
        %1983 = vmatprep.mubr.f32.mxu0 %v1692
        %1984 = vmatmul.mubr.f32.gmra.mxu0 %v1596
        %v1985 = vpop.f32.mrf.mxu0
        %v1986 = vadd.f32 %v1743, %v1985
        %v1987 = vpop.f32.mrf.mxu0
        %1988 = vmatprep.mubr.f32.mxu0 %v1693
        %1989 = vmatmul.mubr.f32.gmra.mxu0 %v1597
        %v1990 = vpop.f32.mrf.mxu0
        %v1991 = vadd.f32 %v1743, %v1990
        %v1992 = vpop.f32.mrf.mxu0
        %1993 = vmatprep.mubr.f32.mxu0 %v1694
        %1994 = vmatmul.mubr.f32.gmra.mxu0 %v1598
        %v1995 = vpop.f32.mrf.mxu0
        %v1996 = vadd.f32 %v1743, %v1995
        %v1997 = vpop.f32.mrf.mxu0
        %1998 = vmatprep.mubr.f32.mxu0 %v1695
        %1999 = vmatmul.mubr.f32.gmra.mxu0 %v1599
        %v2000 = vpop.f32.mrf.mxu0
        %v2001 = vadd.f32 %v1743, %v2000
        %v2002 = vpop.f32.mrf.mxu0
        %2003 = vmatprep.mubr.f32.mxu0 %v1696
        %2004 = vmatmul.mubr.f32.gmra.mxu0 %v1600
        %v2005 = vpop.f32.mrf.mxu0
        %v2006 = vadd.f32 %v1743, %v2005
        %v2007 = vpop.f32.mrf.mxu0
        %2008 = vmatprep.mubr.f32.mxu0 %v1697
        %2009 = vmatmul.mubr.f32.gmra.mxu0 %v1601
        %v2010 = vpop.f32.mrf.mxu0
        %v2011 = vadd.f32 %v1743, %v2010
        %v2012 = vpop.f32.mrf.mxu0
        %2013 = vmatprep.mubr.f32.mxu0 %v1698
        %2014 = vmatmul.mubr.f32.gmra.mxu0 %v1602
        %v2015 = vpop.f32.mrf.mxu0
        %v2016 = vadd.f32 %v1743, %v2015
        %v2017 = vpop.f32.mrf.mxu0
        %2018 = vmatprep.mubr.f32.mxu0 %v1699
        %2019 = vmatmul.mubr.f32.gmra.mxu0 %v1603
        %v2020 = vpop.f32.mrf.mxu0
        %v2021 = vadd.f32 %v1743, %v2020
        %v2022 = vpop.f32.mrf.mxu0
        %2023 = vmatprep.mubr.f32.mxu0 %v1700
        %2024 = vmatmul.mubr.f32.gmra.mxu0 %v1604
        %v2025 = vpop.f32.mrf.mxu0
        %v2026 = vadd.f32 %v1743, %v2025
        %v2027 = vpop.f32.mrf.mxu0
        %2028 = vmatprep.mubr.f32.mxu0 %v1701
        %2029 = vmatmul.mubr.f32.gmra.mxu0 %v1605
        %v2030 = vpop.f32.mrf.mxu0
        %v2031 = vadd.f32 %v1743, %v2030
        %v2032 = vpop.f32.mrf.mxu0
        %2033 = vdwg.mxu0
        %2034 = vmatprep.subr.mxu0 0.0
        %2035 = vmatpush1.msra.mxu0 0.0
        %2036 = vmatprep.subr.mxu0 0.0
        %2037 = vmatpush1.msra.mxu0 0.0
        %2038 = vmatprep.subr.mxu0 0.0
        %2039 = vmatpush1.msra.mxu0 0.0
        %2040 = vmatprep.subr.mxu0 0.0
        %2041 = vmatpush1.msra.mxu0 0.0
        %2042 = vmatprep.subr.mxu0 0.0
        %2043 = vmatpush1.msra.mxu0 0.0
        %2044 = vmatprep.subr.mxu0 0.0
        %2045 = vmatpush1.msra.mxu0 0.0
        %2046 = vmatprep.subr.mxu0 0.0
        %2047 = vmatpush1.msra.mxu0 0.0
        %2048 = vmatprep.subr.mxu0 0.0
        %2049 = vmatpush1.msra.mxu0 0.0
        %2050 = vmatprep.subr.mxu0 0.0
        %2051 = vmatpush1.msra.mxu0 0.0
        %2052 = vmatprep.subr.mxu0 0.0
        %2053 = vmatpush1.msra.mxu0 0.0
        %2054 = vmatprep.subr.mxu0 0.0
        %2055 = vmatpush1.msra.mxu0 0.0
        %2056 = vmatprep.subr.mxu0 0.0
        %2057 = vmatpush1.msra.mxu0 0.0
        %2058 = vmatprep.subr.mxu0 0.0
        %2059 = vmatpush1.msra.mxu0 %v1737
        %2060 = vmatprep.subr.mxu0 0.0
        %2061 = vmatpush1.msra.mxu0 %v1736
        %2062 = vmatprep.subr.mxu0 0.0
        %2063 = vmatpush1.msra.mxu0 %v1735
        %2064 = vmatprep.subr.mxu0 0.0
        %2065 = vmatpush1.msra.mxu0 %v1734
        %2066 = vmatprep.subr.mxu0 0.0
        %2067 = vmatpush2.msra.mxu0 0.0
        %2068 = vmatprep.subr.mxu0 0.0
        %2069 = vmatpush2.msra.mxu0 0.0
        %2070 = vmatprep.subr.mxu0 0.0
        %2071 = vmatpush2.msra.mxu0 0.0
        %2072 = vmatprep.subr.mxu0 0.0
        %2073 = vmatpush2.msra.mxu0 0.0
        %2074 = vmatprep.subr.mxu0 0.0
        %2075 = vmatpush2.msra.mxu0 0.0
        %2076 = vmatprep.subr.mxu0 0.0
        %2077 = vmatpush2.msra.mxu0 0.0
        %2078 = vmatprep.subr.mxu0 0.0
        %2079 = vmatpush2.msra.mxu0 0.0
        %2080 = vmatprep.subr.mxu0 0.0
        %2081 = vmatpush2.msra.mxu0 0.0
        %2082 = vmatprep.subr.mxu0 0.0
        %2083 = vmatpush2.msra.mxu0 0.0
        %2084 = vmatprep.subr.mxu0 0.0
        %2085 = vmatpush2.msra.mxu0 0.0
        %2086 = vmatprep.subr.mxu0 0.0
        %2087 = vmatpush2.msra.mxu0 0.0
        %2088 = vmatprep.subr.mxu0 0.0
        %2089 = vmatpush2.msra.mxu0 0.0
        %2090 = vmatprep.subr.mxu0 0.0
        %2091 = vmatpush2.msra.mxu0 0.0
        %2092 = vmatprep.subr.mxu0 0.0
        %2093 = vmatpush2.msra.mxu0 0.0
        %2094 = vmatprep.subr.mxu0 0.0
        %2095 = vmatpush2.msra.mxu0 0.0
        %2096 = vmatprep.subr.mxu0 0.0
        %2097 = vmatpush2.msra.mxu0 0.0
        %2098 = vmatprep.mubr.f32.mxu0 0.0
        %2099 = vmatmul.mubr.f32.gmra.mxu0 %v1745
        %v2100 = vpop.f32.mrf.mxu0
        %v2101 = vadd.f32 %v1876, %v2100
        %v2102 = vpop.f32.mrf.mxu0
        %2103 = vmatprep.mubr.f32.mxu0 0.0
        %2104 = vmatmul.mubr.f32.gmra.mxu0 %v1747
        %v2105 = vpop.f32.mrf.mxu0
        %v2106 = vadd.f32 %v1881, %v2105
        %v2107 = vpop.f32.mrf.mxu0
        %2108 = vmatprep.mubr.f32.mxu0 0.0
        %2109 = vmatmul.mubr.f32.gmra.mxu0 %v1749
        %v2110 = vpop.f32.mrf.mxu0
        %v2111 = vadd.f32 %v1886, %v2110
        %v2112 = vpop.f32.mrf.mxu0
        %2113 = vmatprep.mubr.f32.mxu0 0.0
        %2114 = vmatmul.mubr.f32.gmra.mxu0 %v1751
        %v2115 = vpop.f32.mrf.mxu0
        %v2116 = vadd.f32 %v1891, %v2115
        %v2117 = vpop.f32.mrf.mxu0
        %2118 = vmatprep.mubr.f32.mxu0 0.0
        %2119 = vmatmul.mubr.f32.gmra.mxu0 %v1753
        %v2120 = vpop.f32.mrf.mxu0
        %v2121 = vadd.f32 %v1896, %v2120
        %v2122 = vpop.f32.mrf.mxu0
        %2123 = vmatprep.mubr.f32.mxu0 0.0
        %2124 = vmatmul.mubr.f32.gmra.mxu0 %v1755
        %v2125 = vpop.f32.mrf.mxu0
        %v2126 = vadd.f32 %v1901, %v2125
        %v2127 = vpop.f32.mrf.mxu0
        %2128 = vmatprep.mubr.f32.mxu0 0.0
        %2129 = vmatmul.mubr.f32.gmra.mxu0 %v1757
        %v2130 = vpop.f32.mrf.mxu0
        %v2131 = vadd.f32 %v1906, %v2130
        %v2132 = vpop.f32.mrf.mxu0
        %2133 = vmatprep.mubr.f32.mxu0 0.0
        %2134 = vmatmul.mubr.f32.gmra.mxu0 %v1759
        %v2135 = vpop.f32.mrf.mxu0
        %v2136 = vadd.f32 %v1911, %v2135
        %v2137 = vpop.f32.mrf.mxu0
        %2138 = vmatprep.mubr.f32.mxu0 0.0
        %2139 = vmatmul.mubr.f32.gmra.mxu0 %v1761
        %v2140 = vpop.f32.mrf.mxu0
        %v2141 = vadd.f32 %v1916, %v2140
        %v2142 = vpop.f32.mrf.mxu0
        %2143 = vmatprep.mubr.f32.mxu0 0.0
        %2144 = vmatmul.mubr.f32.gmra.mxu0 %v1763
        %v2145 = vpop.f32.mrf.mxu0
        %v2146 = vadd.f32 %v1921, %v2145
        %v2147 = vpop.f32.mrf.mxu0
        %2148 = vmatprep.mubr.f32.mxu0 0.0
        %2149 = vmatmul.mubr.f32.gmra.mxu0 %v1765
        %v2150 = vpop.f32.mrf.mxu0
        %v2151 = vadd.f32 %v1926, %v2150
        %v2152 = vpop.f32.mrf.mxu0
        %2153 = vmatprep.mubr.f32.mxu0 0.0
        %2154 = vmatmul.mubr.f32.gmra.mxu0 %v1767
        %v2155 = vpop.f32.mrf.mxu0
        %v2156 = vadd.f32 %v1931, %v2155
        %v2157 = vpop.f32.mrf.mxu0
        %2158 = vmatprep.mubr.f32.mxu0 0.0
        %2159 = vmatmul.mubr.f32.gmra.mxu0 %v1769
        %v2160 = vpop.f32.mrf.mxu0
        %v2161 = vadd.f32 %v1936, %v2160
        %v2162 = vpop.f32.mrf.mxu0
        %2163 = vmatprep.mubr.f32.mxu0 0.0
        %2164 = vmatmul.mubr.f32.gmra.mxu0 %v1771
        %v2165 = vpop.f32.mrf.mxu0
        %v2166 = vadd.f32 %v1941, %v2165
        %v2167 = vpop.f32.mrf.mxu0
        %2168 = vmatprep.mubr.f32.mxu0 0.0
        %2169 = vmatmul.mubr.f32.gmra.mxu0 %v1773
        %v2170 = vpop.f32.mrf.mxu0
        %v2171 = vadd.f32 %v1946, %v2170
        %v2172 = vpop.f32.mrf.mxu0
        %2173 = vmatprep.mubr.f32.mxu0 0.0
        %2174 = vmatmul.mubr.f32.gmra.mxu0 %v1775
        %v2175 = vpop.f32.mrf.mxu0
        %v2176 = vadd.f32 %v1951, %v2175
        %v2177 = vpop.f32.mrf.mxu0
        %2178 = vmatprep.mubr.f32.mxu0 0.0
        %2179 = vmatmul.mubr.f32.gmra.mxu0 %v1777
        %v2180 = vpop.f32.mrf.mxu0
        %v2181 = vadd.f32 %v1956, %v2180
        %v2182 = vpop.f32.mrf.mxu0
        %2183 = vmatprep.mubr.f32.mxu0 0.0
        %2184 = vmatmul.mubr.f32.gmra.mxu0 %v1779
        %v2185 = vpop.f32.mrf.mxu0
        %v2186 = vadd.f32 %v1961, %v2185
        %v2187 = vpop.f32.mrf.mxu0
        %2188 = vmatprep.mubr.f32.mxu0 0.0
        %2189 = vmatmul.mubr.f32.gmra.mxu0 %v1781
        %v2190 = vpop.f32.mrf.mxu0
        %v2191 = vadd.f32 %v1966, %v2190
        %v2192 = vpop.f32.mrf.mxu0
        %2193 = vmatprep.mubr.f32.mxu0 0.0
        %2194 = vmatmul.mubr.f32.gmra.mxu0 %v1783
        %v2195 = vpop.f32.mrf.mxu0
        %v2196 = vadd.f32 %v1971, %v2195
        %v2197 = vpop.f32.mrf.mxu0
        %2198 = vmatprep.mubr.f32.mxu0 0.0
        %2199 = vmatmul.mubr.f32.gmra.mxu0 %v1785
        %v2200 = vpop.f32.mrf.mxu0
        %v2201 = vadd.f32 %v1976, %v2200
        %v2202 = vpop.f32.mrf.mxu0
        %2203 = vmatprep.mubr.f32.mxu0 0.0
        %2204 = vmatmul.mubr.f32.gmra.mxu0 %v1787
        %v2205 = vpop.f32.mrf.mxu0
        %v2206 = vadd.f32 %v1981, %v2205
        %v2207 = vpop.f32.mrf.mxu0
        %2208 = vmatprep.mubr.f32.mxu0 0.0
        %2209 = vmatmul.mubr.f32.gmra.mxu0 %v1789
        %v2210 = vpop.f32.mrf.mxu0
        %v2211 = vadd.f32 %v1986, %v2210
        %v2212 = vpop.f32.mrf.mxu0
        %2213 = vmatprep.mubr.f32.mxu0 0.0
        %2214 = vmatmul.mubr.f32.gmra.mxu0 %v1791
        %v2215 = vpop.f32.mrf.mxu0
        %v2216 = vadd.f32 %v1991, %v2215
        %v2217 = vpop.f32.mrf.mxu0
        %2218 = vmatprep.mubr.f32.mxu0 0.0
        %2219 = vmatmul.mubr.f32.gmra.mxu0 %v1793
        %v2220 = vpop.f32.mrf.mxu0
        %v2221 = vadd.f32 %v1996, %v2220
        %v2222 = vpop.f32.mrf.mxu0
        %2223 = vmatprep.mubr.f32.mxu0 0.0
        %2224 = vmatmul.mubr.f32.gmra.mxu0 %v1795
        %v2225 = vpop.f32.mrf.mxu0
        %v2226 = vadd.f32 %v2001, %v2225
        %v2227 = vpop.f32.mrf.mxu0
        %2228 = vmatprep.mubr.f32.mxu0 0.0
        %2229 = vmatmul.mubr.f32.gmra.mxu0 %v1797
        %v2230 = vpop.f32.mrf.mxu0
        %v2231 = vadd.f32 %v2006, %v2230
        %v2232 = vpop.f32.mrf.mxu0
        %2233 = vmatprep.mubr.f32.mxu0 0.0
        %2234 = vmatmul.mubr.f32.gmra.mxu0 %v1799
        %v2235 = vpop.f32.mrf.mxu0
        %v2236 = vadd.f32 %v2011, %v2235
        %v2237 = vpop.f32.mrf.mxu0
        %2238 = vmatprep.mubr.f32.mxu0 0.0
        %2239 = vmatmul.mubr.f32.gmra.mxu0 %v1801
        %v2240 = vpop.f32.mrf.mxu0
        %v2241 = vadd.f32 %v2016, %v2240
        %v2242 = vpop.f32.mrf.mxu0
        %2243 = vmatprep.mubr.f32.mxu0 0.0
        %2244 = vmatmul.mubr.f32.gmra.mxu0 %v1803
        %v2245 = vpop.f32.mrf.mxu0
        %v2246 = vadd.f32 %v2021, %v2245
        %v2247 = vpop.f32.mrf.mxu0
        %2248 = vmatprep.mubr.f32.mxu0 0.0
        %2249 = vmatmul.mubr.f32.gmra.mxu0 %v1805
        %v2250 = vpop.f32.mrf.mxu0
        %v2251 = vadd.f32 %v2026, %v2250
        %v2252 = vpop.f32.mrf.mxu0
        %2253 = vmatprep.mubr.f32.mxu0 0.0
        %2254 = vmatmul.mubr.f32.gmra.mxu0 %v1807
        %v2255 = vpop.f32.mrf.mxu0
        %v2256 = vadd.f32 %v2031, %v2255
        %v2257 = vpop.f32.mrf.mxu0
        %2258 = vdwg.mxu0
        %v2259 = vsel %vm255, %v2101, 0.0
        %v2260 = vsel %vm255, %v2106, 0.0
        %v2261 = vadd.f32 %v2259, %v2260
        %v2262 = vsel %vm255, %v2111, 0.0
        %v2263 = vadd.f32 %v2261, %v2262
        %v2264 = vsel %vm255, %v2116, 0.0
        %v2265 = vadd.f32 %v2263, %v2264
        %v2266 = vsel %vm255, %v2121, 0.0
        %v2267 = vadd.f32 %v2265, %v2266
        %v2268 = vsel %vm255, %v2126, 0.0
        %v2269 = vadd.f32 %v2267, %v2268
        %v2270 = vsel %vm255, %v2131, 0.0
        %v2271 = vadd.f32 %v2269, %v2270
        %v2272 = vsel %vm255, %v2136, 0.0
        %v2273 = vadd.f32 %v2271, %v2272
        %v2274 = vsel %vm255, %v2141, 0.0
        %v2275 = vadd.f32 %v2273, %v2274
        %v2276 = vsel %vm255, %v2146, 0.0
        %v2277 = vadd.f32 %v2275, %v2276
        %v2278 = vsel %vm255, %v2151, 0.0
        %v2279 = vadd.f32 %v2277, %v2278
        %v2280 = vsel %vm255, %v2156, 0.0
        %v2281 = vadd.f32 %v2279, %v2280
        %v2282 = vsel %vm255, %v2161, 0.0
        %v2283 = vadd.f32 %v2281, %v2282
        %v2284 = vsel %vm255, %v2166, 0.0
        %v2285 = vadd.f32 %v2283, %v2284
        %v2286 = vsel %vm255, %v2171, 0.0
        %v2287 = vadd.f32 %v2285, %v2286
        %v2288 = vsel %vm255, %v2176, 0.0
        %v2289 = vadd.f32 %v2287, %v2288
        %v2290 = vsel %vm255, %v2181, 0.0
        %v2291 = vadd.f32 %v2289, %v2290
        %v2292 = vsel %vm255, %v2186, 0.0
        %v2293 = vadd.f32 %v2291, %v2292
        %v2294 = vsel %vm255, %v2191, 0.0
        %v2295 = vadd.f32 %v2293, %v2294
        %v2296 = vsel %vm255, %v2196, 0.0
        %v2297 = vadd.f32 %v2295, %v2296
        %v2298 = vsel %vm255, %v2201, 0.0
        %v2299 = vadd.f32 %v2297, %v2298
        %v2300 = vsel %vm255, %v2206, 0.0
        %v2301 = vadd.f32 %v2299, %v2300
        %v2302 = vsel %vm255, %v2211, 0.0
        %v2303 = vadd.f32 %v2301, %v2302
        %v2304 = vsel %vm255, %v2216, 0.0
        %v2305 = vadd.f32 %v2303, %v2304
        %v2306 = vsel %vm255, %v2221, 0.0
        %v2307 = vadd.f32 %v2305, %v2306
        %v2308 = vsel %vm255, %v2226, 0.0
        %v2309 = vadd.f32 %v2307, %v2308
        %v2310 = vsel %vm255, %v2231, 0.0
        %v2311 = vadd.f32 %v2309, %v2310
        %v2312 = vsel %vm255, %v2236, 0.0
        %v2313 = vadd.f32 %v2311, %v2312
        %v2314 = vsel %vm255, %v2241, 0.0
        %v2315 = vadd.f32 %v2313, %v2314
        %v2316 = vsel %vm255, %v2246, 0.0
        %v2317 = vadd.f32 %v2315, %v2316
        %v2318 = vsel %vm255, %v2251, 0.0
        %v2319 = vadd.f32 %v2317, %v2318
        %v2320 = vsel %vm255, %v2256, 0.0
        %v2321 = vadd.f32 %v2319, %v2320
        %v2322 = vrot.slane %v2321, 4
        %v2323 = vadd.f32 %v2321, %v2322
        %v2324 = vrot.slane %v2323, 2
        %v2325 = vadd.f32 %v2323, %v2324
        %v2326 = vrot.slane %v2325, 1
        %v2327 = vadd.f32 %v2325, %v2326
        %v2328 = vmul.f32 %v2327, %v325
        %v2329 = vsub.f32 %v2101, %v2328
        %v2330 = vsub.f32 %v2106, %v2328
        %v2331 = vsub.f32 %v2111, %v2328
        %v2332 = vsub.f32 %v2116, %v2328
        %v2333 = vsub.f32 %v2121, %v2328
        %v2334 = vsub.f32 %v2126, %v2328
        %v2335 = vsub.f32 %v2131, %v2328
        %v2336 = vsub.f32 %v2136, %v2328
        %v2337 = vsub.f32 %v2141, %v2328
        %v2338 = vsub.f32 %v2146, %v2328
        %v2339 = vsub.f32 %v2151, %v2328
        %v2340 = vsub.f32 %v2156, %v2328
        %v2341 = vsub.f32 %v2161, %v2328
        %v2342 = vsub.f32 %v2166, %v2328
        %v2343 = vsub.f32 %v2171, %v2328
        %v2344 = vsub.f32 %v2176, %v2328
        %v2345 = vsub.f32 %v2181, %v2328
        %v2346 = vsub.f32 %v2186, %v2328
        %v2347 = vsub.f32 %v2191, %v2328
        %v2348 = vsub.f32 %v2196, %v2328
        %v2349 = vsub.f32 %v2201, %v2328
        %v2350 = vsub.f32 %v2206, %v2328
        %v2351 = vsub.f32 %v2211, %v2328
        %v2352 = vsub.f32 %v2216, %v2328
        %v2353 = vsub.f32 %v2221, %v2328
        %v2354 = vsub.f32 %v2226, %v2328
        %v2355 = vsub.f32 %v2231, %v2328
        %v2356 = vsub.f32 %v2236, %v2328
        %v2357 = vsub.f32 %v2241, %v2328
        %v2358 = vsub.f32 %v2246, %v2328
        %v2359 = vsub.f32 %v2251, %v2328
        %v2360 = vsub.f32 %v2256, %v2328
        %v2361 = vmul.f32 %v2329, %v2329
        %v2362 = vmul.f32 %v2330, %v2330
        %v2363 = vmul.f32 %v2331, %v2331
        %v2364 = vmul.f32 %v2332, %v2332
        %v2365 = vmul.f32 %v2333, %v2333
        %v2366 = vmul.f32 %v2334, %v2334
        %v2367 = vmul.f32 %v2335, %v2335
        %v2368 = vmul.f32 %v2336, %v2336
        %v2369 = vmul.f32 %v2337, %v2337
        %v2370 = vmul.f32 %v2338, %v2338
        %v2371 = vmul.f32 %v2339, %v2339
        %v2372 = vmul.f32 %v2340, %v2340
        %v2373 = vmul.f32 %v2341, %v2341
        %v2374 = vmul.f32 %v2342, %v2342
        %v2375 = vmul.f32 %v2343, %v2343
        %v2376 = vmul.f32 %v2344, %v2344
        %v2377 = vmul.f32 %v2345, %v2345
        %v2378 = vmul.f32 %v2346, %v2346
        %v2379 = vmul.f32 %v2347, %v2347
        %v2380 = vmul.f32 %v2348, %v2348
        %v2381 = vmul.f32 %v2349, %v2349
        %v2382 = vmul.f32 %v2350, %v2350
        %v2383 = vmul.f32 %v2351, %v2351
        %v2384 = vmul.f32 %v2352, %v2352
        %v2385 = vmul.f32 %v2353, %v2353
        %v2386 = vmul.f32 %v2354, %v2354
        %v2387 = vmul.f32 %v2355, %v2355
        %v2388 = vmul.f32 %v2356, %v2356
        %v2389 = vmul.f32 %v2357, %v2357
        %v2390 = vmul.f32 %v2358, %v2358
        %v2391 = vmul.f32 %v2359, %v2359
        %v2392 = vmul.f32 %v2360, %v2360
        %v2393 = vsel %vm255, %v2361, 0.0
        %v2394 = vsel %vm255, %v2362, 0.0
        %v2395 = vadd.f32 %v2393, %v2394
        %v2396 = vsel %vm255, %v2363, 0.0
        %v2397 = vadd.f32 %v2395, %v2396
        %v2398 = vsel %vm255, %v2364, 0.0
        %v2399 = vadd.f32 %v2397, %v2398
        %v2400 = vsel %vm255, %v2365, 0.0
        %v2401 = vadd.f32 %v2399, %v2400
        %v2402 = vsel %vm255, %v2366, 0.0
        %v2403 = vadd.f32 %v2401, %v2402
        %v2404 = vsel %vm255, %v2367, 0.0
        %v2405 = vadd.f32 %v2403, %v2404
        %v2406 = vsel %vm255, %v2368, 0.0
        %v2407 = vadd.f32 %v2405, %v2406
        %v2408 = vsel %vm255, %v2369, 0.0
        %v2409 = vadd.f32 %v2407, %v2408
        %v2410 = vsel %vm255, %v2370, 0.0
        %v2411 = vadd.f32 %v2409, %v2410
        %v2412 = vsel %vm255, %v2371, 0.0
        %v2413 = vadd.f32 %v2411, %v2412
        %v2414 = vsel %vm255, %v2372, 0.0
        %v2415 = vadd.f32 %v2413, %v2414
        %v2416 = vsel %vm255, %v2373, 0.0
        %v2417 = vadd.f32 %v2415, %v2416
        %v2418 = vsel %vm255, %v2374, 0.0
        %v2419 = vadd.f32 %v2417, %v2418
        %v2420 = vsel %vm255, %v2375, 0.0
        %v2421 = vadd.f32 %v2419, %v2420
        %v2422 = vsel %vm255, %v2376, 0.0
        %v2423 = vadd.f32 %v2421, %v2422
        %v2424 = vsel %vm255, %v2377, 0.0
        %v2425 = vadd.f32 %v2423, %v2424
        %v2426 = vsel %vm255, %v2378, 0.0
        %v2427 = vadd.f32 %v2425, %v2426
        %v2428 = vsel %vm255, %v2379, 0.0
        %v2429 = vadd.f32 %v2427, %v2428
        %v2430 = vsel %vm255, %v2380, 0.0
        %v2431 = vadd.f32 %v2429, %v2430
        %v2432 = vsel %vm255, %v2381, 0.0
        %v2433 = vadd.f32 %v2431, %v2432
        %v2434 = vsel %vm255, %v2382, 0.0
        %v2435 = vadd.f32 %v2433, %v2434
        %v2436 = vsel %vm255, %v2383, 0.0
        %v2437 = vadd.f32 %v2435, %v2436
        %v2438 = vsel %vm255, %v2384, 0.0
        %v2439 = vadd.f32 %v2437, %v2438
        %v2440 = vsel %vm255, %v2385, 0.0
        %v2441 = vadd.f32 %v2439, %v2440
        %v2442 = vsel %vm255, %v2386, 0.0
        %v2443 = vadd.f32 %v2441, %v2442
        %v2444 = vsel %vm255, %v2387, 0.0
        %v2445 = vadd.f32 %v2443, %v2444
        %v2446 = vsel %vm255, %v2388, 0.0
        %v2447 = vadd.f32 %v2445, %v2446
        %v2448 = vsel %vm255, %v2389, 0.0
        %v2449 = vadd.f32 %v2447, %v2448
        %v2450 = vsel %vm255, %v2390, 0.0
        %v2451 = vadd.f32 %v2449, %v2450
        %v2452 = vsel %vm255, %v2391, 0.0
        %v2453 = vadd.f32 %v2451, %v2452
        %v2454 = vsel %vm255, %v2392, 0.0
        %v2455 = vadd.f32 %v2453, %v2454
        %v2456 = vrot.slane %v2455, 4
        %v2457 = vadd.f32 %v2455, %v2456
        %v2458 = vrot.slane %v2457, 2
        %v2459 = vadd.f32 %v2457, %v2458
        %v2460 = vrot.slane %v2459, 1
        %v2461 = vadd.f32 %v2459, %v2460
        %v2462 = vmul.f32 %v2461, %v325
        %v2463 = vadd.f32 %v2462, 1e-05
        %v2464 = vrsqrt.pop %v2463
        %v2465 = vmul.f32 %v2329, %v2464
        %v2466 = vmul.f32 %v2330, %v2464
        %v2467 = vmul.f32 %v2331, %v2464
        %v2468 = vmul.f32 %v2332, %v2464
        %v2469 = vmul.f32 %v2333, %v2464
        %v2470 = vmul.f32 %v2334, %v2464
        %v2471 = vmul.f32 %v2335, %v2464
        %v2472 = vmul.f32 %v2336, %v2464
        %v2473 = vmul.f32 %v2337, %v2464
        %v2474 = vmul.f32 %v2338, %v2464
        %v2475 = vmul.f32 %v2339, %v2464
        %v2476 = vmul.f32 %v2340, %v2464
        %v2477 = vmul.f32 %v2341, %v2464
        %v2478 = vmul.f32 %v2342, %v2464
        %v2479 = vmul.f32 %v2343, %v2464
        %v2480 = vmul.f32 %v2344, %v2464
        %v2481 = vmul.f32 %v2345, %v2464
        %v2482 = vmul.f32 %v2346, %v2464
        %v2483 = vmul.f32 %v2347, %v2464
        %v2484 = vmul.f32 %v2348, %v2464
        %v2485 = vmul.f32 %v2349, %v2464
        %v2486 = vmul.f32 %v2350, %v2464
        %v2487 = vmul.f32 %v2351, %v2464
        %v2488 = vmul.f32 %v2352, %v2464
        %v2489 = vmul.f32 %v2353, %v2464
        %v2490 = vmul.f32 %v2354, %v2464
        %v2491 = vmul.f32 %v2355, %v2464
        %v2492 = vmul.f32 %v2356, %v2464
        %v2493 = vmul.f32 %v2357, %v2464
        %v2494 = vmul.f32 %v2358, %v2464
        %v2495 = vmul.f32 %v2359, %v2464
        %v2496 = vmul.f32 %v2360, %v2464
        %v2497 = vmax.f32 %v2465, 0.0
        %v2498 = vmax.f32 %v2466, 0.0
        %v2499 = vmax.f32 %v2467, 0.0
        %v2500 = vmax.f32 %v2468, 0.0
        %v2501 = vmax.f32 %v2469, 0.0
        %v2502 = vmax.f32 %v2470, 0.0
        %v2503 = vmax.f32 %v2471, 0.0
        %v2504 = vmax.f32 %v2472, 0.0
        %v2505 = vmax.f32 %v2473, 0.0
        %v2506 = vmax.f32 %v2474, 0.0
        %v2507 = vmax.f32 %v2475, 0.0
        %v2508 = vmax.f32 %v2476, 0.0
        %v2509 = vmax.f32 %v2477, 0.0
        %v2510 = vmax.f32 %v2478, 0.0
        %v2511 = vmax.f32 %v2479, 0.0
        %v2512 = vmax.f32 %v2480, 0.0
        %v2513 = vmax.f32 %v2481, 0.0
        %v2514 = vmax.f32 %v2482, 0.0
        %v2515 = vmax.f32 %v2483, 0.0
        %v2516 = vmax.f32 %v2484, 0.0
        %v2517 = vmax.f32 %v2485, 0.0
        %v2518 = vmax.f32 %v2486, 0.0
        %v2519 = vmax.f32 %v2487, 0.0
        %v2520 = vmax.f32 %v2488, 0.0
        %v2521 = vmax.f32 %v2489, 0.0
        %v2522 = vmax.f32 %v2490, 0.0
        %v2523 = vmax.f32 %v2491, 0.0
        %v2524 = vmax.f32 %v2492, 0.0
        %v2525 = vmax.f32 %v2493, 0.0
        %v2526 = vmax.f32 %v2494, 0.0
        %v2527 = vmax.f32 %v2495, 0.0
        %v2528 = vmax.f32 %v2496, 0.0
        %v2561 = vrot.slane %v2497, 7
        %v2562 = vrot.slane %v2498, 7
        %v2563 = vsel %vm560, %v2561, %v2562
        %v2564 = vrot.slane %v2499, 7
        %v2565 = vrot.slane %v2500, 7
        %v2566 = vsel %vm560, %v2564, %v2565
        %v2567 = vrot.slane %v2501, 7
        %v2568 = vrot.slane %v2502, 7
        %v2569 = vsel %vm560, %v2567, %v2568
        %v2570 = vrot.slane %v2503, 7
        %v2571 = vrot.slane %v2504, 7
        %v2572 = vsel %vm560, %v2570, %v2571
        %v2573 = vrot.slane %v2505, 7
        %v2574 = vrot.slane %v2506, 7
        %v2575 = vsel %vm560, %v2573, %v2574
        %v2576 = vrot.slane %v2507, 7
        %v2577 = vrot.slane %v2508, 7
        %v2578 = vsel %vm560, %v2576, %v2577
        %v2579 = vrot.slane %v2509, 7
        %v2580 = vrot.slane %v2510, 7
        %v2581 = vsel %vm560, %v2579, %v2580
        %v2582 = vrot.slane %v2511, 7
        %v2583 = vrot.slane %v2512, 7
        %v2584 = vsel %vm560, %v2582, %v2583
        %v2585 = vrot.slane %v2513, 7
        %v2586 = vrot.slane %v2514, 7
        %v2587 = vsel %vm560, %v2585, %v2586
        %v2588 = vrot.slane %v2515, 7
        %v2589 = vrot.slane %v2516, 7
        %v2590 = vsel %vm560, %v2588, %v2589
        %v2591 = vrot.slane %v2517, 7
        %v2592 = vrot.slane %v2518, 7
        %v2593 = vsel %vm560, %v2591, %v2592
        %v2594 = vrot.slane %v2519, 7
        %v2595 = vrot.slane %v2520, 7
        %v2596 = vsel %vm560, %v2594, %v2595
        %v2597 = vrot.slane %v2521, 7
        %v2598 = vrot.slane %v2522, 7
        %v2599 = vsel %vm560, %v2597, %v2598
        %v2600 = vrot.slane %v2523, 7
        %v2601 = vrot.slane %v2524, 7
        %v2602 = vsel %vm560, %v2600, %v2601
        %v2603 = vrot.slane %v2525, 7
        %v2604 = vrot.slane %v2526, 7
        %v2605 = vsel %vm560, %v2603, %v2604
        %v2606 = vrot.slane %v2527, 7
        %v2607 = vrot.slane %v2528, 7
        %v2608 = vsel %vm560, %v2606, %v2607
        %v2656 = vsel %vm560, 0.0, %v2561
        %v2657 = vsel %vm560, 0.0, %v2564
        %v2658 = vsel %vm560, 0.0, %v2567
        %v2659 = vsel %vm560, 0.0, %v2570
        %v2660 = vsel %vm560, 0.0, %v2573
        %v2661 = vsel %vm560, 0.0, %v2576
        %v2662 = vsel %vm560, 0.0, %v2579
        %v2663 = vsel %vm560, 0.0, %v2582
        %v2664 = vsel %vm560, 0.0, %v2585
        %v2665 = vsel %vm560, 0.0, %v2588
        %v2666 = vsel %vm560, 0.0, %v2591
        %v2667 = vsel %vm560, 0.0, %v2594
        %v2668 = vsel %vm560, 0.0, %v2597
        %v2669 = vsel %vm560, 0.0, %v2600
        %v2670 = vsel %vm560, 0.0, %v2603
        %v2671 = vsel %vm560, 0.0, %v2606
        %v2672 = vsel %vm560, %v2562, 0.0
        %v2673 = vsel %vm560, %v2565, 0.0
        %v2674 = vsel %vm560, %v2568, 0.0
        %v2675 = vsel %vm560, %v2571, 0.0
        %v2676 = vsel %vm560, %v2574, 0.0
        %v2677 = vsel %vm560, %v2577, 0.0
        %v2678 = vsel %vm560, %v2580, 0.0
        %v2679 = vsel %vm560, %v2583, 0.0
        %v2680 = vsel %vm560, %v2586, 0.0
        %v2681 = vsel %vm560, %v2589, 0.0
        %v2682 = vsel %vm560, %v2592, 0.0
        %v2683 = vsel %vm560, %v2595, 0.0
        %v2684 = vsel %vm560, %v2598, 0.0
        %v2685 = vsel %vm560, %v2601, 0.0
        %v2686 = vsel %vm560, %v2604, 0.0
        %v2687 = vsel %vm560, %v2607, 0.0
        %v2718 = vrot.slane %v2656, 1
        %v2719 = vrot.slane %v2563, 1
        %v2720 = vsel %vm726, %v2718, %v2719
        %v2721 = vrot.slane %v2672, 1
        %v2722 = vsel %vm726, %v2719, %v2721
        %v2723 = vrot.slane %v2657, 1
        %v2724 = vrot.slane %v2566, 1
        %v2725 = vsel %vm726, %v2723, %v2724
        %v2726 = vrot.slane %v2673, 1
        %v2727 = vsel %vm726, %v2724, %v2726
        %v2728 = vrot.slane %v2658, 1
        %v2729 = vrot.slane %v2569, 1
        %v2730 = vsel %vm726, %v2728, %v2729
        %v2731 = vrot.slane %v2674, 1
        %v2732 = vsel %vm726, %v2729, %v2731
        %v2733 = vrot.slane %v2659, 1
        %v2734 = vrot.slane %v2572, 1
        %v2735 = vsel %vm726, %v2733, %v2734
        %v2736 = vrot.slane %v2675, 1
        %v2737 = vsel %vm726, %v2734, %v2736
        %v2738 = vrot.slane %v2660, 1
        %v2739 = vrot.slane %v2575, 1
        %v2740 = vsel %vm726, %v2738, %v2739
        %v2741 = vrot.slane %v2676, 1
        %v2742 = vsel %vm726, %v2739, %v2741
        %v2743 = vrot.slane %v2661, 1
        %v2744 = vrot.slane %v2578, 1
        %v2745 = vsel %vm726, %v2743, %v2744
        %v2746 = vrot.slane %v2677, 1
        %v2747 = vsel %vm726, %v2744, %v2746
        %v2748 = vrot.slane %v2662, 1
        %v2749 = vrot.slane %v2581, 1
        %v2750 = vsel %vm726, %v2748, %v2749
        %v2751 = vrot.slane %v2678, 1
        %v2752 = vsel %vm726, %v2749, %v2751
        %v2753 = vrot.slane %v2663, 1
        %v2754 = vrot.slane %v2584, 1
        %v2755 = vsel %vm726, %v2753, %v2754
        %v2756 = vrot.slane %v2679, 1
        %v2757 = vsel %vm726, %v2754, %v2756
        %v2758 = vrot.slane %v2664, 1
        %v2759 = vrot.slane %v2587, 1
        %v2760 = vsel %vm726, %v2758, %v2759
        %v2761 = vrot.slane %v2680, 1
        %v2762 = vsel %vm726, %v2759, %v2761
        %v2763 = vrot.slane %v2665, 1
        %v2764 = vrot.slane %v2590, 1
        %v2765 = vsel %vm726, %v2763, %v2764
        %v2766 = vrot.slane %v2681, 1
        %v2767 = vsel %vm726, %v2764, %v2766
        %v2768 = vrot.slane %v2666, 1
        %v2769 = vrot.slane %v2593, 1
        %v2770 = vsel %vm726, %v2768, %v2769
        %v2771 = vrot.slane %v2682, 1
        %v2772 = vsel %vm726, %v2769, %v2771
        %v2773 = vrot.slane %v2667, 1
        %v2774 = vrot.slane %v2596, 1
        %v2775 = vsel %vm726, %v2773, %v2774
        %v2776 = vrot.slane %v2683, 1
        %v2777 = vsel %vm726, %v2774, %v2776
        %v2778 = vrot.slane %v2668, 1
        %v2779 = vrot.slane %v2599, 1
        %v2780 = vsel %vm726, %v2778, %v2779
        %v2781 = vrot.slane %v2684, 1
        %v2782 = vsel %vm726, %v2779, %v2781
        %v2783 = vrot.slane %v2669, 1
        %v2784 = vrot.slane %v2602, 1
        %v2785 = vsel %vm726, %v2783, %v2784
        %v2786 = vrot.slane %v2685, 1
        %v2787 = vsel %vm726, %v2784, %v2786
        %v2788 = vrot.slane %v2670, 1
        %v2789 = vrot.slane %v2605, 1
        %v2790 = vsel %vm726, %v2788, %v2789
        %v2791 = vrot.slane %v2686, 1
        %v2792 = vsel %vm726, %v2789, %v2791
        %2793 = vrot.lane.b32.xlu0 %v2720, 32
        %v2794 = vpop.permute.xlu0 %2793
        %2795 = vrot.lane.b32.xlu0 %v2722, 32
        %v2796 = vpop.permute.xlu0 %2795
        %2797 = vrot.lane.b32.xlu0 %v2725, 32
        %v2798 = vpop.permute.xlu0 %2797
        %2799 = vrot.lane.b32.xlu0 %v2727, 32
        %v2800 = vpop.permute.xlu0 %2799
        %2801 = vrot.lane.b32.xlu0 %v2730, 32
        %v2802 = vpop.permute.xlu0 %2801
        %2803 = vrot.lane.b32.xlu0 %v2732, 32
        %v2804 = vpop.permute.xlu0 %2803
        %2805 = vrot.lane.b32.xlu0 %v2735, 32
        %v2806 = vpop.permute.xlu0 %2805
        %2807 = vrot.lane.b32.xlu0 %v2737, 32
        %v2808 = vpop.permute.xlu0 %2807
        %2809 = vrot.lane.b32.xlu0 %v2740, 32
        %v2810 = vpop.permute.xlu0 %2809
        %2811 = vrot.lane.b32.xlu0 %v2742, 32
        %v2812 = vpop.permute.xlu0 %2811
        %2813 = vrot.lane.b32.xlu0 %v2745, 32
        %v2814 = vpop.permute.xlu0 %2813
        %2815 = vrot.lane.b32.xlu0 %v2747, 32
        %v2816 = vpop.permute.xlu0 %2815
        %2817 = vrot.lane.b32.xlu0 %v2750, 32
        %v2818 = vpop.permute.xlu0 %2817
        %2819 = vrot.lane.b32.xlu0 %v2752, 32
        %v2820 = vpop.permute.xlu0 %2819
        %2821 = vrot.lane.b32.xlu0 %v2755, 32
        %v2822 = vpop.permute.xlu0 %2821
        %2823 = vrot.lane.b32.xlu0 %v2757, 32
        %v2824 = vpop.permute.xlu0 %2823
        %2825 = vrot.lane.b32.xlu0 %v2760, 32
        %v2826 = vpop.permute.xlu0 %2825
        %2827 = vrot.lane.b32.xlu0 %v2762, 32
        %v2828 = vpop.permute.xlu0 %2827
        %2829 = vrot.lane.b32.xlu0 %v2765, 32
        %v2830 = vpop.permute.xlu0 %2829
        %2831 = vrot.lane.b32.xlu0 %v2767, 32
        %v2832 = vpop.permute.xlu0 %2831
        %2833 = vrot.lane.b32.xlu0 %v2770, 32
        %v2834 = vpop.permute.xlu0 %2833
        %2835 = vrot.lane.b32.xlu0 %v2772, 32
        %v2836 = vpop.permute.xlu0 %2835
        %2837 = vrot.lane.b32.xlu0 %v2775, 32
        %v2838 = vpop.permute.xlu0 %2837
        %2839 = vrot.lane.b32.xlu0 %v2777, 32
        %v2840 = vpop.permute.xlu0 %2839
        %2841 = vrot.lane.b32.xlu0 %v2780, 32
        %v2842 = vpop.permute.xlu0 %2841
        %2843 = vrot.lane.b32.xlu0 %v2782, 32
        %v2844 = vpop.permute.xlu0 %2843
        %2845 = vrot.lane.b32.xlu0 %v2785, 32
        %v2846 = vpop.permute.xlu0 %2845
        %2847 = vrot.lane.b32.xlu0 %v2787, 32
        %v2848 = vpop.permute.xlu0 %2847
        %2849 = vrot.lane.b32.xlu0 %v2790, 32
        %v2850 = vpop.permute.xlu0 %2849
        %2851 = vrot.lane.b32.xlu0 %v2792, 32
        %v2852 = vpop.permute.xlu0 %2851
        %v2883 = vrot.slane %v2656, 2
        %v2884 = vrot.slane %v2563, 2
        %v2885 = vsel %vm903, %v2883, %v2884
        %v2886 = vrot.slane %v2672, 2
        %v2887 = vsel %vm903, %v2884, %v2886
        %v2888 = vrot.slane %v2657, 2
        %v2889 = vrot.slane %v2566, 2
        %v2890 = vsel %vm903, %v2888, %v2889
        %v2891 = vrot.slane %v2673, 2
        %v2892 = vsel %vm903, %v2889, %v2891
        %v2893 = vrot.slane %v2658, 2
        %v2894 = vrot.slane %v2569, 2
        %v2895 = vsel %vm903, %v2893, %v2894
        %v2896 = vrot.slane %v2674, 2
        %v2897 = vsel %vm903, %v2894, %v2896
        %v2898 = vrot.slane %v2659, 2
        %v2899 = vrot.slane %v2572, 2
        %v2900 = vsel %vm903, %v2898, %v2899
        %v2901 = vrot.slane %v2675, 2
        %v2902 = vsel %vm903, %v2899, %v2901
        %v2903 = vrot.slane %v2660, 2
        %v2904 = vrot.slane %v2575, 2
        %v2905 = vsel %vm903, %v2903, %v2904
        %v2906 = vrot.slane %v2676, 2
        %v2907 = vsel %vm903, %v2904, %v2906
        %v2908 = vrot.slane %v2661, 2
        %v2909 = vrot.slane %v2578, 2
        %v2910 = vsel %vm903, %v2908, %v2909
        %v2911 = vrot.slane %v2677, 2
        %v2912 = vsel %vm903, %v2909, %v2911
        %v2913 = vrot.slane %v2662, 2
        %v2914 = vrot.slane %v2581, 2
        %v2915 = vsel %vm903, %v2913, %v2914
        %v2916 = vrot.slane %v2678, 2
        %v2917 = vsel %vm903, %v2914, %v2916
        %v2918 = vrot.slane %v2663, 2
        %v2919 = vrot.slane %v2584, 2
        %v2920 = vsel %vm903, %v2918, %v2919
        %v2921 = vrot.slane %v2679, 2
        %v2922 = vsel %vm903, %v2919, %v2921
        %v2923 = vrot.slane %v2664, 2
        %v2924 = vrot.slane %v2587, 2
        %v2925 = vsel %vm903, %v2923, %v2924
        %v2926 = vrot.slane %v2680, 2
        %v2927 = vsel %vm903, %v2924, %v2926
        %v2928 = vrot.slane %v2665, 2
        %v2929 = vrot.slane %v2590, 2
        %v2930 = vsel %vm903, %v2928, %v2929
        %v2931 = vrot.slane %v2681, 2
        %v2932 = vsel %vm903, %v2929, %v2931
        %v2933 = vrot.slane %v2666, 2
        %v2934 = vrot.slane %v2593, 2
        %v2935 = vsel %vm903, %v2933, %v2934
        %v2936 = vrot.slane %v2682, 2
        %v2937 = vsel %vm903, %v2934, %v2936
        %v2938 = vrot.slane %v2667, 2
        %v2939 = vrot.slane %v2596, 2
        %v2940 = vsel %vm903, %v2938, %v2939
        %v2941 = vrot.slane %v2683, 2
        %v2942 = vsel %vm903, %v2939, %v2941
        %v2943 = vrot.slane %v2668, 2
        %v2944 = vrot.slane %v2599, 2
        %v2945 = vsel %vm903, %v2943, %v2944
        %v2946 = vrot.slane %v2684, 2
        %v2947 = vsel %vm903, %v2944, %v2946
        %v2948 = vrot.slane %v2669, 2
        %v2949 = vrot.slane %v2602, 2
        %v2950 = vsel %vm903, %v2948, %v2949
        %v2951 = vrot.slane %v2685, 2
        %v2952 = vsel %vm903, %v2949, %v2951
        %v2953 = vrot.slane %v2670, 2
        %v2954 = vrot.slane %v2605, 2
        %v2955 = vsel %vm903, %v2953, %v2954
        %v2956 = vrot.slane %v2686, 2
        %v2957 = vsel %vm903, %v2954, %v2956
        %2958 = vrot.lane.b32.xlu0 %v2885, 64
        %v2959 = vpop.permute.xlu0 %2958
        %2960 = vrot.lane.b32.xlu0 %v2887, 64
        %v2961 = vpop.permute.xlu0 %2960
        %2962 = vrot.lane.b32.xlu0 %v2890, 64
        %v2963 = vpop.permute.xlu0 %2962
        %2964 = vrot.lane.b32.xlu0 %v2892, 64
        %v2965 = vpop.permute.xlu0 %2964
        %2966 = vrot.lane.b32.xlu0 %v2895, 64
        %v2967 = vpop.permute.xlu0 %2966
        %2968 = vrot.lane.b32.xlu0 %v2897, 64
        %v2969 = vpop.permute.xlu0 %2968
        %2970 = vrot.lane.b32.xlu0 %v2900, 64
        %v2971 = vpop.permute.xlu0 %2970
        %2972 = vrot.lane.b32.xlu0 %v2902, 64
        %v2973 = vpop.permute.xlu0 %2972
        %2974 = vrot.lane.b32.xlu0 %v2905, 64
        %v2975 = vpop.permute.xlu0 %2974
        %2976 = vrot.lane.b32.xlu0 %v2907, 64
        %v2977 = vpop.permute.xlu0 %2976
        %2978 = vrot.lane.b32.xlu0 %v2910, 64
        %v2979 = vpop.permute.xlu0 %2978
        %2980 = vrot.lane.b32.xlu0 %v2912, 64
        %v2981 = vpop.permute.xlu0 %2980
        %2982 = vrot.lane.b32.xlu0 %v2915, 64
        %v2983 = vpop.permute.xlu0 %2982
        %2984 = vrot.lane.b32.xlu0 %v2917, 64
        %v2985 = vpop.permute.xlu0 %2984
        %2986 = vrot.lane.b32.xlu0 %v2920, 64
        %v2987 = vpop.permute.xlu0 %2986
        %2988 = vrot.lane.b32.xlu0 %v2922, 64
        %v2989 = vpop.permute.xlu0 %2988
        %2990 = vrot.lane.b32.xlu0 %v2925, 64
        %v2991 = vpop.permute.xlu0 %2990
        %2992 = vrot.lane.b32.xlu0 %v2927, 64
        %v2993 = vpop.permute.xlu0 %2992
        %2994 = vrot.lane.b32.xlu0 %v2930, 64
        %v2995 = vpop.permute.xlu0 %2994
        %2996 = vrot.lane.b32.xlu0 %v2932, 64
        %v2997 = vpop.permute.xlu0 %2996
        %2998 = vrot.lane.b32.xlu0 %v2935, 64
        %v2999 = vpop.permute.xlu0 %2998
        %3000 = vrot.lane.b32.xlu0 %v2937, 64
        %v3001 = vpop.permute.xlu0 %3000
        %3002 = vrot.lane.b32.xlu0 %v2940, 64
        %v3003 = vpop.permute.xlu0 %3002
        %3004 = vrot.lane.b32.xlu0 %v2942, 64
        %v3005 = vpop.permute.xlu0 %3004
        %3006 = vrot.lane.b32.xlu0 %v2945, 64
        %v3007 = vpop.permute.xlu0 %3006
        %3008 = vrot.lane.b32.xlu0 %v2947, 64
        %v3009 = vpop.permute.xlu0 %3008
        %3010 = vrot.lane.b32.xlu0 %v2950, 64
        %v3011 = vpop.permute.xlu0 %3010
        %3012 = vrot.lane.b32.xlu0 %v2952, 64
        %v3013 = vpop.permute.xlu0 %3012
        %3014 = vrot.lane.b32.xlu0 %v2955, 64
        %v3015 = vpop.permute.xlu0 %3014
        %3016 = vrot.lane.b32.xlu0 %v2957, 64
        %v3017 = vpop.permute.xlu0 %3016
        %3049 = vrot.lane.b32.xlu0 %v2656, 96
        %v3050 = vpop.permute.xlu0 %3049
        %3051 = vrot.lane.b32.xlu0 %v2563, 96
        %v3052 = vpop.permute.xlu0 %3051
        %3053 = vrot.lane.b32.xlu0 %v2657, 96
        %v3054 = vpop.permute.xlu0 %3053
        %3055 = vrot.lane.b32.xlu0 %v2566, 96
        %v3056 = vpop.permute.xlu0 %3055
        %3057 = vrot.lane.b32.xlu0 %v2658, 96
        %v3058 = vpop.permute.xlu0 %3057
        %3059 = vrot.lane.b32.xlu0 %v2569, 96
        %v3060 = vpop.permute.xlu0 %3059
        %3061 = vrot.lane.b32.xlu0 %v2659, 96
        %v3062 = vpop.permute.xlu0 %3061
        %3063 = vrot.lane.b32.xlu0 %v2572, 96
        %v3064 = vpop.permute.xlu0 %3063
        %3065 = vrot.lane.b32.xlu0 %v2660, 96
        %v3066 = vpop.permute.xlu0 %3065
        %3067 = vrot.lane.b32.xlu0 %v2575, 96
        %v3068 = vpop.permute.xlu0 %3067
        %3069 = vrot.lane.b32.xlu0 %v2661, 96
        %v3070 = vpop.permute.xlu0 %3069
        %3071 = vrot.lane.b32.xlu0 %v2578, 96
        %v3072 = vpop.permute.xlu0 %3071
        %3073 = vrot.lane.b32.xlu0 %v2662, 96
        %v3074 = vpop.permute.xlu0 %3073
        %3075 = vrot.lane.b32.xlu0 %v2581, 96
        %v3076 = vpop.permute.xlu0 %3075
        %3077 = vrot.lane.b32.xlu0 %v2663, 96
        %v3078 = vpop.permute.xlu0 %3077
        %3079 = vrot.lane.b32.xlu0 %v2584, 96
        %v3080 = vpop.permute.xlu0 %3079
        %3081 = vrot.lane.b32.xlu0 %v2664, 96
        %v3082 = vpop.permute.xlu0 %3081
        %3083 = vrot.lane.b32.xlu0 %v2587, 96
        %v3084 = vpop.permute.xlu0 %3083
        %3085 = vrot.lane.b32.xlu0 %v2665, 96
        %v3086 = vpop.permute.xlu0 %3085
        %3087 = vrot.lane.b32.xlu0 %v2590, 96
        %v3088 = vpop.permute.xlu0 %3087
        %3089 = vrot.lane.b32.xlu0 %v2666, 96
        %v3090 = vpop.permute.xlu0 %3089
        %3091 = vrot.lane.b32.xlu0 %v2593, 96
        %v3092 = vpop.permute.xlu0 %3091
        %3093 = vrot.lane.b32.xlu0 %v2667, 96
        %v3094 = vpop.permute.xlu0 %3093
        %3095 = vrot.lane.b32.xlu0 %v2596, 96
        %v3096 = vpop.permute.xlu0 %3095
        %3097 = vrot.lane.b32.xlu0 %v2668, 96
        %v3098 = vpop.permute.xlu0 %3097
        %3099 = vrot.lane.b32.xlu0 %v2599, 96
        %v3100 = vpop.permute.xlu0 %3099
        %3101 = vrot.lane.b32.xlu0 %v2669, 96
        %v3102 = vpop.permute.xlu0 %3101
        %3103 = vrot.lane.b32.xlu0 %v2602, 96
        %v3104 = vpop.permute.xlu0 %3103
        %3105 = vrot.lane.b32.xlu0 %v2670, 96
        %v3106 = vpop.permute.xlu0 %3105
        %3107 = vrot.lane.b32.xlu0 %v2605, 96
        %v3108 = vpop.permute.xlu0 %3107
        %3109 = vrot.lane.b32.xlu0 %v2671, 96
        %v3110 = vpop.permute.xlu0 %3109
        %3111 = vrot.lane.b32.xlu0 %v2608, 96
        %v3112 = vpop.permute.xlu0 %3111
        %v3146 = vrot.slane %v2671, 1
        %v3147 = vrot.slane %v2608, 1
        %v3148 = vsel %vm726, %v3146, %v3147
        %v3149 = vrot.slane %v2687, 1
        %v3150 = vsel %vm726, %v3147, %v3149
        %v3183 = vrot.slane %v2671, 2
        %v3184 = vrot.slane %v2608, 2
        %v3185 = vsel %vm903, %v3183, %v3184
        %v3186 = vrot.slane %v2687, 2
        %v3187 = vsel %vm903, %v3184, %v3186
        %3188 = vrot.lane.b32.xlu0 %v2885, 32
        %v3189 = vpop.permute.xlu0 %3188
        %3190 = vrot.lane.b32.xlu0 %v2887, 32
        %v3191 = vpop.permute.xlu0 %3190
        %3192 = vrot.lane.b32.xlu0 %v2890, 32
        %v3193 = vpop.permute.xlu0 %3192
        %3194 = vrot.lane.b32.xlu0 %v2892, 32
        %v3195 = vpop.permute.xlu0 %3194
        %3196 = vrot.lane.b32.xlu0 %v2895, 32
        %v3197 = vpop.permute.xlu0 %3196
        %3198 = vrot.lane.b32.xlu0 %v2897, 32
        %v3199 = vpop.permute.xlu0 %3198
        %3200 = vrot.lane.b32.xlu0 %v2900, 32
        %v3201 = vpop.permute.xlu0 %3200
        %3202 = vrot.lane.b32.xlu0 %v2902, 32
        %v3203 = vpop.permute.xlu0 %3202
        %3204 = vrot.lane.b32.xlu0 %v2905, 32
        %v3205 = vpop.permute.xlu0 %3204
        %3206 = vrot.lane.b32.xlu0 %v2907, 32
        %v3207 = vpop.permute.xlu0 %3206
        %3208 = vrot.lane.b32.xlu0 %v2910, 32
        %v3209 = vpop.permute.xlu0 %3208
        %3210 = vrot.lane.b32.xlu0 %v2912, 32
        %v3211 = vpop.permute.xlu0 %3210
        %3212 = vrot.lane.b32.xlu0 %v2915, 32
        %v3213 = vpop.permute.xlu0 %3212
        %3214 = vrot.lane.b32.xlu0 %v2917, 32
        %v3215 = vpop.permute.xlu0 %3214
        %3216 = vrot.lane.b32.xlu0 %v2920, 32
        %v3217 = vpop.permute.xlu0 %3216
        %3218 = vrot.lane.b32.xlu0 %v2922, 32
        %v3219 = vpop.permute.xlu0 %3218
        %3220 = vrot.lane.b32.xlu0 %v2925, 32
        %v3221 = vpop.permute.xlu0 %3220
        %3222 = vrot.lane.b32.xlu0 %v2927, 32
        %v3223 = vpop.permute.xlu0 %3222
        %3224 = vrot.lane.b32.xlu0 %v2930, 32
        %v3225 = vpop.permute.xlu0 %3224
        %3226 = vrot.lane.b32.xlu0 %v2932, 32
        %v3227 = vpop.permute.xlu0 %3226
        %3228 = vrot.lane.b32.xlu0 %v2935, 32
        %v3229 = vpop.permute.xlu0 %3228
        %3230 = vrot.lane.b32.xlu0 %v2937, 32
        %v3231 = vpop.permute.xlu0 %3230
        %3232 = vrot.lane.b32.xlu0 %v2940, 32
        %v3233 = vpop.permute.xlu0 %3232
        %3234 = vrot.lane.b32.xlu0 %v2942, 32
        %v3235 = vpop.permute.xlu0 %3234
        %3236 = vrot.lane.b32.xlu0 %v2945, 32
        %v3237 = vpop.permute.xlu0 %3236
        %3238 = vrot.lane.b32.xlu0 %v2947, 32
        %v3239 = vpop.permute.xlu0 %3238
        %3240 = vrot.lane.b32.xlu0 %v2950, 32
        %v3241 = vpop.permute.xlu0 %3240
        %3242 = vrot.lane.b32.xlu0 %v2952, 32
        %v3243 = vpop.permute.xlu0 %3242
        %3244 = vrot.lane.b32.xlu0 %v2955, 32
        %v3245 = vpop.permute.xlu0 %3244
        %3246 = vrot.lane.b32.xlu0 %v2957, 32
        %v3247 = vpop.permute.xlu0 %3246
        %3248 = vrot.lane.b32.xlu0 %v3185, 32
        %v3249 = vpop.permute.xlu0 %3248
        %3250 = vrot.lane.b32.xlu0 %v3187, 32
        %v3251 = vpop.permute.xlu0 %3250
        %3284 = vrot.lane.b32.xlu0 %v2657, 64
        %v3285 = vpop.permute.xlu0 %3284
        %3286 = vrot.lane.b32.xlu0 %v2566, 64
        %v3287 = vpop.permute.xlu0 %3286
        %3288 = vrot.lane.b32.xlu0 %v2658, 64
        %v3289 = vpop.permute.xlu0 %3288
        %3290 = vrot.lane.b32.xlu0 %v2569, 64
        %v3291 = vpop.permute.xlu0 %3290
        %3292 = vrot.lane.b32.xlu0 %v2659, 64
        %v3293 = vpop.permute.xlu0 %3292
        %3294 = vrot.lane.b32.xlu0 %v2572, 64
        %v3295 = vpop.permute.xlu0 %3294
        %3296 = vrot.lane.b32.xlu0 %v2660, 64
        %v3297 = vpop.permute.xlu0 %3296
        %3298 = vrot.lane.b32.xlu0 %v2575, 64
        %v3299 = vpop.permute.xlu0 %3298
        %3300 = vrot.lane.b32.xlu0 %v2661, 64
        %v3301 = vpop.permute.xlu0 %3300
        %3302 = vrot.lane.b32.xlu0 %v2578, 64
        %v3303 = vpop.permute.xlu0 %3302
        %3304 = vrot.lane.b32.xlu0 %v2662, 64
        %v3305 = vpop.permute.xlu0 %3304
        %3306 = vrot.lane.b32.xlu0 %v2581, 64
        %v3307 = vpop.permute.xlu0 %3306
        %3308 = vrot.lane.b32.xlu0 %v2663, 64
        %v3309 = vpop.permute.xlu0 %3308
        %3310 = vrot.lane.b32.xlu0 %v2584, 64
        %v3311 = vpop.permute.xlu0 %3310
        %3312 = vrot.lane.b32.xlu0 %v2664, 64
        %v3313 = vpop.permute.xlu0 %3312
        %3314 = vrot.lane.b32.xlu0 %v2587, 64
        %v3315 = vpop.permute.xlu0 %3314
        %3316 = vrot.lane.b32.xlu0 %v2665, 64
        %v3317 = vpop.permute.xlu0 %3316
        %3318 = vrot.lane.b32.xlu0 %v2590, 64
        %v3319 = vpop.permute.xlu0 %3318
        %3320 = vrot.lane.b32.xlu0 %v2666, 64
        %v3321 = vpop.permute.xlu0 %3320
        %3322 = vrot.lane.b32.xlu0 %v2593, 64
        %v3323 = vpop.permute.xlu0 %3322
        %3324 = vrot.lane.b32.xlu0 %v2667, 64
        %v3325 = vpop.permute.xlu0 %3324
        %3326 = vrot.lane.b32.xlu0 %v2596, 64
        %v3327 = vpop.permute.xlu0 %3326
        %3328 = vrot.lane.b32.xlu0 %v2668, 64
        %v3329 = vpop.permute.xlu0 %3328
        %3330 = vrot.lane.b32.xlu0 %v2599, 64
        %v3331 = vpop.permute.xlu0 %3330
        %3332 = vrot.lane.b32.xlu0 %v2669, 64
        %v3333 = vpop.permute.xlu0 %3332
        %3334 = vrot.lane.b32.xlu0 %v2602, 64
        %v3335 = vpop.permute.xlu0 %3334
        %3336 = vrot.lane.b32.xlu0 %v2670, 64
        %v3337 = vpop.permute.xlu0 %3336
        %3338 = vrot.lane.b32.xlu0 %v2605, 64
        %v3339 = vpop.permute.xlu0 %3338
        %3340 = vrot.lane.b32.xlu0 %v2671, 64
        %v3341 = vpop.permute.xlu0 %3340
        %3342 = vrot.lane.b32.xlu0 %v2608, 64
        %v3343 = vpop.permute.xlu0 %3342
        %3374 = vrot.lane.b32.xlu0 %v2725, 96
        %v3375 = vpop.permute.xlu0 %3374
        %3376 = vrot.lane.b32.xlu0 %v2727, 96
        %v3377 = vpop.permute.xlu0 %3376
        %3378 = vrot.lane.b32.xlu0 %v2730, 96
        %v3379 = vpop.permute.xlu0 %3378
        %3380 = vrot.lane.b32.xlu0 %v2732, 96
        %v3381 = vpop.permute.xlu0 %3380
        %3382 = vrot.lane.b32.xlu0 %v2735, 96
        %v3383 = vpop.permute.xlu0 %3382
        %3384 = vrot.lane.b32.xlu0 %v2737, 96
        %v3385 = vpop.permute.xlu0 %3384
        %3386 = vrot.lane.b32.xlu0 %v2740, 96
        %v3387 = vpop.permute.xlu0 %3386
        %3388 = vrot.lane.b32.xlu0 %v2742, 96
        %v3389 = vpop.permute.xlu0 %3388
        %3390 = vrot.lane.b32.xlu0 %v2745, 96
        %v3391 = vpop.permute.xlu0 %3390
        %3392 = vrot.lane.b32.xlu0 %v2747, 96
        %v3393 = vpop.permute.xlu0 %3392
        %3394 = vrot.lane.b32.xlu0 %v2750, 96
        %v3395 = vpop.permute.xlu0 %3394
        %3396 = vrot.lane.b32.xlu0 %v2752, 96
        %v3397 = vpop.permute.xlu0 %3396
        %3398 = vrot.lane.b32.xlu0 %v2755, 96
        %v3399 = vpop.permute.xlu0 %3398
        %3400 = vrot.lane.b32.xlu0 %v2757, 96
        %v3401 = vpop.permute.xlu0 %3400
        %3402 = vrot.lane.b32.xlu0 %v2760, 96
        %v3403 = vpop.permute.xlu0 %3402
        %3404 = vrot.lane.b32.xlu0 %v2762, 96
        %v3405 = vpop.permute.xlu0 %3404
        %3406 = vrot.lane.b32.xlu0 %v2765, 96
        %v3407 = vpop.permute.xlu0 %3406
        %3408 = vrot.lane.b32.xlu0 %v2767, 96
        %v3409 = vpop.permute.xlu0 %3408
        %3410 = vrot.lane.b32.xlu0 %v2770, 96
        %v3411 = vpop.permute.xlu0 %3410
        %3412 = vrot.lane.b32.xlu0 %v2772, 96
        %v3413 = vpop.permute.xlu0 %3412
        %3414 = vrot.lane.b32.xlu0 %v2775, 96
        %v3415 = vpop.permute.xlu0 %3414
        %3416 = vrot.lane.b32.xlu0 %v2777, 96
        %v3417 = vpop.permute.xlu0 %3416
        %3418 = vrot.lane.b32.xlu0 %v2780, 96
        %v3419 = vpop.permute.xlu0 %3418
        %3420 = vrot.lane.b32.xlu0 %v2782, 96
        %v3421 = vpop.permute.xlu0 %3420
        %3422 = vrot.lane.b32.xlu0 %v2785, 96
        %v3423 = vpop.permute.xlu0 %3422
        %3424 = vrot.lane.b32.xlu0 %v2787, 96
        %v3425 = vpop.permute.xlu0 %3424
        %3426 = vrot.lane.b32.xlu0 %v2790, 96
        %v3427 = vpop.permute.xlu0 %3426
        %3428 = vrot.lane.b32.xlu0 %v2792, 96
        %v3429 = vpop.permute.xlu0 %3428
        %3430 = vrot.lane.b32.xlu0 %v3148, 96
        %v3431 = vpop.permute.xlu0 %3430
        %3432 = vrot.lane.b32.xlu0 %v3150, 96
        %v3433 = vpop.permute.xlu0 %3432
        %v3464 = vsel %vm255, %v2656, %v2794
        %v3465 = vsel %vm255, %v2563, %v2796
        %v3466 = vsel %vm255, %v2657, %v2798
        %v3467 = vsel %vm255, %v2566, %v2800
        %v3468 = vsel %vm255, %v2658, %v2802
        %v3469 = vsel %vm255, %v2569, %v2804
        %v3470 = vsel %vm255, %v2659, %v2806
        %v3471 = vsel %vm255, %v2572, %v2808
        %v3472 = vsel %vm255, %v2660, %v2810
        %v3473 = vsel %vm255, %v2575, %v2812
        %v3474 = vsel %vm255, %v2661, %v2814
        %v3475 = vsel %vm255, %v2578, %v2816
        %v3476 = vsel %vm255, %v2662, %v2818
        %v3477 = vsel %vm255, %v2581, %v2820
        %v3478 = vsel %vm255, %v2663, %v2822
        %v3479 = vsel %vm255, %v2584, %v2824
        %v3480 = vsel %vm255, %v2664, %v2826
        %v3481 = vsel %vm255, %v2587, %v2828
        %v3482 = vsel %vm255, %v2665, %v2830
        %v3483 = vsel %vm255, %v2590, %v2832
        %v3484 = vsel %vm255, %v2666, %v2834
        %v3485 = vsel %vm255, %v2593, %v2836
        %v3486 = vsel %vm255, %v2667, %v2838
        %v3487 = vsel %vm255, %v2596, %v2840
        %v3488 = vsel %vm255, %v2668, %v2842
        %v3489 = vsel %vm255, %v2599, %v2844
        %v3490 = vsel %vm255, %v2669, %v2846
        %v3491 = vsel %vm255, %v2602, %v2848
        %v3492 = vsel %vm255, %v2670, %v2850
        %v3493 = vsel %vm255, %v2605, %v2852
        %v3494 = vsel %vm1540, %v3464, %v2959
        %v3495 = vsel %vm1540, %v3465, %v2961
        %v3496 = vsel %vm1540, %v3466, %v2963
        %v3497 = vsel %vm1540, %v3467, %v2965
        %v3498 = vsel %vm1540, %v3468, %v2967
        %v3499 = vsel %vm1540, %v3469, %v2969
        %v3500 = vsel %vm1540, %v3470, %v2971
        %v3501 = vsel %vm1540, %v3471, %v2973
        %v3502 = vsel %vm1540, %v3472, %v2975
        %v3503 = vsel %vm1540, %v3473, %v2977
        %v3504 = vsel %vm1540, %v3474, %v2979
        %v3505 = vsel %vm1540, %v3475, %v2981
        %v3506 = vsel %vm1540, %v3476, %v2983
        %v3507 = vsel %vm1540, %v3477, %v2985
        %v3508 = vsel %vm1540, %v3478, %v2987
        %v3509 = vsel %vm1540, %v3479, %v2989
        %v3510 = vsel %vm1540, %v3480, %v2991
        %v3511 = vsel %vm1540, %v3481, %v2993
        %v3512 = vsel %vm1540, %v3482, %v2995
        %v3513 = vsel %vm1540, %v3483, %v2997
        %v3514 = vsel %vm1540, %v3484, %v2999
        %v3515 = vsel %vm1540, %v3485, %v3001
        %v3516 = vsel %vm1540, %v3486, %v3003
        %v3517 = vsel %vm1540, %v3487, %v3005
        %v3518 = vsel %vm1540, %v3488, %v3007
        %v3519 = vsel %vm1540, %v3489, %v3009
        %v3520 = vsel %vm1540, %v3490, %v3011
        %v3521 = vsel %vm1540, %v3491, %v3013
        %v3522 = vsel %vm1540, %v3492, %v3015
        %v3523 = vsel %vm1540, %v3493, %v3017
        %v3524 = vsel %vm1573, %v1541, %v3050
        %v3525 = vsel %vm1573, %v1542, %v3052
        %v3526 = vsel %vm1573, %v3494, %v3054
        %v3527 = vsel %vm1573, %v3495, %v3056
        %v3528 = vsel %vm1573, %v3496, %v3058
        %v3529 = vsel %vm1573, %v3497, %v3060
        %v3530 = vsel %vm1573, %v3498, %v3062
        %v3531 = vsel %vm1573, %v3499, %v3064
        %v3532 = vsel %vm1573, %v3500, %v3066
        %v3533 = vsel %vm1573, %v3501, %v3068
        %v3534 = vsel %vm1573, %v3502, %v3070
        %v3535 = vsel %vm1573, %v3503, %v3072
        %v3536 = vsel %vm1573, %v3504, %v3074
        %v3537 = vsel %vm1573, %v3505, %v3076
        %v3538 = vsel %vm1573, %v3506, %v3078
        %v3539 = vsel %vm1573, %v3507, %v3080
        %v3540 = vsel %vm1573, %v3508, %v3082
        %v3541 = vsel %vm1573, %v3509, %v3084
        %v3542 = vsel %vm1573, %v3510, %v3086
        %v3543 = vsel %vm1573, %v3511, %v3088
        %v3544 = vsel %vm1573, %v3512, %v3090
        %v3545 = vsel %vm1573, %v3513, %v3092
        %v3546 = vsel %vm1573, %v3514, %v3094
        %v3547 = vsel %vm1573, %v3515, %v3096
        %v3548 = vsel %vm1573, %v3516, %v3098
        %v3549 = vsel %vm1573, %v3517, %v3100
        %v3550 = vsel %vm1573, %v3518, %v3102
        %v3551 = vsel %vm1573, %v3519, %v3104
        %v3552 = vsel %vm1573, %v3520, %v3106
        %v3553 = vsel %vm1573, %v3521, %v3108
        %v3554 = vsel %vm1573, %v3522, %v3110
        %v3555 = vsel %vm1573, %v3523, %v3112
        %v3556 = vsel %vm255, %v2720, %v3189
        %v3557 = vsel %vm255, %v2722, %v3191
        %v3558 = vsel %vm255, %v2725, %v3193
        %v3559 = vsel %vm255, %v2727, %v3195
        %v3560 = vsel %vm255, %v2730, %v3197
        %v3561 = vsel %vm255, %v2732, %v3199
        %v3562 = vsel %vm255, %v2735, %v3201
        %v3563 = vsel %vm255, %v2737, %v3203
        %v3564 = vsel %vm255, %v2740, %v3205
        %v3565 = vsel %vm255, %v2742, %v3207
        %v3566 = vsel %vm255, %v2745, %v3209
        %v3567 = vsel %vm255, %v2747, %v3211
        %v3568 = vsel %vm255, %v2750, %v3213
        %v3569 = vsel %vm255, %v2752, %v3215
        %v3570 = vsel %vm255, %v2755, %v3217
        %v3571 = vsel %vm255, %v2757, %v3219
        %v3572 = vsel %vm255, %v2760, %v3221
        %v3573 = vsel %vm255, %v2762, %v3223
        %v3574 = vsel %vm255, %v2765, %v3225
        %v3575 = vsel %vm255, %v2767, %v3227
        %v3576 = vsel %vm255, %v2770, %v3229
        %v3577 = vsel %vm255, %v2772, %v3231
        %v3578 = vsel %vm255, %v2775, %v3233
        %v3579 = vsel %vm255, %v2777, %v3235
        %v3580 = vsel %vm255, %v2780, %v3237
        %v3581 = vsel %vm255, %v2782, %v3239
        %v3582 = vsel %vm255, %v2785, %v3241
        %v3583 = vsel %vm255, %v2787, %v3243
        %v3584 = vsel %vm255, %v2790, %v3245
        %v3585 = vsel %vm255, %v2792, %v3247
        %v3586 = vsel %vm255, %v3148, %v3249
        %v3587 = vsel %vm255, %v3150, %v3251
        %v3588 = vsel %vm1540, %v3556, %v3285
        %v3589 = vsel %vm1540, %v3557, %v3287
        %v3590 = vsel %vm1540, %v3558, %v3289
        %v3591 = vsel %vm1540, %v3559, %v3291
        %v3592 = vsel %vm1540, %v3560, %v3293
        %v3593 = vsel %vm1540, %v3561, %v3295
        %v3594 = vsel %vm1540, %v3562, %v3297
        %v3595 = vsel %vm1540, %v3563, %v3299
        %v3596 = vsel %vm1540, %v3564, %v3301
        %v3597 = vsel %vm1540, %v3565, %v3303
        %v3598 = vsel %vm1540, %v3566, %v3305
        %v3599 = vsel %vm1540, %v3567, %v3307
        %v3600 = vsel %vm1540, %v3568, %v3309
        %v3601 = vsel %vm1540, %v3569, %v3311
        %v3602 = vsel %vm1540, %v3570, %v3313
        %v3603 = vsel %vm1540, %v3571, %v3315
        %v3604 = vsel %vm1540, %v3572, %v3317
        %v3605 = vsel %vm1540, %v3573, %v3319
        %v3606 = vsel %vm1540, %v3574, %v3321
        %v3607 = vsel %vm1540, %v3575, %v3323
        %v3608 = vsel %vm1540, %v3576, %v3325
        %v3609 = vsel %vm1540, %v3577, %v3327
        %v3610 = vsel %vm1540, %v3578, %v3329
        %v3611 = vsel %vm1540, %v3579, %v3331
        %v3612 = vsel %vm1540, %v3580, %v3333
        %v3613 = vsel %vm1540, %v3581, %v3335
        %v3614 = vsel %vm1540, %v3582, %v3337
        %v3615 = vsel %vm1540, %v3583, %v3339
        %v3616 = vsel %vm1540, %v3584, %v3341
        %v3617 = vsel %vm1540, %v3585, %v3343
        %v3618 = vsel %vm1540, %v3586, %v1377
        %v3619 = vsel %vm1540, %v3587, %v1379
        %v3620 = vsel %vm1573, %v3588, %v3375
        %v3621 = vsel %vm1573, %v3589, %v3377
        %v3622 = vsel %vm1573, %v3590, %v3379
        %v3623 = vsel %vm1573, %v3591, %v3381
        %v3624 = vsel %vm1573, %v3592, %v3383
        %v3625 = vsel %vm1573, %v3593, %v3385
        %v3626 = vsel %vm1573, %v3594, %v3387
        %v3627 = vsel %vm1573, %v3595, %v3389
        %v3628 = vsel %vm1573, %v3596, %v3391
        %v3629 = vsel %vm1573, %v3597, %v3393
        %v3630 = vsel %vm1573, %v3598, %v3395
        %v3631 = vsel %vm1573, %v3599, %v3397
        %v3632 = vsel %vm1573, %v3600, %v3399
        %v3633 = vsel %vm1573, %v3601, %v3401
        %v3634 = vsel %vm1573, %v3602, %v3403
        %v3635 = vsel %vm1573, %v3603, %v3405
        %v3636 = vsel %vm1573, %v3604, %v3407
        %v3637 = vsel %vm1573, %v3605, %v3409
        %v3638 = vsel %vm1573, %v3606, %v3411
        %v3639 = vsel %vm1573, %v3607, %v3413
        %v3640 = vsel %vm1573, %v3608, %v3415
        %v3641 = vsel %vm1573, %v3609, %v3417
        %v3642 = vsel %vm1573, %v3610, %v3419
        %v3643 = vsel %vm1573, %v3611, %v3421
        %v3644 = vsel %vm1573, %v3612, %v3423
        %v3645 = vsel %vm1573, %v3613, %v3425
        %v3646 = vsel %vm1573, %v3614, %v3427
        %v3647 = vsel %vm1573, %v3615, %v3429
        %v3648 = vsel %vm1573, %v3616, %v3431
        %v3649 = vsel %vm1573, %v3617, %v3433
        %v3650 = vsel %vm1573, %v3618, %v1473
        %v3651 = vsel %vm1573, %v3619, %v1475
        %v3652 = vld [vmem:[%s3] sm:$0xff]
        %v3653 = vld [vmem:[%s3 + $0x8] sm:$0xff]
        %v3654 = vld [vmem:[%s3 + $0x10] sm:$0xff]
        %v3655 = vld [vmem:[%s3 + $0x18] sm:$0xff]
        %v3656 = vld [vmem:[%s3 + $0x20] sm:$0xff]
        %v3657 = vld [vmem:[%s3 + $0x28] sm:$0xff]
        %v3658 = vld [vmem:[%s3 + $0x30] sm:$0xff]
        %v3659 = vld [vmem:[%s3 + $0x38] sm:$0xff]
        %v3660 = vld [vmem:[%s3 + $0x40] sm:$0xff]
        %v3661 = vld [vmem:[%s3 + $0x48] sm:$0xff]
        %v3662 = vld [vmem:[%s3 + $0x50] sm:$0xff]
        %v3663 = vld [vmem:[%s3 + $0x58] sm:$0xff]
        %v3664 = vld [vmem:[%s3 + $0x60] sm:$0xff]
        %v3665 = vld [vmem:[%s3 + $0x68] sm:$0xff]
        %v3666 = vld [vmem:[%s3 + $0x70] sm:$0xff]
        %v3667 = vld [vmem:[%s3 + $0x78] sm:$0xff]
        %v3668 = vld [vmem:[%s3 + $0x80] sm:$0xff]
        %v3669 = vld [vmem:[%s3 + $0x88] sm:$0xff]
        %v3670 = vld [vmem:[%s3 + $0x90] sm:$0xff]
        %v3671 = vld [vmem:[%s3 + $0x98] sm:$0xff]
        %v3672 = vld [vmem:[%s3 + $0xa0] sm:$0xff]
        %v3673 = vld [vmem:[%s3 + $0xa8] sm:$0xff]
        %v3674 = vld [vmem:[%s3 + $0xb0] sm:$0xff]
        %v3675 = vld [vmem:[%s3 + $0xb8] sm:$0xff]
        %v3676 = vld [vmem:[%s3 + $0xc0] sm:$0xff]
        %v3677 = vld [vmem:[%s3 + $0xc8] sm:$0xff]
        %v3678 = vld [vmem:[%s3 + $0xd0] sm:$0xff]
        %v3679 = vld [vmem:[%s3 + $0xd8] sm:$0xff]
        %v3680 = vld [vmem:[%s3 + $0xe0] sm:$0xff]
        %v3681 = vld [vmem:[%s3 + $0xe8] sm:$0xff]
        %v3682 = vld [vmem:[%s3 + $0xf0] sm:$0xff]
        %v3683 = vld [vmem:[%s3 + $0xf8] sm:$0xff]
        %v3684 = vld [vmem:[%s3 + $0x100] sm:$0xff]
        %v3685 = vld [vmem:[%s3 + $0x108] sm:$0xff]
        %v3686 = vld [vmem:[%s3 + $0x110] sm:$0xff]
        %v3687 = vld [vmem:[%s3 + $0x118] sm:$0xff]
        %v3688 = vld [vmem:[%s4] sm:$0x1]
        %v3690 = vlaneseq
        %v3691 = vshrl.u32 %v3690, 7
        %v3692 = vsub.s32 0, %v3691
        %v3693 = vrot.slane %v3688, %v3692
        %v3695 = vsel %vm255, %v2890, 0
        %v3697 = vsel %vm255, %v2892, 0
        %v3699 = vsel %vm255, %v2895, 0
        %v3701 = vsel %vm255, %v2897, 0
        %v3703 = vsel %vm255, %v2900, 0
        %v3705 = vsel %vm255, %v2902, 0
        %v3707 = vsel %vm255, %v2905, 0
        %v3709 = vsel %vm255, %v2907, 0
        %v3711 = vsel %vm255, %v2910, 0
        %v3713 = vsel %vm255, %v2912, 0
        %v3715 = vsel %vm255, %v2915, 0
        %v3717 = vsel %vm255, %v2917, 0
        %v3719 = vsel %vm255, %v2920, 0
        %v3721 = vsel %vm255, %v2922, 0
        %v3723 = vsel %vm255, %v2925, 0
        %v3725 = vsel %vm255, %v2927, 0
        %v3727 = vsel %vm255, %v2930, 0
        %v3729 = vsel %vm255, %v2932, 0
        %v3731 = vsel %vm255, %v2935, 0
        %v3733 = vsel %vm255, %v2937, 0
        %v3735 = vsel %vm255, %v2940, 0
        %v3737 = vsel %vm255, %v2942, 0
        %v3739 = vsel %vm255, %v2945, 0
        %v3741 = vsel %vm255, %v2947, 0
        %v3743 = vsel %vm255, %v2950, 0
        %v3745 = vsel %vm255, %v2952, 0
        %v3747 = vsel %vm255, %v2955, 0
        %v3749 = vsel %vm255, %v2957, 0
        %v3751 = vsel %vm255, %v3185, 0
        %v3753 = vsel %vm255, %v3187, 0
        %3755 = vmatprep.subr.mxu0 0.0
        %3756 = vmatpush1.msra.mxu0 %v3667
        %3757 = vmatprep.subr.mxu0 0.0
        %3758 = vmatpush1.msra.mxu0 %v3666
        %3759 = vmatprep.subr.mxu0 0.0
        %3760 = vmatpush1.msra.mxu0 %v3665
        %3761 = vmatprep.subr.mxu0 0.0
        %3762 = vmatpush1.msra.mxu0 %v3664
        %3763 = vmatprep.subr.mxu0 0.0
        %3764 = vmatpush1.msra.mxu0 %v3663
        %3765 = vmatprep.subr.mxu0 0.0
        %3766 = vmatpush1.msra.mxu0 %v3662
        %3767 = vmatprep.subr.mxu0 0.0
        %3768 = vmatpush1.msra.mxu0 %v3661
        %3769 = vmatprep.subr.mxu0 0.0
        %3770 = vmatpush1.msra.mxu0 %v3660
        %3771 = vmatprep.subr.mxu0 0.0
        %3772 = vmatpush1.msra.mxu0 %v3659
        %3773 = vmatprep.subr.mxu0 0.0
        %3774 = vmatpush1.msra.mxu0 %v3658
        %3775 = vmatprep.subr.mxu0 0.0
        %3776 = vmatpush1.msra.mxu0 %v3657
        %3777 = vmatprep.subr.mxu0 0.0
        %3778 = vmatpush1.msra.mxu0 %v3656
        %3779 = vmatprep.subr.mxu0 0.0
        %3780 = vmatpush1.msra.mxu0 %v3655
        %3781 = vmatprep.subr.mxu0 0.0
        %3782 = vmatpush1.msra.mxu0 %v3654
        %3783 = vmatprep.subr.mxu0 0.0
        %3784 = vmatpush1.msra.mxu0 %v3653
        %3785 = vmatprep.subr.mxu0 0.0
        %3786 = vmatpush1.msra.mxu0 %v3652
        %3787 = vmatprep.subr.mxu0 0.0
        %3788 = vmatpush2.msra.mxu0 %v3683
        %3789 = vmatprep.subr.mxu0 0.0
        %3790 = vmatpush2.msra.mxu0 %v3682
        %3791 = vmatprep.subr.mxu0 0.0
        %3792 = vmatpush2.msra.mxu0 %v3681
        %3793 = vmatprep.subr.mxu0 0.0
        %3794 = vmatpush2.msra.mxu0 %v3680
        %3795 = vmatprep.subr.mxu0 0.0
        %3796 = vmatpush2.msra.mxu0 %v3679
        %3797 = vmatprep.subr.mxu0 0.0
        %3798 = vmatpush2.msra.mxu0 %v3678
        %3799 = vmatprep.subr.mxu0 0.0
        %3800 = vmatpush2.msra.mxu0 %v3677
        %3801 = vmatprep.subr.mxu0 0.0
        %3802 = vmatpush2.msra.mxu0 %v3676
        %3803 = vmatprep.subr.mxu0 0.0
        %3804 = vmatpush2.msra.mxu0 %v3675
        %3805 = vmatprep.subr.mxu0 0.0
        %3806 = vmatpush2.msra.mxu0 %v3674
        %3807 = vmatprep.subr.mxu0 0.0
        %3808 = vmatpush2.msra.mxu0 %v3673
        %3809 = vmatprep.subr.mxu0 0.0
        %3810 = vmatpush2.msra.mxu0 %v3672
        %3811 = vmatprep.subr.mxu0 0.0
        %3812 = vmatpush2.msra.mxu0 %v3671
        %3813 = vmatprep.subr.mxu0 0.0
        %3814 = vmatpush2.msra.mxu0 %v3670
        %3815 = vmatprep.subr.mxu0 0.0
        %3816 = vmatpush2.msra.mxu0 %v3669
        %3817 = vmatprep.subr.mxu0 0.0
        %3818 = vmatpush2.msra.mxu0 %v3668
        %3819 = vmatprep.mubr.f32.mxu0 %v3620
        %3820 = vmatmul.mubr.f32.gmra.mxu0 %v3524
        %v3821 = vpop.f32.mrf.mxu0
        %v3822 = vadd.f32 %v3693, %v3821
        %v3823 = vpop.f32.mrf.mxu0
        %3824 = vmatprep.mubr.f32.mxu0 %v3621
        %3825 = vmatmul.mubr.f32.gmra.mxu0 %v3525
        %v3826 = vpop.f32.mrf.mxu0
        %v3827 = vadd.f32 %v3693, %v3826
        %v3828 = vpop.f32.mrf.mxu0
        %3829 = vmatprep.mubr.f32.mxu0 %v3622
        %3830 = vmatmul.mubr.f32.gmra.mxu0 %v3526
        %v3831 = vpop.f32.mrf.mxu0
        %v3832 = vadd.f32 %v3693, %v3831
        %v3833 = vpop.f32.mrf.mxu0
        %3834 = vmatprep.mubr.f32.mxu0 %v3623
        %3835 = vmatmul.mubr.f32.gmra.mxu0 %v3527
        %v3836 = vpop.f32.mrf.mxu0
        %v3837 = vadd.f32 %v3693, %v3836
        %v3838 = vpop.f32.mrf.mxu0
        %3839 = vmatprep.mubr.f32.mxu0 %v3624
        %3840 = vmatmul.mubr.f32.gmra.mxu0 %v3528
        %v3841 = vpop.f32.mrf.mxu0
        %v3842 = vadd.f32 %v3693, %v3841
        %v3843 = vpop.f32.mrf.mxu0
        %3844 = vmatprep.mubr.f32.mxu0 %v3625
        %3845 = vmatmul.mubr.f32.gmra.mxu0 %v3529
        %v3846 = vpop.f32.mrf.mxu0
        %v3847 = vadd.f32 %v3693, %v3846
        %v3848 = vpop.f32.mrf.mxu0
        %3849 = vmatprep.mubr.f32.mxu0 %v3626
        %3850 = vmatmul.mubr.f32.gmra.mxu0 %v3530
        %v3851 = vpop.f32.mrf.mxu0
        %v3852 = vadd.f32 %v3693, %v3851
        %v3853 = vpop.f32.mrf.mxu0
        %3854 = vmatprep.mubr.f32.mxu0 %v3627
        %3855 = vmatmul.mubr.f32.gmra.mxu0 %v3531
        %v3856 = vpop.f32.mrf.mxu0
        %v3857 = vadd.f32 %v3693, %v3856
        %v3858 = vpop.f32.mrf.mxu0
        %3859 = vmatprep.mubr.f32.mxu0 %v3628
        %3860 = vmatmul.mubr.f32.gmra.mxu0 %v3532
        %v3861 = vpop.f32.mrf.mxu0
        %v3862 = vadd.f32 %v3693, %v3861
        %v3863 = vpop.f32.mrf.mxu0
        %3864 = vmatprep.mubr.f32.mxu0 %v3629
        %3865 = vmatmul.mubr.f32.gmra.mxu0 %v3533
        %v3866 = vpop.f32.mrf.mxu0
        %v3867 = vadd.f32 %v3693, %v3866
        %v3868 = vpop.f32.mrf.mxu0
        %3869 = vmatprep.mubr.f32.mxu0 %v3630
        %3870 = vmatmul.mubr.f32.gmra.mxu0 %v3534
        %v3871 = vpop.f32.mrf.mxu0
        %v3872 = vadd.f32 %v3693, %v3871
        %v3873 = vpop.f32.mrf.mxu0
        %3874 = vmatprep.mubr.f32.mxu0 %v3631
        %3875 = vmatmul.mubr.f32.gmra.mxu0 %v3535
        %v3876 = vpop.f32.mrf.mxu0
        %v3877 = vadd.f32 %v3693, %v3876
        %v3878 = vpop.f32.mrf.mxu0
        %3879 = vmatprep.mubr.f32.mxu0 %v3632
        %3880 = vmatmul.mubr.f32.gmra.mxu0 %v3536
        %v3881 = vpop.f32.mrf.mxu0
        %v3882 = vadd.f32 %v3693, %v3881
        %v3883 = vpop.f32.mrf.mxu0
        %3884 = vmatprep.mubr.f32.mxu0 %v3633
        %3885 = vmatmul.mubr.f32.gmra.mxu0 %v3537
        %v3886 = vpop.f32.mrf.mxu0
        %v3887 = vadd.f32 %v3693, %v3886
        %v3888 = vpop.f32.mrf.mxu0
        %3889 = vmatprep.mubr.f32.mxu0 %v3634
        %3890 = vmatmul.mubr.f32.gmra.mxu0 %v3538
        %v3891 = vpop.f32.mrf.mxu0
        %v3892 = vadd.f32 %v3693, %v3891
        %v3893 = vpop.f32.mrf.mxu0
        %3894 = vmatprep.mubr.f32.mxu0 %v3635
        %3895 = vmatmul.mubr.f32.gmra.mxu0 %v3539
        %v3896 = vpop.f32.mrf.mxu0
        %v3897 = vadd.f32 %v3693, %v3896
        %v3898 = vpop.f32.mrf.mxu0
        %3899 = vmatprep.mubr.f32.mxu0 %v3636
        %3900 = vmatmul.mubr.f32.gmra.mxu0 %v3540
        %v3901 = vpop.f32.mrf.mxu0
        %v3902 = vadd.f32 %v3693, %v3901
        %v3903 = vpop.f32.mrf.mxu0
        %3904 = vmatprep.mubr.f32.mxu0 %v3637
        %3905 = vmatmul.mubr.f32.gmra.mxu0 %v3541
        %v3906 = vpop.f32.mrf.mxu0
        %v3907 = vadd.f32 %v3693, %v3906
        %v3908 = vpop.f32.mrf.mxu0
        %3909 = vmatprep.mubr.f32.mxu0 %v3638
        %3910 = vmatmul.mubr.f32.gmra.mxu0 %v3542
        %v3911 = vpop.f32.mrf.mxu0
        %v3912 = vadd.f32 %v3693, %v3911
        %v3913 = vpop.f32.mrf.mxu0
        %3914 = vmatprep.mubr.f32.mxu0 %v3639
        %3915 = vmatmul.mubr.f32.gmra.mxu0 %v3543
        %v3916 = vpop.f32.mrf.mxu0
        %v3917 = vadd.f32 %v3693, %v3916
        %v3918 = vpop.f32.mrf.mxu0
        %3919 = vmatprep.mubr.f32.mxu0 %v3640
        %3920 = vmatmul.mubr.f32.gmra.mxu0 %v3544
        %v3921 = vpop.f32.mrf.mxu0
        %v3922 = vadd.f32 %v3693, %v3921
        %v3923 = vpop.f32.mrf.mxu0
        %3924 = vmatprep.mubr.f32.mxu0 %v3641
        %3925 = vmatmul.mubr.f32.gmra.mxu0 %v3545
        %v3926 = vpop.f32.mrf.mxu0
        %v3927 = vadd.f32 %v3693, %v3926
        %v3928 = vpop.f32.mrf.mxu0
        %3929 = vmatprep.mubr.f32.mxu0 %v3642
        %3930 = vmatmul.mubr.f32.gmra.mxu0 %v3546
        %v3931 = vpop.f32.mrf.mxu0
        %v3932 = vadd.f32 %v3693, %v3931
        %v3933 = vpop.f32.mrf.mxu0
        %3934 = vmatprep.mubr.f32.mxu0 %v3643
        %3935 = vmatmul.mubr.f32.gmra.mxu0 %v3547
        %v3936 = vpop.f32.mrf.mxu0
        %v3937 = vadd.f32 %v3693, %v3936
        %v3938 = vpop.f32.mrf.mxu0
        %3939 = vmatprep.mubr.f32.mxu0 %v3644
        %3940 = vmatmul.mubr.f32.gmra.mxu0 %v3548
        %v3941 = vpop.f32.mrf.mxu0
        %v3942 = vadd.f32 %v3693, %v3941
        %v3943 = vpop.f32.mrf.mxu0
        %3944 = vmatprep.mubr.f32.mxu0 %v3645
        %3945 = vmatmul.mubr.f32.gmra.mxu0 %v3549
        %v3946 = vpop.f32.mrf.mxu0
        %v3947 = vadd.f32 %v3693, %v3946
        %v3948 = vpop.f32.mrf.mxu0
        %3949 = vmatprep.mubr.f32.mxu0 %v3646
        %3950 = vmatmul.mubr.f32.gmra.mxu0 %v3550
        %v3951 = vpop.f32.mrf.mxu0
        %v3952 = vadd.f32 %v3693, %v3951
        %v3953 = vpop.f32.mrf.mxu0
        %3954 = vmatprep.mubr.f32.mxu0 %v3647
        %3955 = vmatmul.mubr.f32.gmra.mxu0 %v3551
        %v3956 = vpop.f32.mrf.mxu0
        %v3957 = vadd.f32 %v3693, %v3956
        %v3958 = vpop.f32.mrf.mxu0
        %3959 = vmatprep.mubr.f32.mxu0 %v3648
        %3960 = vmatmul.mubr.f32.gmra.mxu0 %v3552
        %v3961 = vpop.f32.mrf.mxu0
        %v3962 = vadd.f32 %v3693, %v3961
        %v3963 = vpop.f32.mrf.mxu0
        %3964 = vmatprep.mubr.f32.mxu0 %v3649
        %3965 = vmatmul.mubr.f32.gmra.mxu0 %v3553
        %v3966 = vpop.f32.mrf.mxu0
        %v3967 = vadd.f32 %v3693, %v3966
        %v3968 = vpop.f32.mrf.mxu0
        %3969 = vmatprep.mubr.f32.mxu0 %v3650
        %3970 = vmatmul.mubr.f32.gmra.mxu0 %v3554
        %v3971 = vpop.f32.mrf.mxu0
        %v3972 = vadd.f32 %v3693, %v3971
        %v3973 = vpop.f32.mrf.mxu0
        %3974 = vmatprep.mubr.f32.mxu0 %v3651
        %3975 = vmatmul.mubr.f32.gmra.mxu0 %v3555
        %v3976 = vpop.f32.mrf.mxu0
        %v3977 = vadd.f32 %v3693, %v3976
        %v3978 = vpop.f32.mrf.mxu0
        %3979 = vdwg.mxu0
        %3980 = vmatprep.subr.mxu0 0.0
        %3981 = vmatpush1.msra.mxu0 0.0
        %3982 = vmatprep.subr.mxu0 0.0
        %3983 = vmatpush1.msra.mxu0 0.0
        %3984 = vmatprep.subr.mxu0 0.0
        %3985 = vmatpush1.msra.mxu0 0.0
        %3986 = vmatprep.subr.mxu0 0.0
        %3987 = vmatpush1.msra.mxu0 0.0
        %3988 = vmatprep.subr.mxu0 0.0
        %3989 = vmatpush1.msra.mxu0 0.0
        %3990 = vmatprep.subr.mxu0 0.0
        %3991 = vmatpush1.msra.mxu0 0.0
        %3992 = vmatprep.subr.mxu0 0.0
        %3993 = vmatpush1.msra.mxu0 0.0
        %3994 = vmatprep.subr.mxu0 0.0
        %3995 = vmatpush1.msra.mxu0 0.0
        %3996 = vmatprep.subr.mxu0 0.0
        %3997 = vmatpush1.msra.mxu0 0.0
        %3998 = vmatprep.subr.mxu0 0.0
        %3999 = vmatpush1.msra.mxu0 0.0
        %4000 = vmatprep.subr.mxu0 0.0
        %4001 = vmatpush1.msra.mxu0 0.0
        %4002 = vmatprep.subr.mxu0 0.0
        %4003 = vmatpush1.msra.mxu0 0.0
        %4004 = vmatprep.subr.mxu0 0.0
        %4005 = vmatpush1.msra.mxu0 %v3687
        %4006 = vmatprep.subr.mxu0 0.0
        %4007 = vmatpush1.msra.mxu0 %v3686
        %4008 = vmatprep.subr.mxu0 0.0
        %4009 = vmatpush1.msra.mxu0 %v3685
        %4010 = vmatprep.subr.mxu0 0.0
        %4011 = vmatpush1.msra.mxu0 %v3684
        %4012 = vmatprep.subr.mxu0 0.0
        %4013 = vmatpush2.msra.mxu0 0.0
        %4014 = vmatprep.subr.mxu0 0.0
        %4015 = vmatpush2.msra.mxu0 0.0
        %4016 = vmatprep.subr.mxu0 0.0
        %4017 = vmatpush2.msra.mxu0 0.0
        %4018 = vmatprep.subr.mxu0 0.0
        %4019 = vmatpush2.msra.mxu0 0.0
        %4020 = vmatprep.subr.mxu0 0.0
        %4021 = vmatpush2.msra.mxu0 0.0
        %4022 = vmatprep.subr.mxu0 0.0
        %4023 = vmatpush2.msra.mxu0 0.0
        %4024 = vmatprep.subr.mxu0 0.0
        %4025 = vmatpush2.msra.mxu0 0.0
        %4026 = vmatprep.subr.mxu0 0.0
        %4027 = vmatpush2.msra.mxu0 0.0
        %4028 = vmatprep.subr.mxu0 0.0
        %4029 = vmatpush2.msra.mxu0 0.0
        %4030 = vmatprep.subr.mxu0 0.0
        %4031 = vmatpush2.msra.mxu0 0.0
        %4032 = vmatprep.subr.mxu0 0.0
        %4033 = vmatpush2.msra.mxu0 0.0
        %4034 = vmatprep.subr.mxu0 0.0
        %4035 = vmatpush2.msra.mxu0 0.0
        %4036 = vmatprep.subr.mxu0 0.0
        %4037 = vmatpush2.msra.mxu0 0.0
        %4038 = vmatprep.subr.mxu0 0.0
        %4039 = vmatpush2.msra.mxu0 0.0
        %4040 = vmatprep.subr.mxu0 0.0
        %4041 = vmatpush2.msra.mxu0 0.0
        %4042 = vmatprep.subr.mxu0 0.0
        %4043 = vmatpush2.msra.mxu0 0.0
        %4044 = vmatprep.mubr.f32.mxu0 0.0
        %4045 = vmatmul.mubr.f32.gmra.mxu0 %v3695
        %v4046 = vpop.f32.mrf.mxu0
        %v4047 = vadd.f32 %v3822, %v4046
        %v4048 = vpop.f32.mrf.mxu0
        %4049 = vmatprep.mubr.f32.mxu0 0.0
        %4050 = vmatmul.mubr.f32.gmra.mxu0 %v3697
        %v4051 = vpop.f32.mrf.mxu0
        %v4052 = vadd.f32 %v3827, %v4051
        %v4053 = vpop.f32.mrf.mxu0
        %4054 = vmatprep.mubr.f32.mxu0 0.0
        %4055 = vmatmul.mubr.f32.gmra.mxu0 %v3699
        %v4056 = vpop.f32.mrf.mxu0
        %v4057 = vadd.f32 %v3832, %v4056
        %v4058 = vpop.f32.mrf.mxu0
        %4059 = vmatprep.mubr.f32.mxu0 0.0
        %4060 = vmatmul.mubr.f32.gmra.mxu0 %v3701
        %v4061 = vpop.f32.mrf.mxu0
        %v4062 = vadd.f32 %v3837, %v4061
        %v4063 = vpop.f32.mrf.mxu0
        %4064 = vmatprep.mubr.f32.mxu0 0.0
        %4065 = vmatmul.mubr.f32.gmra.mxu0 %v3703
        %v4066 = vpop.f32.mrf.mxu0
        %v4067 = vadd.f32 %v3842, %v4066
        %v4068 = vpop.f32.mrf.mxu0
        %4069 = vmatprep.mubr.f32.mxu0 0.0
        %4070 = vmatmul.mubr.f32.gmra.mxu0 %v3705
        %v4071 = vpop.f32.mrf.mxu0
        %v4072 = vadd.f32 %v3847, %v4071
        %v4073 = vpop.f32.mrf.mxu0
        %4074 = vmatprep.mubr.f32.mxu0 0.0
        %4075 = vmatmul.mubr.f32.gmra.mxu0 %v3707
        %v4076 = vpop.f32.mrf.mxu0
        %v4077 = vadd.f32 %v3852, %v4076
        %v4078 = vpop.f32.mrf.mxu0
        %4079 = vmatprep.mubr.f32.mxu0 0.0
        %4080 = vmatmul.mubr.f32.gmra.mxu0 %v3709
        %v4081 = vpop.f32.mrf.mxu0
        %v4082 = vadd.f32 %v3857, %v4081
        %v4083 = vpop.f32.mrf.mxu0
        %4084 = vmatprep.mubr.f32.mxu0 0.0
        %4085 = vmatmul.mubr.f32.gmra.mxu0 %v3711
        %v4086 = vpop.f32.mrf.mxu0
        %v4087 = vadd.f32 %v3862, %v4086
        %v4088 = vpop.f32.mrf.mxu0
        %4089 = vmatprep.mubr.f32.mxu0 0.0
        %4090 = vmatmul.mubr.f32.gmra.mxu0 %v3713
        %v4091 = vpop.f32.mrf.mxu0
        %v4092 = vadd.f32 %v3867, %v4091
        %v4093 = vpop.f32.mrf.mxu0
        %4094 = vmatprep.mubr.f32.mxu0 0.0
        %4095 = vmatmul.mubr.f32.gmra.mxu0 %v3715
        %v4096 = vpop.f32.mrf.mxu0
        %v4097 = vadd.f32 %v3872, %v4096
        %v4098 = vpop.f32.mrf.mxu0
        %4099 = vmatprep.mubr.f32.mxu0 0.0
        %4100 = vmatmul.mubr.f32.gmra.mxu0 %v3717
        %v4101 = vpop.f32.mrf.mxu0
        %v4102 = vadd.f32 %v3877, %v4101
        %v4103 = vpop.f32.mrf.mxu0
        %4104 = vmatprep.mubr.f32.mxu0 0.0
        %4105 = vmatmul.mubr.f32.gmra.mxu0 %v3719
        %v4106 = vpop.f32.mrf.mxu0
        %v4107 = vadd.f32 %v3882, %v4106
        %v4108 = vpop.f32.mrf.mxu0
        %4109 = vmatprep.mubr.f32.mxu0 0.0
        %4110 = vmatmul.mubr.f32.gmra.mxu0 %v3721
        %v4111 = vpop.f32.mrf.mxu0
        %v4112 = vadd.f32 %v3887, %v4111
        %v4113 = vpop.f32.mrf.mxu0
        %4114 = vmatprep.mubr.f32.mxu0 0.0
        %4115 = vmatmul.mubr.f32.gmra.mxu0 %v3723
        %v4116 = vpop.f32.mrf.mxu0
        %v4117 = vadd.f32 %v3892, %v4116
        %v4118 = vpop.f32.mrf.mxu0
        %4119 = vmatprep.mubr.f32.mxu0 0.0
        %4120 = vmatmul.mubr.f32.gmra.mxu0 %v3725
        %v4121 = vpop.f32.mrf.mxu0
        %v4122 = vadd.f32 %v3897, %v4121
        %v4123 = vpop.f32.mrf.mxu0
        %4124 = vmatprep.mubr.f32.mxu0 0.0
        %4125 = vmatmul.mubr.f32.gmra.mxu0 %v3727
        %v4126 = vpop.f32.mrf.mxu0
        %v4127 = vadd.f32 %v3902, %v4126
        %v4128 = vpop.f32.mrf.mxu0
        %4129 = vmatprep.mubr.f32.mxu0 0.0
        %4130 = vmatmul.mubr.f32.gmra.mxu0 %v3729
        %v4131 = vpop.f32.mrf.mxu0
        %v4132 = vadd.f32 %v3907, %v4131
        %v4133 = vpop.f32.mrf.mxu0
        %4134 = vmatprep.mubr.f32.mxu0 0.0
        %4135 = vmatmul.mubr.f32.gmra.mxu0 %v3731
        %v4136 = vpop.f32.mrf.mxu0
        %v4137 = vadd.f32 %v3912, %v4136
        %v4138 = vpop.f32.mrf.mxu0
        %4139 = vmatprep.mubr.f32.mxu0 0.0
        %4140 = vmatmul.mubr.f32.gmra.mxu0 %v3733
        %v4141 = vpop.f32.mrf.mxu0
        %v4142 = vadd.f32 %v3917, %v4141
        %v4143 = vpop.f32.mrf.mxu0
        %4144 = vmatprep.mubr.f32.mxu0 0.0
        %4145 = vmatmul.mubr.f32.gmra.mxu0 %v3735
        %v4146 = vpop.f32.mrf.mxu0
        %v4147 = vadd.f32 %v3922, %v4146
        %v4148 = vpop.f32.mrf.mxu0
        %4149 = vmatprep.mubr.f32.mxu0 0.0
        %4150 = vmatmul.mubr.f32.gmra.mxu0 %v3737
        %v4151 = vpop.f32.mrf.mxu0
        %v4152 = vadd.f32 %v3927, %v4151
        %v4153 = vpop.f32.mrf.mxu0
        %4154 = vmatprep.mubr.f32.mxu0 0.0
        %4155 = vmatmul.mubr.f32.gmra.mxu0 %v3739
        %v4156 = vpop.f32.mrf.mxu0
        %v4157 = vadd.f32 %v3932, %v4156
        %v4158 = vpop.f32.mrf.mxu0
        %4159 = vmatprep.mubr.f32.mxu0 0.0
        %4160 = vmatmul.mubr.f32.gmra.mxu0 %v3741
        %v4161 = vpop.f32.mrf.mxu0
        %v4162 = vadd.f32 %v3937, %v4161
        %v4163 = vpop.f32.mrf.mxu0
        %4164 = vmatprep.mubr.f32.mxu0 0.0
        %4165 = vmatmul.mubr.f32.gmra.mxu0 %v3743
        %v4166 = vpop.f32.mrf.mxu0
        %v4167 = vadd.f32 %v3942, %v4166
        %v4168 = vpop.f32.mrf.mxu0
        %4169 = vmatprep.mubr.f32.mxu0 0.0
        %4170 = vmatmul.mubr.f32.gmra.mxu0 %v3745
        %v4171 = vpop.f32.mrf.mxu0
        %v4172 = vadd.f32 %v3947, %v4171
        %v4173 = vpop.f32.mrf.mxu0
        %4174 = vmatprep.mubr.f32.mxu0 0.0
        %4175 = vmatmul.mubr.f32.gmra.mxu0 %v3747
        %v4176 = vpop.f32.mrf.mxu0
        %v4177 = vadd.f32 %v3952, %v4176
        %v4178 = vpop.f32.mrf.mxu0
        %4179 = vmatprep.mubr.f32.mxu0 0.0
        %4180 = vmatmul.mubr.f32.gmra.mxu0 %v3749
        %v4181 = vpop.f32.mrf.mxu0
        %v4182 = vadd.f32 %v3957, %v4181
        %v4183 = vpop.f32.mrf.mxu0
        %4184 = vmatprep.mubr.f32.mxu0 0.0
        %4185 = vmatmul.mubr.f32.gmra.mxu0 %v3751
        %v4186 = vpop.f32.mrf.mxu0
        %v4187 = vadd.f32 %v3962, %v4186
        %v4188 = vpop.f32.mrf.mxu0
        %4189 = vmatprep.mubr.f32.mxu0 0.0
        %4190 = vmatmul.mubr.f32.gmra.mxu0 %v3753
        %v4191 = vpop.f32.mrf.mxu0
        %v4192 = vadd.f32 %v3967, %v4191
        %v4193 = vpop.f32.mrf.mxu0
        %4194 = vmatprep.mubr.f32.mxu0 0.0
        %4195 = vmatmul.mubr.f32.gmra.mxu0 %v1805
        %v4196 = vpop.f32.mrf.mxu0
        %v4197 = vadd.f32 %v3972, %v4196
        %v4198 = vpop.f32.mrf.mxu0
        %4199 = vmatprep.mubr.f32.mxu0 0.0
        %4200 = vmatmul.mubr.f32.gmra.mxu0 %v1807
        %v4201 = vpop.f32.mrf.mxu0
        %v4202 = vadd.f32 %v3977, %v4201
        %v4203 = vpop.f32.mrf.mxu0
        %4204 = vdwg.mxu0
        %v4205 = vadd.f32 %v4047, %v223
        %v4206 = vadd.f32 %v4052, %v224
        %v4207 = vadd.f32 %v4057, %v225
        %v4208 = vadd.f32 %v4062, %v226
        %v4209 = vadd.f32 %v4067, %v227
        %v4210 = vadd.f32 %v4072, %v228
        %v4211 = vadd.f32 %v4077, %v229
        %v4212 = vadd.f32 %v4082, %v230
        %v4213 = vadd.f32 %v4087, %v231
        %v4214 = vadd.f32 %v4092, %v232
        %v4215 = vadd.f32 %v4097, %v233
        %v4216 = vadd.f32 %v4102, %v234
        %v4217 = vadd.f32 %v4107, %v235
        %v4218 = vadd.f32 %v4112, %v236
        %v4219 = vadd.f32 %v4117, %v237
        %v4220 = vadd.f32 %v4122, %v238
        %v4221 = vadd.f32 %v4127, %v239
        %v4222 = vadd.f32 %v4132, %v240
        %v4223 = vadd.f32 %v4137, %v241
        %v4224 = vadd.f32 %v4142, %v242
        %v4225 = vadd.f32 %v4147, %v243
        %v4226 = vadd.f32 %v4152, %v244
        %v4227 = vadd.f32 %v4157, %v245
        %v4228 = vadd.f32 %v4162, %v246
        %v4229 = vadd.f32 %v4167, %v247
        %v4230 = vadd.f32 %v4172, %v248
        %v4231 = vadd.f32 %v4177, %v249
        %v4232 = vadd.f32 %v4182, %v250
        %v4233 = vadd.f32 %v4187, %v251
        %v4234 = vadd.f32 %v4192, %v252
        %v4235 = vadd.f32 %v4197, %v253
        %v4236 = vadd.f32 %v4202, %v254
        %4237 = vst.msk [vmem:[%s217] sm:$0xff] %vm255, %v4205
        %4238 = vst.msk [vmem:[%s217 + $0x8] sm:$0xff] %vm255, %v4206
        %4239 = vst.msk [vmem:[%s217 + $0x10] sm:$0xff] %vm255, %v4207
        %4240 = vst.msk [vmem:[%s217 + $0x18] sm:$0xff] %vm255, %v4208
        %4241 = vst.msk [vmem:[%s217 + $0x20] sm:$0xff] %vm255, %v4209
        %4242 = vst.msk [vmem:[%s217 + $0x28] sm:$0xff] %vm255, %v4210
        %4243 = vst.msk [vmem:[%s217 + $0x30] sm:$0xff] %vm255, %v4211
        %4244 = vst.msk [vmem:[%s217 + $0x38] sm:$0xff] %vm255, %v4212
        %4245 = vst.msk [vmem:[%s217 + $0x40] sm:$0xff] %vm255, %v4213
        %4246 = vst.msk [vmem:[%s217 + $0x48] sm:$0xff] %vm255, %v4214
        %4247 = vst.msk [vmem:[%s217 + $0x50] sm:$0xff] %vm255, %v4215
        %4248 = vst.msk [vmem:[%s217 + $0x58] sm:$0xff] %vm255, %v4216
        %4249 = vst.msk [vmem:[%s217 + $0x60] sm:$0xff] %vm255, %v4217
        %4250 = vst.msk [vmem:[%s217 + $0x68] sm:$0xff] %vm255, %v4218
        %4251 = vst.msk [vmem:[%s217 + $0x70] sm:$0xff] %vm255, %v4219
        %4252 = vst.msk [vmem:[%s217 + $0x78] sm:$0xff] %vm255, %v4220
        %4253 = vst.msk [vmem:[%s217 + $0x80] sm:$0xff] %vm255, %v4221
        %4254 = vst.msk [vmem:[%s217 + $0x88] sm:$0xff] %vm255, %v4222
        %4255 = vst.msk [vmem:[%s217 + $0x90] sm:$0xff] %vm255, %v4223
        %4256 = vst.msk [vmem:[%s217 + $0x98] sm:$0xff] %vm255, %v4224
        %4257 = vst.msk [vmem:[%s217 + $0xa0] sm:$0xff] %vm255, %v4225
        %4258 = vst.msk [vmem:[%s217 + $0xa8] sm:$0xff] %vm255, %v4226
        %4259 = vst.msk [vmem:[%s217 + $0xb0] sm:$0xff] %vm255, %v4227
        %4260 = vst.msk [vmem:[%s217 + $0xb8] sm:$0xff] %vm255, %v4228
        %4261 = vst.msk [vmem:[%s217 + $0xc0] sm:$0xff] %vm255, %v4229
        %4262 = vst.msk [vmem:[%s217 + $0xc8] sm:$0xff] %vm255, %v4230
        %4263 = vst.msk [vmem:[%s217 + $0xd0] sm:$0xff] %vm255, %v4231
        %4264 = vst.msk [vmem:[%s217 + $0xd8] sm:$0xff] %vm255, %v4232
        %4265 = vst.msk [vmem:[%s217 + $0xe0] sm:$0xff] %vm255, %v4233
        %4266 = vst.msk [vmem:[%s217 + $0xe8] sm:$0xff] %vm255, %v4234
        %4267 = vst.msk [vmem:[%s217 + $0xf0] sm:$0xff] %vm255, %v4235
        %4268 = vst.msk [vmem:[%s217 + $0xf8] sm:$0xff] %vm255, %v4236
        %s4269 = sand.u32 %s137, 1
        %s4270 = scalar_lea.sflag [#allocation3], %s4269
        %s4271 = sand.u32 %s137, 1
        %s4272 = smul.addr %s4271, 256
        %s4273 = scalar_lea.vmem [#allocation2], %s4272
        // Predicated region
        $region41: #{tpu_custom_call.1} parent=39 // pred_check
          %p4274 = pneg %p147
        $region42: #{tpu_custom_call.1} parent=39 // pred_check_branch
          %4276 = sbr.rel (%p4274) target = $region44
        $region43: #{tpu_custom_call.1} parent=39 // pred_region
          %s4278 = ssub.s32 4096, 4096
          %4279 = vsyncadd %s4270, %s4278
          %s4280 = smul.addr %s19, 32
          %s4281 = smul.addr %s4280, 128
          %s4282 = scalar_lea.hbm %s5, %s4281
          %s4283 = sshll.u32 %s4273, 4
          %s4284 = int_to_ptr.vmem [resolvable:$true] %s4283
          %4289 = dma.vmem_to_hbm [thread:$0]  %s4284, 4096, %s4282, %s4270, 128, 128, 8
        $region44: #{tpu_custom_call.1} parent=39 // pred_fallthru
          _
      $region40: #{tpu_custom_call.1} parent=5 // pred_fallthru
        _
      %p4290 = scmp.le.s32.totalorder 2, %s14
      // Predicated region
      $region45: #{tpu_custom_call.1} parent=5 // pred_check
        %p4291 = pneg %p4290
      $region46: #{tpu_custom_call.1} parent=5 // pred_check_branch
        %4293 = sbr.rel (%p4291) target = $region48
      $region47: #{tpu_custom_call.1} parent=5 // pred_region
        %s4294 = ssub.s32 %s14, 2
        // Predicated region
        $region49: #{tpu_custom_call.1} parent=47 // pred_check
          %p4295 = pneg %p153
        $region50: #{tpu_custom_call.1} parent=47 // pred_check_branch
          %4297 = sbr.rel (%p4295) target = $region52
        $region51: #{tpu_custom_call.1} parent=47 // pred_region
          %s4298 = sand.u32 %s138, 1
          %s4299 = scalar_lea.sflag [#allocation3], %s4298
          %s4300 = sand.u32 %s138, 1
          %s4301 = smul.addr %s4300, 256
          %s4302 = scalar_lea.vmem [#allocation2], %s4301
          %4303 = dma.done %s4299, 4096
        $region52: #{tpu_custom_call.1} parent=47 // pred_fallthru
          _
      $region48: #{tpu_custom_call.1} parent=5 // pred_fallthru
        _
    $region6: #{tpu_custom_call.1} parent=1 // loop_footer
      %s18 = sadd.s32 1, %s14
    $region7: #{tpu_custom_call.1} parent=1 // loop_footer_branch
      %13 = sbr.rel target = $region3
    $region8: #{tpu_custom_call.1} parent=1 // loop_exit
      _
    %4304 = vsyncpa [#allocation3], 1
    %s4305 = scalar_lea.sflag [#allocation3], 1
    %4306 = vsyncpa %s4305, 1

</llo_original>
